<compile_context>
chip_gen: v7x
topology: tpu7x:2x2x1
jax: 0.10.0
libtpu: 0.0.40
codegen_flags: <defaults>
</compile_context>

<pallas_src>
import jax
import jax.numpy as jnp
from jax import lax
from jax.experimental import pallas as pl
from jax.experimental.pallas import tpu as pltpu


# ---------------------------------------------------------------------------
# Chip-derived tiling / VMEM budget.
# ---------------------------------------------------------------------------
def _tpu_vmem_capacity_bytes():
    try:
        info = pltpu.get_tpu_info()
        for attr in ("vmem_capacity_bytes", "vmem_bytes", "vmem_size_bytes"):
            v = getattr(info, attr, None)
            if v and int(v) >= 64 * 1024 * 1024:
                return int(v)
    except Exception:
        pass
    return 128 * 1024 * 1024          # v5e/v6e-class fallback


_VMEM_CAP = _tpu_vmem_capacity_bytes()
# Leave headroom below physical VMEM (matters on v7x, 64 MiB per TensorCore).
_VMEM_LIMIT = min(64 * 1024 * 1024, (_VMEM_CAP * 3) // 4)
# Bigger lane tiles amortize per-step overhead on v5e/v6e; stay smaller on v7x.
_TM = 1024 if _VMEM_CAP >= 100 * 1024 * 1024 else 512


def _pick_tile(M):
    """Lane (pixel) tile: a multiple of 128 (or the full ragged dim), capped at
    _TM, and split so there are >=2 grid steps whenever M allows (keeps both
    v7x TensorCores busy and restores prefetch overlap on all generations)."""
    if M <= 128:
        return M
    m128 = ((M + 127) // 128) * 128
    tm = min(_TM, m128)
    if tm >= m128 and m128 >= 256:     # would otherwise be a single grid step
        tm = ((m128 // 2 + 127) // 128) * 128
    return tm


# ---------------------------------------------------------------------------
# Pallas kernel: fused  PReLU( sum_i W_i @ X_i + b )  with bf16 MXU operands,
# f32 accumulation, bf16 output.  Fusing the channel-concat into the K
# reduction (multiple W_i/X_i pairs) avoids materializing the concatenated
# feature slab in HBM.
#   w_i: (Cout, K_i) bf16   x_i: (K_i, TM) bf16   b: (Cout, 1) f32
#   alpha: (1,) f32 in SMEM (shared PReLU slope)   o: (Cout, TM) bf16
# ---------------------------------------------------------------------------
def _make_mm_bias_prelu_kernel(n_in):
    def kernel(*refs):
        w_refs = refs[:n_in]
        x_refs = refs[n_in:2 * n_in]
        b_ref = refs[2 * n_in]
        a_ref = refs[2 * n_in + 1]
        o_ref = refs[2 * n_in + 2]
        acc = jnp.dot(w_refs[0][...], x_refs[0][...],
                      preferred_element_type=jnp.float32)
        for i in range(1, n_in):
            acc = acc + jnp.dot(w_refs[i][...], x_refs[i][...],
                                preferred_element_type=jnp.float32)
        acc = acc + b_ref[...]                    # (Cout, 1) broadcast on lanes
        alpha = a_ref[0]                          # scalar PReLU slope from SMEM
        o_ref[...] = jnp.where(acc >= 0.0, acc, alpha * acc).astype(o_ref.dtype)
    return kernel


def matmul_bias_prelu(ws, xs, b, alpha):
    """ws: list of (Cout, K_i); xs: list of (K_i, M).  Returns
    PReLU(sum_i ws[i] @ xs[i] + b) as (Cout, M) bf16."""
    n = len(ws)
    Cout = ws[0].shape[0]
    M = xs[0].shape[1]
    tm = _pick_tile(M)
    grid = (pl.cdiv(M, tm),)                      # ragged tail handled by Pallas

    in_specs = [pl.BlockSpec(w.shape, lambda i: (0, 0)) for w in ws]
    in_specs += [pl.BlockSpec((x.shape[0], tm), lambda i: (0, i)) for x in xs]
    in_specs.append(pl.BlockSpec((Cout, 1), lambda i: (0, 0)))
    in_specs.append(pl.BlockSpec(memory_space=pltpu.MemorySpace.SMEM))

    return pl.pallas_call(
        _make_mm_bias_prelu_kernel(n),
        out_shape=jax.ShapeDtypeStruct((Cout, M), jnp.bfloat16),
        grid=grid,
        in_specs=in_specs,
        out_specs=pl.BlockSpec((Cout, tm), lambda i: (0, i)),
        compiler_params=pltpu.CompilerParams(
            dimension_semantics=("parallel",),
            vmem_limit_bytes=_VMEM_LIMIT),
    )(*[w.astype(jnp.bfloat16) for w in ws],
      *[x.astype(jnp.bfloat16) for x in xs],
      b.reshape(Cout, 1).astype(jnp.float32),
      jnp.asarray(alpha, jnp.float32).reshape(1,))


# ---------------------------------------------------------------------------
# Channel-major (C, N, H, W) bf16 conv wrappers around the fused kernel.
# ---------------------------------------------------------------------------
def conv1x1_prelu_fused(xs, wmat, b, alpha):
    """Fused [channel concat] -> 1x1 conv -> PReLU.  xs is a list of
    channel-major bf16 tensors; wmat (Cout, sum_i C_i) is split per input and
    the concat becomes an in-kernel K-sum (no concatenated slab in HBM)."""
    Cout = wmat.shape[0]
    N, H, W = xs[0].shape[1:]
    M = N * H * W
    ws, cols, off = [], [], 0
    for x in xs:
        Ci = x.shape[0]
        ws.append(wmat[:, off:off + Ci])
        cols.append(x.reshape(Ci, M))
        off += Ci
    y = matmul_bias_prelu(ws, cols, b, alpha)
    return y.reshape(Cout, N, H, W)


def conv_prelu_cm(x, wmat, b, alpha, k, stride, padding):
    """nn.Conv2d(Cin,Cout,k,stride,padding) + PReLU on channel-major bf16 x.
    wmat: (Cout, Cin*k*k) pre-packed bf16."""
    Cin, N, H, W = x.shape
    Cout = wmat.shape[0]
    if k == 1 and stride == 1 and padding == 0:
        return conv1x1_prelu_fused([x], wmat, b, alpha)
    # TODO(synk): fuse this strided im2col gather into the Pallas kernel with a
    # spatial-halo grid (manual make_async_copy of overlapping input bands) to
    # remove the ~k^2/s^2 HBM slab blowup on the stride-s k x k layers.
    xp = jnp.pad(x, ((0, 0), (0, 0), (padding, padding), (padding, padding)))
    Ho = (H + 2 * padding - k) // stride + 1
    Wo = (W + 2 * padding - k) // stride + 1
    patches = []
    for i in range(k):
        for j in range(k):
            patches.append(
                xp[:, :, i:i + stride * Ho:stride, j:j + stride * Wo:stride])
    cols = jnp.stack(patches, axis=1).reshape(Cin * k * k, N * Ho * Wo)
    y = matmul_bias_prelu([wmat], [cols], b, alpha)
    return y.reshape(Cout, N, Ho, Wo)


def deconv_prelu_cm(x, wmat, bbig, alpha, k, stride, padding):
    """nn.ConvTranspose2d(Cin,Cout,k,stride,padding) + PReLU on channel-major
    bf16 x via the sub-pixel decomposition: one stride-1 (k'/s)x(k'/s) conv
    producing Cout*s^2 phase channels, then a phase interleave.  For
    k % s != 0 the kernel is zero-padded to k' = s*ceil(k/s) and the output is
    cropped, so there is no zero-dilated-input fallback wasting MXU work.
    wmat: (s*s*Cout, Cin*(k'/s)^2) pre-packed bf16; bbig: (s*s*Cout,) f32."""
    Cin, N, H, W = x.shape
    s, p = stride, padding
    Ho = (H - 1) * s - 2 * p + k            # true ConvTranspose output size
    Wo = (W - 1) * s - 2 * p + k
    ke = ((k + s - 1) // s) * s             # zero-padded kernel size (mult of s)
    ks = ke // s
    Hoe = (H - 1) * s - 2 * p + ke          # output size for the padded kernel
    Woe = (W - 1) * s - 2 * p + ke
    Cout = wmat.shape[0] // (s * s)

    # With q = (out+p)//s, r = (out+p)%s, a in [0, ks):
    #   Y[out] = sum_a X[q - a] * W[r + s*a]
    def qrange(out_size):
        lo = min(-((r - p) // s) for r in range(s))          # ceil((p-r)/s)
        hi = max((out_size - 1 + p - r) // s for r in range(s))
        return lo, hi

    qlo_h, qhi_h = qrange(Hoe)
    qlo_w, qhi_w = qrange(Woe)
    Qh = qhi_h - qlo_h + 1
    Qw = qhi_w - qlo_w + 1
    pad_t = max(0, ks - 1 - qlo_h)
    pad_b = max(0, qhi_h - (H - 1))
    pad_l = max(0, ks - 1 - qlo_w)
    pad_r = max(0, qhi_w - (W - 1))
    xp = jnp.pad(x, ((0, 0), (0, 0), (pad_t, pad_b), (pad_l, pad_r)))

    # im2col shared by all s^2 output phases; row order (ci, a, b).
    patches = []
    for a in range(ks):
        sh = qlo_h - a + pad_t
        for bb in range(ks):
            sw = qlo_w - bb + pad_l
            patches.append(xp[:, :, sh:sh + Qh, sw:sw + Qw])
    cols = jnp.stack(patches, axis=1).reshape(Cin * ks * ks, N * Qh * Qw)

    z2d = matmul_bias_prelu([wmat], [cols], bbig, alpha)   # (s*s*Cout, N*Qh*Qw)
    z = z2d.reshape(s, s, Cout, N, Qh, Qw)

    # TODO(synk): keep HR features phase-major and rewrite the stride-s down
    # conv as per-phase stride-1 convs so this strided interleave (and the
    # consumer's strided re-gather) over the largest tensors disappears.
    y = jnp.zeros((Cout, N, Hoe, Woe), jnp.bfloat16)
    for ry in range(s):
        y0 = (ry - p) % s
        if y0 >= Hoe:
            continue
        ny = (Hoe - 1 - y0) // s + 1
        qs = (y0 + p - ry) // s - qlo_h
        for rx in range(s):
            x0 = (rx - p) % s
            if x0 >= Woe:
                continue
            nx = (Woe - 1 - x0) // s + 1
            qxs = (x0 + p - rx) // s - qlo_w
            y = y.at[:, :, y0::s, x0::s].set(
                z[ry, rx][:, :, qs:qs + ny, qxs:qxs + nx])
    return y[:, :, :Ho, :Wo]


# ---------------------------------------------------------------------------
# FeedbackBlock parameters (raw, PyTorch layouts) + one-time packing.
# ---------------------------------------------------------------------------
def _init_conv(key, cout, cin, k):
    kw, kb = jax.random.split(key)
    fan_in = cin * k * k
    w = jax.random.normal(kw, (cout, cin, k, k), jnp.float32) / jnp.sqrt(fan_in)
    b = jax.random.normal(kb, (cout,), jnp.float32) * 0.01
    return (w, b, jnp.float32(0.2))               # PReLU slope init = 0.2


def _init_deconv(key, cin, cout, k):
    kw, kb = jax.random.split(key)
    fan_in = cin * k * k
    w = jax.random.normal(kw, (cin, cout, k, k), jnp.float32) / jnp.sqrt(fan_in)
    b = jax.random.normal(kb, (cout,), jnp.float32) * 0.01
    return (w, b, jnp.float32(0.2))


def _upscale_cfg(upscale_factor):
    if upscale_factor == 2:
        return 2, 2, 6
    if upscale_factor == 3:
        return 3, 2, 7
    if upscale_factor == 4:
        return 4, 2, 8
    if upscale_factor == 8:
        return 8, 2, 12
    raise ValueError("unsupported upscale_factor")


def init_feedback_block(key, num_features, num_groups, upscale_factor):
    stride, padding, k = _upscale_cfg(upscale_factor)
    F, G = num_features, num_groups
    keys = jax.random.split(key, 4 * G + 2)
    params = dict(stride=stride, padding=padding, k=k, G=G, F=F,
                  compress_in=_init_conv(keys[0], F, 2 * F, 1),
                  compress_out=_init_conv(keys[1], F, G * F, 1),
                  up=[], down=[], uptran=[], downtran=[])
    ki = 2
    for idx in range(G):
        params['up'].append(_init_deconv(keys[ki], F, F, k)); ki += 1
        params['down'].append(_init_conv(keys[ki], F, F, k)); ki += 1
        if idx > 0:
            params['uptran'].append(_init_conv(keys[ki], F, F * (idx + 1), 1)); ki += 1
            params['downtran'].append(_init_conv(keys[ki], F, F * (idx + 1), 1)); ki += 1
    return params


def _pack_conv(t):
    w, b, a = t                                   # (Cout, Cin, k, k)
    cout = w.shape[0]
    return (w.reshape(cout, -1).astype(jnp.bfloat16),
            b.astype(jnp.float32), jnp.float32(a))


def _pack_deconv(t, k, s):
    w, b, a = t                                   # (Cin, Cout, k, k) torch layout
    Cin, Cout = w.shape[0], w.shape[1]
    ke = ((k + s - 1) // s) * s
    if ke != k:                                   # zero-pad kernel to mult of s
        w = jnp.pad(w, ((0, 0), (0, 0), (0, ke - k), (0, ke - k)))
    ks = ke // s
    wr = w.reshape(Cin, Cout, ks, s, ks, s)       # [ci, co, a, ry, b, rx]
    wmat = wr.transpose(3, 5, 1, 0, 2, 4).reshape(s * s * Cout, Cin * ks * ks)
    return (wmat.astype(jnp.bfloat16),
            jnp.tile(b, s * s).astype(jnp.float32), jnp.float32(a))


def pack_feedback_block(params):
    """Pre-pack weights once (reshape / phase rearrange / bf16 cast, bias tile)
    so none of that work runs per forward call."""
    k, s = params['k'], params['stride']
    return dict(
        cfg=dict(k=k, stride=s, padding=params['padding'],
                 G=params['G'], F=params['F']),
        compress_in=_pack_conv(params['compress_in']),
        compress_out=_pack_conv(params['compress_out']),
        uptran=[_pack_conv(t) for t in params['uptran']],
        downtran=[_pack_conv(t) for t in params['downtran']],
        down=[_pack_conv(t) for t in params['down']],
        up=[_pack_deconv(t, k, s) for t in params['up']],
    )


# ---------------------------------------------------------------------------
# FeedbackBlock forward (Pallas-backed).
# ---------------------------------------------------------------------------
def feedback_block_forward(packed, x, last_hidden=None):
    """x is NCHW f32; returns NCHW f32.  Internals: channel-major bf16."""
    cfg = packed['cfg']
    k, s, p, G = cfg['k'], cfg['stride'], cfg['padding'], cfg['G']
    x_cm = x.transpose(1, 0, 2, 3).astype(jnp.bfloat16)
    if last_hidden is None:                       # should_reset: hidden := x
        last_cm = x_cm
    else:
        last_cm = last_hidden.transpose(1, 0, 2, 3).astype(jnp.bfloat16)

    w, b, a = packed['compress_in']
    h = conv1x1_prelu_fused([x_cm, last_cm], w, b, a)   # concat fused into K

    lr_features = [h]
    hr_features = []
    for idx in range(G):
        if idx > 0:
            w, b, a = packed['uptran'][idx - 1]
            LD_L = conv1x1_prelu_fused(lr_features, w, b, a)
        else:
            LD_L = lr_features[0]
        wmat, bbig, a = packed['up'][idx]
        LD_H = deconv_prelu_cm(LD_L, wmat, bbig, a, k=k, stride=s, padding=p)
        hr_features.append(LD_H)
        if idx > 0:
            w, b, a = packed['downtran'][idx - 1]
            cat_H = conv1x1_prelu_fused(hr_features, w, b, a)
        else:
            cat_H = hr_features[0]
        wmat, b, a = packed['down'][idx]
        lr_features.append(
            conv_prelu_cm(cat_H, wmat, b, a, k=k, stride=s, padding=p))

    w, b, a = packed['compress_out']
    out = conv1x1_prelu_fused(lr_features[1:], w, b, a)
    return out.transpose(1, 0, 2, 3).astype(jnp.float32)


# ---------------------------------------------------------------------------
# Pure-JAX reference (lax.conv_general_dilated) with matched bf16 operand
# rounding, for correctness checking.
# ---------------------------------------------------------------------------
def _prelu(x, a):
    return jnp.where(x >= 0, x, a * x)


def _ref_conv(x, w, b, a, stride, padding):
    y = lax.conv_general_dilated(
        x.astype(jnp.bfloat16), w.astype(jnp.bfloat16),
        (stride, stride), [(padding, padding), (padding, padding)],
        dimension_numbers=('NCHW', 'OIHW', 'NCHW'),
        preferred_element_type=jnp.float32)
    return _prelu(y + b.reshape(1, -1, 1, 1), a)


def _ref_deconv(x, w, b, a, k, stride, padding):
    wc = jnp.flip(w, (2, 3)).transpose(1, 0, 2, 3)
    pad = k - 1 - padding
    y = lax.conv_general_dilated(
        x.astype(jnp.bfloat16), wc.astype(jnp.bfloat16),
        (1, 1), [(pad, pad), (pad, pad)], lhs_dilation=(stride, stride),
        dimension_numbers=('NCHW', 'OIHW', 'NCHW'),
        preferred_element_type=jnp.float32)
    return _prelu(y + b.reshape(1, -1, 1, 1), a)


def feedback_block_ref(params, x, last_hidden=None):
    k, s, p, G = params['k'], params['stride'], params['padding'], params['G']
    if last_hidden is None:
        last_hidden = x
    h = jnp.concatenate([x, last_hidden], axis=1)
    w, b, a = params['compress_in']
    h = _ref_conv(h, w, b, a, 1, 0)
    lr, hr = [h], []
    for idx in range(G):
        LD_L = jnp.concatenate(lr, axis=1)
        if idx > 0:
            w, b, a = params['uptran'][idx - 1]
            LD_L = _ref_conv(LD_L, w, b, a, 1, 0)
        w, b, a = params['up'][idx]
        LD_H = _ref_deconv(LD_L, w, b, a, k, s, p)
        hr.append(LD_H)
        cat_H = jnp.concatenate(hr, axis=1)
        if idx > 0:
            w, b, a = params['downtran'][idx - 1]
            cat_H = _ref_conv(cat_H, w, b, a, 1, 0)
        w, b, a = params['down'][idx]
        lr.append(_ref_conv(cat_H, w, b, a, s, p))
    out = jnp.concatenate(lr[1:], axis=1)
    w, b, a = params['compress_out']
    return _ref_conv(out, w, b, a, 1, 0)


# ---------------------------------------------------------------------------
if __name__ == "__main__":
    root = jax.random.PRNGKey(0)

    def check(upscale, N, F, H, W, G, tol=2e-2):
        kp, kx = jax.random.split(jax.random.fold_in(root, upscale))
        params = init_feedback_block(kp, num_features=F, num_groups=G,
                                     upscale_factor=upscale)
        packed = pack_feedback_block(params)
        x = jax.random.normal(kx, (N, F, H, W), jnp.float32)
        fwd = jax.jit(lambda xx: feedback_block_forward(packed, xx))
        out = fwd(x)
        jax.block_until_ready(out)
        assert out.shape == (N, F, H, W), out.shape
        ref = feedback_block_ref(params, x)
        jax.block_until_ready(ref)
        max_err = float(jnp.max(jnp.abs(out - ref)))
        assert jnp.allclose(out, ref, rtol=tol, atol=tol), max_err
        return max_err

    # Main config: batch=2, num_features=8, 8x8 LR, 3 groups, upscale 2
    # (sub-pixel deconv path, k % s == 0; 16x16 intermediate HR features).
    check(upscale=2, N=2, F=8, H=8, W=8, G=3)
    # Padded-kernel sub-pixel path: upscale 3 (k % s != 0), tiny shapes.
    check(upscale=3, N=1, F=8, H=6, W=6, G=2)

    print("KERNEL_OK")
</pallas_src>

<mosaic_0001>
module attributes {stable_mosaic.version = 11 : i64} {
  func.func @kernel(%arg0: i32, %arg1: memref<8x8xbf16, #tpu.memory_space<vmem>>, %arg2: memref<8x8xbf16, #tpu.memory_space<vmem>>, %arg3: memref<8x128xbf16, #tpu.memory_space<vmem>>, %arg4: memref<8x128xbf16, #tpu.memory_space<vmem>>, %arg5: memref<8x1xf32, #tpu.memory_space<vmem>>, %arg6: memref<1xf32, #tpu.memory_space<smem>>, %arg7: memref<8x128xbf16, #tpu.memory_space<vmem>>) attributes {dimension_semantics = [#tpu.dimension_semantics<parallel>], iteration_bounds = array<i64: 1>, scalar_prefetch = 0 : i64, scratch_operands = 0 : i64, tpu.core_type = #tpu.core_type<tc>, window_params = [{pipeline_mode = #tpu.pipeline_mode<synchronous>, transform_indices = @transform_0, window_bounds = array<i64: 8, 8>}, {pipeline_mode = #tpu.pipeline_mode<synchronous>, transform_indices = @transform_1, window_bounds = array<i64: 8, 8>}, {transform_indices = @transform_2, window_bounds = array<i64: 8, 128>}, {transform_indices = @transform_3, window_bounds = array<i64: 8, 128>}, {pipeline_mode = #tpu.pipeline_mode<synchronous>, transform_indices = @transform_4, window_bounds = array<i64: 8, 1>}, {transform_indices = @transform_5, window_bounds = array<i64: 1>}, {transform_indices = @transform_6, window_bounds = array<i64: 8, 128>}]} {
    %c0 = arith.constant 0 : index
    %c0_0 = arith.constant 0 : index
    %0 = vector.load %arg1[%c0, %c0_0] : memref<8x8xbf16, #tpu.memory_space<vmem>>, vector<8x8xbf16>
    %c0_1 = arith.constant 0 : index
    %c0_2 = arith.constant 0 : index
    %1 = vector.load %arg3[%c0_1, %c0_2] : memref<8x128xbf16, #tpu.memory_space<vmem>>, vector<8x128xbf16>
    %cst = arith.constant dense<0.000000e+00> : vector<8x128xf32>
    %2 = tpu.matmul %0, %1, %cst {dimension_numbers = #tpu.dot_dimension_numbers<[1], [0], [0], [1], [0, 0, 1, 1], [], []>} : vector<8x8xbf16>, vector<8x128xbf16>, vector<8x128xf32> -> vector<8x128xf32>
    %c0_3 = arith.constant 0 : index
    %c0_4 = arith.constant 0 : index
    %3 = vector.load %arg2[%c0_3, %c0_4] : memref<8x8xbf16, #tpu.memory_space<vmem>>, vector<8x8xbf16>
    %c0_5 = arith.constant 0 : index
    %c0_6 = arith.constant 0 : index
    %4 = vector.load %arg4[%c0_5, %c0_6] : memref<8x128xbf16, #tpu.memory_space<vmem>>, vector<8x128xbf16>
    %cst_7 = arith.constant dense<0.000000e+00> : vector<8x128xf32>
    %5 = tpu.matmul %3, %4, %cst_7 {dimension_numbers = #tpu.dot_dimension_numbers<[1], [0], [0], [1], [0, 0, 1, 1], [], []>} : vector<8x8xbf16>, vector<8x128xbf16>, vector<8x128xf32> -> vector<8x128xf32>
    %6 = arith.addf %2, %5 : vector<8x128xf32>
    %c0_8 = arith.constant 0 : index
    %c0_9 = arith.constant 0 : index
    %7 = vector.load %arg5[%c0_8, %c0_9] : memref<8x1xf32, #tpu.memory_space<vmem>>, vector<8x1xf32>
    %8 = vector.broadcast %7 : vector<8x1xf32> to vector<8x128xf32>
    %9 = arith.addf %6, %8 : vector<8x128xf32>
    %c0_10 = arith.constant 0 : index
    %10 = memref.load %arg6[%c0_10] : memref<1xf32, #tpu.memory_space<smem>>
    %cst_11 = arith.constant 0.000000e+00 : f32
    %11 = vector.broadcast %cst_11 : f32 to vector<8x128xf32>
    %12 = arith.cmpf oge, %9, %11 : vector<8x128xf32>
    %13 = vector.broadcast %10 : f32 to vector<8x128xf32>
    %14 = arith.mulf %13, %9 : vector<8x128xf32>
    %15 = arith.select %12, %9, %14 : vector<8x128xi1>, vector<8x128xf32>
    %16 = arith.truncf %15 : vector<8x128xf32> to vector<8x128xbf16>
    %c0_12 = arith.constant 0 : index
    %c0_13 = arith.constant 0 : index
    %17 = vector.load %arg7[%c0_12, %c0_13] : memref<8x128xbf16, #tpu.memory_space<vmem>>, vector<8x128xbf16>
    tpu.vector_store %arg7[%c0_12, %c0_13], %16 {strides = array<i32>} : memref<8x128xbf16, #tpu.memory_space<vmem>>, vector<8x128xbf16>,
    return
  }
  func.func @transform_0(%arg0: i32) -> (i32, i32) {
    %c0_i32 = arith.constant 0 : i32
    %c0_i32_0 = arith.constant 0 : i32
    %c0_i32_1 = arith.constant 0 : i32
    return %c0_i32, %c0_i32_0 : i32, i32
  }
  func.func @transform_1(%arg0: i32) -> (i32, i32) {
    %c0_i32 = arith.constant 0 : i32
    %c0_i32_0 = arith.constant 0 : i32
    %c0_i32_1 = arith.constant 0 : i32
    return %c0_i32, %c0_i32_0 : i32, i32
  }
  func.func @transform_2(%arg0: i32) -> (i32, i32) {
    %c0_i32 = arith.constant 0 : i32
    %c0_i32_0 = arith.constant 0 : i32
    return %c0_i32, %arg0 : i32, i32
  }
  func.func @transform_3(%arg0: i32) -> (i32, i32) {
    %c0_i32 = arith.constant 0 : i32
    %c0_i32_0 = arith.constant 0 : i32
    return %c0_i32, %arg0 : i32, i32
  }
  func.func @transform_4(%arg0: i32) -> (i32, i32) {
    %c0_i32 = arith.constant 0 : i32
    %c0_i32_0 = arith.constant 0 : i32
    %c0_i32_1 = arith.constant 0 : i32
    return %c0_i32, %c0_i32_0 : i32, i32
  }
  func.func @transform_5(%arg0: i32) -> i32 {
    %c0_i32 = arith.constant 0 : i32
    %c0_i32_0 = arith.constant 0 : i32
    return %c0_i32 : i32
  }
  func.func @transform_6(%arg0: i32) -> (i32, i32) {
    %c0_i32 = arith.constant 0 : i32
    %c0_i32_0 = arith.constant 0 : i32
    return %c0_i32, %arg0 : i32, i32
  }
}

module attributes {stable_mosaic.version = 11 : i64} {
  func.func @kernel(%arg0: i32, %arg1: memref<32x72xbf16, #tpu.memory_space<vmem>>, %arg2: memref<72x128xbf16, #tpu.memory_space<vmem>>, %arg3: memref<32x1xf32, #tpu.memory_space<vmem>>, %arg4: memref<1xf32, #tpu.memory_space<smem>>, %arg5: memref<32x128xbf16, #tpu.memory_space<vmem>>) attributes {dimension_semantics = [#tpu.dimension_semantics<parallel>], iteration_bounds = array<i64: 1>, scalar_prefetch = 0 : i64, scratch_operands = 0 : i64, tpu.core_type = #tpu.core_type<tc>, window_params = [{pipeline_mode = #tpu.pipeline_mode<synchronous>, transform_indices = @transform_0, window_bounds = array<i64: 32, 72>}, {transform_indices = @transform_1, window_bounds = array<i64: 72, 128>}, {pipeline_mode = #tpu.pipeline_mode<synchronous>, transform_indices = @transform_2, window_bounds = array<i64: 32, 1>}, {transform_indices = @transform_3, window_bounds = array<i64: 1>}, {transform_indices = @transform_4, window_bounds = array<i64: 32, 128>}]} {
    %c0 = arith.constant 0 : index
    %c0_0 = arith.constant 0 : index
    %0 = vector.load %arg1[%c0, %c0_0] : memref<32x72xbf16, #tpu.memory_space<vmem>>, vector<32x72xbf16>
    %c0_1 = arith.constant 0 : index
    %c0_2 = arith.constant 0 : index
    %1 = vector.load %arg2[%c0_1, %c0_2] : memref<72x128xbf16, #tpu.memory_space<vmem>>, vector<72x128xbf16>
    %cst = arith.constant dense<0.000000e+00> : vector<32x128xf32>
    %2 = tpu.matmul %0, %1, %cst {dimension_numbers = #tpu.dot_dimension_numbers<[1], [0], [0], [1], [0, 0, 1, 1], [], []>} : vector<32x72xbf16>, vector<72x128xbf16>, vector<32x128xf32> -> vector<32x128xf32>
    %c0_3 = arith.constant 0 : index
    %c0_4 = arith.constant 0 : index
    %3 = vector.load %arg3[%c0_3, %c0_4] : memref<32x1xf32, #tpu.memory_space<vmem>>, vector<32x1xf32>
    %4 = vector.broadcast %3 : vector<32x1xf32> to vector<32x128xf32>
    %5 = arith.addf %2, %4 : vector<32x128xf32>
    %c0_5 = arith.constant 0 : index
    %6 = memref.load %arg4[%c0_5] : memref<1xf32, #tpu.memory_space<smem>>
    %cst_6 = arith.constant 0.000000e+00 : f32
    %7 = vector.broadcast %cst_6 : f32 to vector<32x128xf32>
    %8 = arith.cmpf oge, %5, %7 : vector<32x128xf32>
    %9 = vector.broadcast %6 : f32 to vector<32x128xf32>
    %10 = arith.mulf %9, %5 : vector<32x128xf32>
    %11 = arith.select %8, %5, %10 : vector<32x128xi1>, vector<32x128xf32>
    %12 = arith.truncf %11 : vector<32x128xf32> to vector<32x128xbf16>
    %c0_7 = arith.constant 0 : index
    %c0_8 = arith.constant 0 : index
    %13 = vector.load %arg5[%c0_7, %c0_8] : memref<32x128xbf16, #tpu.memory_space<vmem>>, vector<32x128xbf16>
    tpu.vector_store %arg5[%c0_7, %c0_8], %12 {strides = array<i32>} : memref<32x128xbf16, #tpu.memory_space<vmem>>, vector<32x128xbf16>,
    return
  }
  func.func @transform_0(%arg0: i32) -> (i32, i32) {
    %c0_i32 = arith.constant 0 : i32
    %c0_i32_0 = arith.constant 0 : i32
    %c0_i32_1 = arith.constant 0 : i32
    return %c0_i32, %c0_i32_0 : i32, i32
  }
  func.func @transform_1(%arg0: i32) -> (i32, i32) {
    %c0_i32 = arith.constant 0 : i32
    %c0_i32_0 = arith.constant 0 : i32
    return %c0_i32, %arg0 : i32, i32
  }
  func.func @transform_2(%arg0: i32) -> (i32, i32) {
    %c0_i32 = arith.constant 0 : i32
    %c0_i32_0 = arith.constant 0 : i32
    %c0_i32_1 = arith.constant 0 : i32
    return %c0_i32, %c0_i32_0 : i32, i32
  }
  func.func @transform_3(%arg0: i32) -> i32 {
    %c0_i32 = arith.constant 0 : i32
    %c0_i32_0 = arith.constant 0 : i32
    return %c0_i32 : i32
  }
  func.func @transform_4(%arg0: i32) -> (i32, i32) {
    %c0_i32 = arith.constant 0 : i32
    %c0_i32_0 = arith.constant 0 : i32
    return %c0_i32, %arg0 : i32, i32
  }
}

module attributes {stable_mosaic.version = 11 : i64} {
  func.func @kernel(%arg0: i32, %arg1: memref<8x288xbf16, #tpu.memory_space<vmem>>, %arg2: memref<288x128xbf16, #tpu.memory_space<vmem>>, %arg3: memref<8x1xf32, #tpu.memory_space<vmem>>, %arg4: memref<1xf32, #tpu.memory_space<smem>>, %arg5: memref<8x128xbf16, #tpu.memory_space<vmem>>) attributes {dimension_semantics = [#tpu.dimension_semantics<parallel>], iteration_bounds = array<i64: 1>, scalar_prefetch = 0 : i64, scratch_operands = 0 : i64, tpu.core_type = #tpu.core_type<tc>, window_params = [{pipeline_mode = #tpu.pipeline_mode<synchronous>, transform_indices = @transform_0, window_bounds = array<i64: 8, 288>}, {transform_indices = @transform_1, window_bounds = array<i64: 288, 128>}, {pipeline_mode = #tpu.pipeline_mode<synchronous>, transform_indices = @transform_2, window_bounds = array<i64: 8, 1>}, {transform_indices = @transform_3, window_bounds = array<i64: 1>}, {transform_indices = @transform_4, window_bounds = array<i64: 8, 128>}]} {
    %c0 = arith.constant 0 : index
    %c0_0 = arith.constant 0 : index
    %0 = vector.load %arg1[%c0, %c0_0] : memref<8x288xbf16, #tpu.memory_space<vmem>>, vector<8x288xbf16>
    %c0_1 = arith.constant 0 : index
    %c0_2 = arith.constant 0 : index
    %1 = vector.load %arg2[%c0_1, %c0_2] : memref<288x128xbf16, #tpu.memory_space<vmem>>, vector<288x128xbf16>
    %cst = arith.constant dense<0.000000e+00> : vector<8x128xf32>
    %2 = tpu.matmul %0, %1, %cst {dimension_numbers = #tpu.dot_dimension_numbers<[1], [0], [0], [1], [0, 0, 1, 1], [], []>} : vector<8x288xbf16>, vector<288x128xbf16>, vector<8x128xf32> -> vector<8x128xf32>
    %c0_3 = arith.constant 0 : index
    %c0_4 = arith.constant 0 : index
    %3 = vector.load %arg3[%c0_3, %c0_4] : memref<8x1xf32, #tpu.memory_space<vmem>>, vector<8x1xf32>
    %4 = vector.broadcast %3 : vector<8x1xf32> to vector<8x128xf32>
    %5 = arith.addf %2, %4 : vector<8x128xf32>
    %c0_5 = arith.constant 0 : index
    %6 = memref.load %arg4[%c0_5] : memref<1xf32, #tpu.memory_space<smem>>
    %cst_6 = arith.constant 0.000000e+00 : f32
    %7 = vector.broadcast %cst_6 : f32 to vector<8x128xf32>
    %8 = arith.cmpf oge, %5, %7 : vector<8x128xf32>
    %9 = vector.broadcast %6 : f32 to vector<8x128xf32>
    %10 = arith.mulf %9, %5 : vector<8x128xf32>
    %11 = arith.select %8, %5, %10 : vector<8x128xi1>, vector<8x128xf32>
    %12 = arith.truncf %11 : vector<8x128xf32> to vector<8x128xbf16>
    %c0_7 = arith.constant 0 : index
    %c0_8 = arith.constant 0 : index
    %13 = vector.load %arg5[%c0_7, %c0_8] : memref<8x128xbf16, #tpu.memory_space<vmem>>, vector<8x128xbf16>
    tpu.vector_store %arg5[%c0_7, %c0_8], %12 {strides = array<i32>} : memref<8x128xbf16, #tpu.memory_space<vmem>>, vector<8x128xbf16>,
    return
  }
  func.func @transform_0(%arg0: i32) -> (i32, i32) {
    %c0_i32 = arith.constant 0 : i32
    %c0_i32_0 = arith.constant 0 : i32
    %c0_i32_1 = arith.constant 0 : i32
    return %c0_i32, %c0_i32_0 : i32, i32
  }
  func.func @transform_1(%arg0: i32) -> (i32, i32) {
    %c0_i32 = arith.constant 0 : i32
    %c0_i32_0 = arith.constant 0 : i32
    return %c0_i32, %arg0 : i32, i32
  }
  func.func @transform_2(%arg0: i32) -> (i32, i32) {
    %c0_i32 = arith.constant 0 : i32
    %c0_i32_0 = arith.constant 0 : i32
    %c0_i32_1 = arith.constant 0 : i32
    return %c0_i32, %c0_i32_0 : i32, i32
  }
  func.func @transform_3(%arg0: i32) -> i32 {
    %c0_i32 = arith.constant 0 : i32
    %c0_i32_0 = arith.constant 0 : i32
    return %c0_i32 : i32
  }
  func.func @transform_4(%arg0: i32) -> (i32, i32) {
    %c0_i32 = arith.constant 0 : i32
    %c0_i32_0 = arith.constant 0 : i32
    return %c0_i32, %arg0 : i32, i32
  }
}

module attributes {stable_mosaic.version = 11 : i64} {
  func.func @kernel(%arg0: i32, %arg1: memref<8x8xbf16, #tpu.memory_space<vmem>>, %arg2: memref<8x8xbf16, #tpu.memory_space<vmem>>, %arg3: memref<8x256xbf16, #tpu.memory_space<vmem>>, %arg4: memref<8x256xbf16, #tpu.memory_space<vmem>>, %arg5: memref<8x1xf32, #tpu.memory_space<vmem>>, %arg6: memref<1xf32, #tpu.memory_space<smem>>, %arg7: memref<8x256xbf16, #tpu.memory_space<vmem>>) attributes {dimension_semantics = [#tpu.dimension_semantics<parallel>], iteration_bounds = array<i64: 2>, scalar_prefetch = 0 : i64, scratch_operands = 0 : i64, tpu.core_type = #tpu.core_type<tc>, window_params = [{pipeline_mode = #tpu.pipeline_mode<synchronous>, transform_indices = @transform_0, window_bounds = array<i64: 8, 8>}, {pipeline_mode = #tpu.pipeline_mode<synchronous>, transform_indices = @transform_1, window_bounds = array<i64: 8, 8>}, {transform_indices = @transform_2, window_bounds = array<i64: 8, 256>}, {transform_indices = @transform_3, window_bounds = array<i64: 8, 256>}, {pipeline_mode = #tpu.pipeline_mode<synchronous>, transform_indices = @transform_4, window_bounds = array<i64: 8, 1>}, {transform_indices = @transform_5, window_bounds = array<i64: 1>}, {transform_indices = @transform_6, window_bounds = array<i64: 8, 256>}]} {
    %c0 = arith.constant 0 : index
    %c0_0 = arith.constant 0 : index
    %0 = vector.load %arg1[%c0, %c0_0] : memref<8x8xbf16, #tpu.memory_space<vmem>>, vector<8x8xbf16>
    %c0_1 = arith.constant 0 : index
    %c0_2 = arith.constant 0 : index
    %1 = vector.load %arg3[%c0_1, %c0_2] : memref<8x256xbf16, #tpu.memory_space<vmem>>, vector<8x256xbf16>
    %cst = arith.constant dense<0.000000e+00> : vector<8x256xf32>
    %2 = tpu.matmul %0, %1, %cst {dimension_numbers = #tpu.dot_dimension_numbers<[1], [0], [0], [1], [0, 0, 1, 1], [], []>} : vector<8x8xbf16>, vector<8x256xbf16>, vector<8x256xf32> -> vector<8x256xf32>
    %c0_3 = arith.constant 0 : index
    %c0_4 = arith.constant 0 : index
    %3 = vector.load %arg2[%c0_3, %c0_4] : memref<8x8xbf16, #tpu.memory_space<vmem>>, vector<8x8xbf16>
    %c0_5 = arith.constant 0 : index
    %c0_6 = arith.constant 0 : index
    %4 = vector.load %arg4[%c0_5, %c0_6] : memref<8x256xbf16, #tpu.memory_space<vmem>>, vector<8x256xbf16>
    %cst_7 = arith.constant dense<0.000000e+00> : vector<8x256xf32>
    %5 = tpu.matmul %3, %4, %cst_7 {dimension_numbers = #tpu.dot_dimension_numbers<[1], [0], [0], [1], [0, 0, 1, 1], [], []>} : vector<8x8xbf16>, vector<8x256xbf16>, vector<8x256xf32> -> vector<8x256xf32>
    %6 = arith.addf %2, %5 : vector<8x256xf32>
    %c0_8 = arith.constant 0 : index
    %c0_9 = arith.constant 0 : index
    %7 = vector.load %arg5[%c0_8, %c0_9] : memref<8x1xf32, #tpu.memory_space<vmem>>, vector<8x1xf32>
    %8 = vector.broadcast %7 : vector<8x1xf32> to vector<8x256xf32>
    %9 = arith.addf %6, %8 : vector<8x256xf32>
    %c0_10 = arith.constant 0 : index
    %10 = memref.load %arg6[%c0_10] : memref<1xf32, #tpu.memory_space<smem>>
    %cst_11 = arith.constant 0.000000e+00 : f32
    %11 = vector.broadcast %cst_11 : f32 to vector<8x256xf32>
    %12 = arith.cmpf oge, %9, %11 : vector<8x256xf32>
    %13 = vector.broadcast %10 : f32 to vector<8x256xf32>
    %14 = arith.mulf %13, %9 : vector<8x256xf32>
    %15 = arith.select %12, %9, %14 : vector<8x256xi1>, vector<8x256xf32>
    %16 = arith.truncf %15 : vector<8x256xf32> to vector<8x256xbf16>
    %c0_12 = arith.constant 0 : index
    %c0_13 = arith.constant 0 : index
    %17 = vector.load %arg7[%c0_12, %c0_13] : memref<8x256xbf16, #tpu.memory_space<vmem>>, vector<8x256xbf16>
    tpu.vector_store %arg7[%c0_12, %c0_13], %16 {strides = array<i32>} : memref<8x256xbf16, #tpu.memory_space<vmem>>, vector<8x256xbf16>,
    return
  }
  func.func @transform_0(%arg0: i32) -> (i32, i32) {
    %c0_i32 = arith.constant 0 : i32
    %c0_i32_0 = arith.constant 0 : i32
    %c0_i32_1 = arith.constant 0 : i32
    return %c0_i32, %c0_i32_0 : i32, i32
  }
  func.func @transform_1(%arg0: i32) -> (i32, i32) {
    %c0_i32 = arith.constant 0 : i32
    %c0_i32_0 = arith.constant 0 : i32
    %c0_i32_1 = arith.constant 0 : i32
    return %c0_i32, %c0_i32_0 : i32, i32
  }
  func.func @transform_2(%arg0: i32) -> (i32, i32) {
    %c0_i32 = arith.constant 0 : i32
    %c0_i32_0 = arith.constant 0 : i32
    return %c0_i32, %arg0 : i32, i32
  }
  func.func @transform_3(%arg0: i32) -> (i32, i32) {
    %c0_i32 = arith.constant 0 : i32
    %c0_i32_0 = arith.constant 0 : i32
    return %c0_i32, %arg0 : i32, i32
  }
  func.func @transform_4(%arg0: i32) -> (i32, i32) {
    %c0_i32 = arith.constant 0 : i32
    %c0_i32_0 = arith.constant 0 : i32
    %c0_i32_1 = arith.constant 0 : i32
    return %c0_i32, %c0_i32_0 : i32, i32
  }
  func.func @transform_5(%arg0: i32) -> i32 {
    %c0_i32 = arith.constant 0 : i32
    %c0_i32_0 = arith.constant 0 : i32
    return %c0_i32 : i32
  }
  func.func @transform_6(%arg0: i32) -> (i32, i32) {
    %c0_i32 = arith.constant 0 : i32
    %c0_i32_0 = arith.constant 0 : i32
    return %c0_i32, %arg0 : i32, i32
  }
}

module attributes {stable_mosaic.version = 11 : i64} {
  func.func @kernel(%arg0: i32, %arg1: memref<8x8xbf16, #tpu.memory_space<vmem>>, %arg2: memref<8x8xbf16, #tpu.memory_space<vmem>>, %arg3: memref<8x8xbf16, #tpu.memory_space<vmem>>, %arg4: memref<8x256xbf16, #tpu.memory_space<vmem>>, %arg5: memref<8x256xbf16, #tpu.memory_space<vmem>>, %arg6: memref<8x256xbf16, #tpu.memory_space<vmem>>, %arg7: memref<8x1xf32, #tpu.memory_space<vmem>>, %arg8: memref<1xf32, #tpu.memory_space<smem>>, %arg9: memref<8x256xbf16, #tpu.memory_space<vmem>>) attributes {dimension_semantics = [#tpu.dimension_semantics<parallel>], iteration_bounds = array<i64: 2>, scalar_prefetch = 0 : i64, scratch_operands = 0 : i64, tpu.core_type = #tpu.core_type<tc>, window_params = [{pipeline_mode = #tpu.pipeline_mode<synchronous>, transform_indices = @transform_0, window_bounds = array<i64: 8, 8>}, {pipeline_mode = #tpu.pipeline_mode<synchronous>, transform_indices = @transform_1, window_bounds = array<i64: 8, 8>}, {pipeline_mode = #tpu.pipeline_mode<synchronous>, transform_indices = @transform_2, window_bounds = array<i64: 8, 8>}, {transform_indices = @transform_3, window_bounds = array<i64: 8, 256>}, {transform_indices = @transform_4, window_bounds = array<i64: 8, 256>}, {transform_indices = @transform_5, window_bounds = array<i64: 8, 256>}, {pipeline_mode = #tpu.pipeline_mode<synchronous>, transform_indices = @transform_6, window_bounds = array<i64: 8, 1>}, {transform_indices = @transform_7, window_bounds = array<i64: 1>}, {transform_indices = @transform_8, window_bounds = array<i64: 8, 256>}]} {
    %c0 = arith.constant 0 : index
    %c0_0 = arith.constant 0 : index
    %0 = vector.load %arg1[%c0, %c0_0] : memref<8x8xbf16, #tpu.memory_space<vmem>>, vector<8x8xbf16>
    %c0_1 = arith.constant 0 : index
    %c0_2 = arith.constant 0 : index
    %1 = vector.load %arg4[%c0_1, %c0_2] : memref<8x256xbf16, #tpu.memory_space<vmem>>, vector<8x256xbf16>
    %cst = arith.constant dense<0.000000e+00> : vector<8x256xf32>
    %2 = tpu.matmul %0, %1, %cst {dimension_numbers = #tpu.dot_dimension_numbers<[1], [0], [0], [1], [0, 0, 1, 1], [], []>} : vector<8x8xbf16>, vector<8x256xbf16>, vector<8x256xf32> -> vector<8x256xf32>
    %c0_3 = arith.constant 0 : index
    %c0_4 = arith.constant 0 : index
    %3 = vector.load %arg2[%c0_3, %c0_4] : memref<8x8xbf16, #tpu.memory_space<vmem>>, vector<8x8xbf16>
    %c0_5 = arith.constant 0 : index
    %c0_6 = arith.constant 0 : index
    %4 = vector.load %arg5[%c0_5, %c0_6] : memref<8x256xbf16, #tpu.memory_space<vmem>>, vector<8x256xbf16>
    %cst_7 = arith.constant dense<0.000000e+00> : vector<8x256xf32>
    %5 = tpu.matmul %3, %4, %cst_7 {dimension_numbers = #tpu.dot_dimension_numbers<[1], [0], [0], [1], [0, 0, 1, 1], [], []>} : vector<8x8xbf16>, vector<8x256xbf16>, vector<8x256xf32> -> vector<8x256xf32>
    %6 = arith.addf %2, %5 : vector<8x256xf32>
    %c0_8 = arith.constant 0 : index
    %c0_9 = arith.constant 0 : index
    %7 = vector.load %arg3[%c0_8, %c0_9] : memref<8x8xbf16, #tpu.memory_space<vmem>>, vector<8x8xbf16>
    %c0_10 = arith.constant 0 : index
    %c0_11 = arith.constant 0 : index
    %8 = vector.load %arg6[%c0_10, %c0_11] : memref<8x256xbf16, #tpu.memory_space<vmem>>, vector<8x256xbf16>
    %cst_12 = arith.constant dense<0.000000e+00> : vector<8x256xf32>
    %9 = tpu.matmul %7, %8, %cst_12 {dimension_numbers = #tpu.dot_dimension_numbers<[1], [0], [0], [1], [0, 0, 1, 1], [], []>} : vector<8x8xbf16>, vector<8x256xbf16>, vector<8x256xf32> -> vector<8x256xf32>
    %10 = arith.addf %6, %9 : vector<8x256xf32>
    %c0_13 = arith.constant 0 : index
    %c0_14 = arith.constant 0 : index
    %11 = vector.load %arg7[%c0_13, %c0_14] : memref<8x1xf32, #tpu.memory_space<vmem>>, vector<8x1xf32>
    %12 = vector.broadcast %11 : vector<8x1xf32> to vector<8x256xf32>
    %13 = arith.addf %10, %12 : vector<8x256xf32>
    %c0_15 = arith.constant 0 : index
    %14 = memref.load %arg8[%c0_15] : memref<1xf32, #tpu.memory_space<smem>>
    %cst_16 = arith.constant 0.000000e+00 : f32
    %15 = vector.broadcast %cst_16 : f32 to vector<8x256xf32>
    %16 = arith.cmpf oge, %13, %15 : vector<8x256xf32>
    %17 = vector.broadcast %14 : f32 to vector<8x256xf32>
    %18 = arith.mulf %17, %13 : vector<8x256xf32>
    %19 = arith.select %16, %13, %18 : vector<8x256xi1>, vector<8x256xf32>
    %20 = arith.truncf %19 : vector<8x256xf32> to vector<8x256xbf16>
    %c0_17 = arith.constant 0 : index
    %c0_18 = arith.constant 0 : index
    %21 = vector.load %arg9[%c0_17, %c0_18] : memref<8x256xbf16, #tpu.memory_space<vmem>>, vector<8x256xbf16>
    tpu.vector_store %arg9[%c0_17, %c0_18], %20 {strides = array<i32>} : memref<8x256xbf16, #tpu.memory_space<vmem>>, vector<8x256xbf16>,
    return
  }
  func.func @transform_0(%arg0: i32) -> (i32, i32) {
    %c0_i32 = arith.constant 0 : i32
    %c0_i32_0 = arith.constant 0 : i32
    %c0_i32_1 = arith.constant 0 : i32
    return %c0_i32, %c0_i32_0 : i32, i32
  }
  func.func @transform_1(%arg0: i32) -> (i32, i32) {
    %c0_i32 = arith.constant 0 : i32
    %c0_i32_0 = arith.constant 0 : i32
    %c0_i32_1 = arith.constant 0 : i32
    return %c0_i32, %c0_i32_0 : i32, i32
  }
  func.func @transform_2(%arg0: i32) -> (i32, i32) {
    %c0_i32 = arith.constant 0 : i32
    %c0_i32_0 = arith.constant 0 : i32
    %c0_i32_1 = arith.constant 0 : i32
    return %c0_i32, %c0_i32_0 : i32, i32
  }
  func.func @transform_3(%arg0: i32) -> (i32, i32) {
    %c0_i32 = arith.constant 0 : i32
    %c0_i32_0 = arith.constant 0 : i32
    return %c0_i32, %arg0 : i32, i32
  }
  func.func @transform_4(%arg0: i32) -> (i32, i32) {
    %c0_i32 = arith.constant 0 : i32
    %c0_i32_0 = arith.constant 0 : i32
    return %c0_i32, %arg0 : i32, i32
  }
  func.func @transform_5(%arg0: i32) -> (i32, i32) {
    %c0_i32 = arith.constant 0 : i32
    %c0_i32_0 = arith.constant 0 : i32
    return %c0_i32, %arg0 : i32, i32
  }
  func.func @transform_6(%arg0: i32) -> (i32, i32) {
    %c0_i32 = arith.constant 0 : i32
    %c0_i32_0 = arith.constant 0 : i32
    %c0_i32_1 = arith.constant 0 : i32
    return %c0_i32, %c0_i32_0 : i32, i32
  }
  func.func @transform_7(%arg0: i32) -> i32 {
    %c0_i32 = arith.constant 0 : i32
    %c0_i32_0 = arith.constant 0 : i32
    return %c0_i32 : i32
  }
  func.func @transform_8(%arg0: i32) -> (i32, i32) {
    %c0_i32 = arith.constant 0 : i32
    %c0_i32_0 = arith.constant 0 : i32
    return %c0_i32, %arg0 : i32, i32
  }
}

module attributes {stable_mosaic.version = 11 : i64} {
  func.func @kernel(%arg0: i32, %arg1: memref<8x8xbf16, #tpu.memory_space<vmem>>, %arg2: memref<8x8xbf16, #tpu.memory_space<vmem>>, %arg3: memref<8x8xbf16, #tpu.memory_space<vmem>>, %arg4: memref<8x128xbf16, #tpu.memory_space<vmem>>, %arg5: memref<8x128xbf16, #tpu.memory_space<vmem>>, %arg6: memref<8x128xbf16, #tpu.memory_space<vmem>>, %arg7: memref<8x1xf32, #tpu.memory_space<vmem>>, %arg8: memref<1xf32, #tpu.memory_space<smem>>, %arg9: memref<8x128xbf16, #tpu.memory_space<vmem>>) attributes {dimension_semantics = [#tpu.dimension_semantics<parallel>], iteration_bounds = array<i64: 1>, scalar_prefetch = 0 : i64, scratch_operands = 0 : i64, tpu.core_type = #tpu.core_type<tc>, window_params = [{pipeline_mode = #tpu.pipeline_mode<synchronous>, transform_indices = @transform_0, window_bounds = array<i64: 8, 8>}, {pipeline_mode = #tpu.pipeline_mode<synchronous>, transform_indices = @transform_1, window_bounds = array<i64: 8, 8>}, {pipeline_mode = #tpu.pipeline_mode<synchronous>, transform_indices = @transform_2, window_bounds = array<i64: 8, 8>}, {transform_indices = @transform_3, window_bounds = array<i64: 8, 128>}, {transform_indices = @transform_4, window_bounds = array<i64: 8, 128>}, {transform_indices = @transform_5, window_bounds = array<i64: 8, 128>}, {pipeline_mode = #tpu.pipeline_mode<synchronous>, transform_indices = @transform_6, window_bounds = array<i64: 8, 1>}, {transform_indices = @transform_7, window_bounds = array<i64: 1>}, {transform_indices = @transform_8, window_bounds = array<i64: 8, 128>}]} {
    %c0 = arith.constant 0 : index
    %c0_0 = arith.constant 0 : index
    %0 = vector.load %arg1[%c0, %c0_0] : memref<8x8xbf16, #tpu.memory_space<vmem>>, vector<8x8xbf16>
    %c0_1 = arith.constant 0 : index
    %c0_2 = arith.constant 0 : index
    %1 = vector.load %arg4[%c0_1, %c0_2] : memref<8x128xbf16, #tpu.memory_space<vmem>>, vector<8x128xbf16>
    %cst = arith.constant dense<0.000000e+00> : vector<8x128xf32>
    %2 = tpu.matmul %0, %1, %cst {dimension_numbers = #tpu.dot_dimension_numbers<[1], [0], [0], [1], [0, 0, 1, 1], [], []>} : vector<8x8xbf16>, vector<8x128xbf16>, vector<8x128xf32> -> vector<8x128xf32>
    %c0_3 = arith.constant 0 : index
    %c0_4 = arith.constant 0 : index
    %3 = vector.load %arg2[%c0_3, %c0_4] : memref<8x8xbf16, #tpu.memory_space<vmem>>, vector<8x8xbf16>
    %c0_5 = arith.constant 0 : index
    %c0_6 = arith.constant 0 : index
    %4 = vector.load %arg5[%c0_5, %c0_6] : memref<8x128xbf16, #tpu.memory_space<vmem>>, vector<8x128xbf16>
    %cst_7 = arith.constant dense<0.000000e+00> : vector<8x128xf32>
    %5 = tpu.matmul %3, %4, %cst_7 {dimension_numbers = #tpu.dot_dimension_numbers<[1], [0], [0], [1], [0, 0, 1, 1], [], []>} : vector<8x8xbf16>, vector<8x128xbf16>, vector<8x128xf32> -> vector<8x128xf32>
    %6 = arith.addf %2, %5 : vector<8x128xf32>
    %c0_8 = arith.constant 0 : index
    %c0_9 = arith.constant 0 : index
    %7 = vector.load %arg3[%c0_8, %c0_9] : memref<8x8xbf16, #tpu.memory_space<vmem>>, vector<8x8xbf16>
    %c0_10 = arith.constant 0 : index
    %c0_11 = arith.constant 0 : index
    %8 = vector.load %arg6[%c0_10, %c0_11] : memref<8x128xbf16, #tpu.memory_space<vmem>>, vector<8x128xbf16>
    %cst_12 = arith.constant dense<0.000000e+00> : vector<8x128xf32>
    %9 = tpu.matmul %7, %8, %cst_12 {dimension_numbers = #tpu.dot_dimension_numbers<[1], [0], [0], [1], [0, 0, 1, 1], [], []>} : vector<8x8xbf16>, vector<8x128xbf16>, vector<8x128xf32> -> vector<8x128xf32>
    %10 = arith.addf %6, %9 : vector<8x128xf32>
    %c0_13 = arith.constant 0 : index
    %c0_14 = arith.constant 0 : index
    %11 = vector.load %arg7[%c0_13, %c0_14] : memref<8x1xf32, #tpu.memory_space<vmem>>, vector<8x1xf32>
    %12 = vector.broadcast %11 : vector<8x1xf32> to vector<8x128xf32>
    %13 = arith.addf %10, %12 : vector<8x128xf32>
    %c0_15 = arith.constant 0 : index
    %14 = memref.load %arg8[%c0_15] : memref<1xf32, #tpu.memory_space<smem>>
    %cst_16 = arith.constant 0.000000e+00 : f32
    %15 = vector.broadcast %cst_16 : f32 to vector<8x128xf32>
    %16 = arith.cmpf oge, %13, %15 : vector<8x128xf32>
    %17 = vector.broadcast %14 : f32 to vector<8x128xf32>
    %18 = arith.mulf %17, %13 : vector<8x128xf32>
    %19 = arith.select %16, %13, %18 : vector<8x128xi1>, vector<8x128xf32>
    %20 = arith.truncf %19 : vector<8x128xf32> to vector<8x128xbf16>
    %c0_17 = arith.constant 0 : index
    %c0_18 = arith.constant 0 : index
    %21 = vector.load %arg9[%c0_17, %c0_18] : memref<8x128xbf16, #tpu.memory_space<vmem>>, vector<8x128xbf16>
    tpu.vector_store %arg9[%c0_17, %c0_18], %20 {strides = array<i32>} : memref<8x128xbf16, #tpu.memory_space<vmem>>, vector<8x128xbf16>,
    return
  }
  func.func @transform_0(%arg0: i32) -> (i32, i32) {
    %c0_i32 = arith.constant 0 : i32
    %c0_i32_0 = arith.constant 0 : i32
    %c0_i32_1 = arith.constant 0 : i32
    return %c0_i32, %c0_i32_0 : i32, i32
  }
  func.func @transform_1(%arg0: i32) -> (i32, i32) {
    %c0_i32 = arith.constant 0 : i32
    %c0_i32_0 = arith.constant 0 : i32
    %c0_i32_1 = arith.constant 0 : i32
    return %c0_i32, %c0_i32_0 : i32, i32
  }
  func.func @transform_2(%arg0: i32) -> (i32, i32) {
    %c0_i32 = arith.constant 0 : i32
    %c0_i32_0 = arith.constant 0 : i32
    %c0_i32_1 = arith.constant 0 : i32
    return %c0_i32, %c0_i32_0 : i32, i32
  }
  func.func @transform_3(%arg0: i32) -> (i32, i32) {
    %c0_i32 = arith.constant 0 : i32
    %c0_i32_0 = arith.constant 0 : i32
    return %c0_i32, %arg0 : i32, i32
  }
  func.func @transform_4(%arg0: i32) -> (i32, i32) {
    %c0_i32 = arith.constant 0 : i32
    %c0_i32_0 = arith.constant 0 : i32
    return %c0_i32, %arg0 : i32, i32
  }
  func.func @transform_5(%arg0: i32) -> (i32, i32) {
    %c0_i32 = arith.constant 0 : i32
    %c0_i32_0 = arith.constant 0 : i32
    return %c0_i32, %arg0 : i32, i32
  }
  func.func @transform_6(%arg0: i32) -> (i32, i32) {
    %c0_i32 = arith.constant 0 : i32
    %c0_i32_0 = arith.constant 0 : i32
    %c0_i32_1 = arith.constant 0 : i32
    return %c0_i32, %c0_i32_0 : i32, i32
  }
  func.func @transform_7(%arg0: i32) -> i32 {
    %c0_i32 = arith.constant 0 : i32
    %c0_i32_0 = arith.constant 0 : i32
    return %c0_i32 : i32
  }
  func.func @transform_8(%arg0: i32) -> (i32, i32) {
    %c0_i32 = arith.constant 0 : i32
    %c0_i32_0 = arith.constant 0 : i32
    return %c0_i32, %arg0 : i32, i32
  }
}

</mosaic_0001>

<llo_original>
// kernel: _lambda_.12
$region0: #{_lambda_.12}
  #allocation0 [shape = 'u32[]', space=smem, size = 0x4, offset = 0x4, fixed_abs, tag = 'smem constant byte address 0x4 - core index']
  #allocation1 [shape = 'u32[144,128]{1,0:T(1,128)}', space=vmem, size = 0x12000, scoped, tag = 'internal scratch']
  #allocation2 [shape = 'f32[1]{0:T(128)S(6)}', space=smem, size = 0x200, scoped, tag = 'scoped memory for _lambda_.12']
  %s0 = inlined_call_operand.hbm [shape: bf16[8,8], index: 0, kind: input, shape index: {}]
  %s1 = inlined_call_operand.hbm [shape: bf16[8,8], index: 1, kind: input, shape index: {}]
  %s2 = inlined_call_operand.hbm [shape: bf16[8,128], index: 2, kind: input, shape index: {}, may-alias: {2,3}]
  %s3 = inlined_call_operand.hbm [shape: bf16[8,128], index: 3, kind: input, shape index: {}, may-alias: {2,3}]
  %s4 = inlined_call_operand.hbm [shape: f32[8,1], index: 4, kind: input, shape index: {}]
  %s5 = inlined_call_operand.<no memory space> [shape: f32[1], index: 5, kind: input, shape index: {}]
  %s6 = inlined_call_operand.hbm [shape: bf16[8,128], index: 6, kind: output, shape index: {}]
  %s7 = sld [smem:[#allocation0]]
  $region54: #{_lambda_.12} parent=0
    _
  %s9 = ssub.s32 1, %s7
  %s10 = scalar_select 0, %s9, %s7
  %11 = sst [smem:[#allocation2]] %s5
  $region1: #{_lambda_.12} parent=0
    #allocation3 [shape = 'u8[2048]{0}', space=vmem, size = 0x800, scoped, tag = 'input window, operand 0, single buffered']
    #allocation4 [shape = 's32[1]{0}', space=sflag, size = 0x4, scoped, tag = 'scoped memory for _lambda_.12']
    #allocation5 [shape = 's32[1]{0}', space=sflag, size = 0x4, scoped, tag = 'scoped memory for _lambda_.12']
    #allocation6 [shape = 'u8[2048]{0}', space=vmem, size = 0x800, scoped, tag = 'input window, operand 1, single buffered']
    #allocation7 [shape = 's32[1]{0}', space=sflag, size = 0x4, scoped, tag = 'scoped memory for _lambda_.12']
    #allocation8 [shape = 'u8[2048]{0}', space=vmem, size = 0x800, scoped, tag = 'input window, operand 2, single buffered']
    #allocation9 [shape = 'u8[2048]{0}', space=vmem, size = 0x800, scoped, tag = 'input window, operand 3, single buffered']
    #allocation10 [shape = 's32[1]{0}', space=sflag, size = 0x4, scoped, tag = 'scoped memory for _lambda_.12']
    #allocation11 [shape = 'u8[4096]{0}', space=vmem, size = 0x1000, scoped, tag = 'input window, operand 4, single buffered']
    #allocation12 [shape = 'u8[2048]{0}', space=vmem, size = 0x800, scoped, tag = 'output window, operand 0, single buffered']
    %12 = vsyncpa [#allocation4], 0
    %13 = vsyncpa [#allocation7], 0
    %14 = vsyncpa [#allocation10], 0
    %15 = vsyncpa [#allocation5], 0
    // Predicated region
    $region2: #{_lambda_.12} parent=1 // pred_check
      _
    $region3: #{_lambda_.12} parent=1 // pred_check_branch
      %17 = sbr.rel (0) target = $region5
    $region4: #{_lambda_.12} parent=1 // pred_region
      %s19 = ssub.s32 64, 64
      %20 = vsyncadd [#allocation4], %s19
      %s22 = sshll.u32 [#allocation3], 4
      %s23 = int_to_ptr.vmem [resolvable:$true] %s22
      %25 = dma.hbm_to_vmem [thread:$0]  %s0, 64, %s23, [#allocation4]
    $region5: #{_lambda_.12} parent=1 // pred_fallthru
      _
    // Predicated region
    $region6: #{_lambda_.12} parent=1 // pred_check
      _
    $region7: #{_lambda_.12} parent=1 // pred_check_branch
      %27 = sbr.rel (0) target = $region9
    $region8: #{_lambda_.12} parent=1 // pred_region
      %s29 = ssub.s32 64, 64
      %30 = vsyncadd [#allocation7], %s29
      %s32 = sshll.u32 [#allocation6], 4
      %s33 = int_to_ptr.vmem [resolvable:$true] %s32
      %35 = dma.hbm_to_vmem [thread:$0]  %s1, 64, %s33, [#allocation7]
    $region9: #{_lambda_.12} parent=1 // pred_fallthru
      _
    // Predicated region
    $region10: #{_lambda_.12} parent=1 // pred_check
      _
    $region11: #{_lambda_.12} parent=1 // pred_check_branch
      %37 = sbr.rel (0) target = $region13
    $region12: #{_lambda_.12} parent=1 // pred_region
      %s39 = ssub.s32 64, 64
      %40 = vsyncadd [#allocation7], %s39
      %s42 = sshll.u32 [#allocation8], 4
      %s43 = int_to_ptr.vmem [resolvable:$true] %s42
      %45 = dma.hbm_to_vmem [thread:$0]  %s2, 64, %s43, [#allocation7]
    $region13: #{_lambda_.12} parent=1 // pred_fallthru
      _
    // Predicated region
    $region14: #{_lambda_.12} parent=1 // pred_check
      _
    $region15: #{_lambda_.12} parent=1 // pred_check_branch
      %47 = sbr.rel (0) target = $region17
    $region16: #{_lambda_.12} parent=1 // pred_region
      %s49 = ssub.s32 64, 64
      %50 = vsyncadd [#allocation10], %s49
      %s52 = sshll.u32 [#allocation9], 4
      %s53 = int_to_ptr.vmem [resolvable:$true] %s52
      %55 = dma.hbm_to_vmem [thread:$0]  %s3, 64, %s53, [#allocation10]
    $region17: #{_lambda_.12} parent=1 // pred_fallthru
      _
    // Predicated region
    $region18: #{_lambda_.12} parent=1 // pred_check
      _
    $region19: #{_lambda_.12} parent=1 // pred_check_branch
      %57 = sbr.rel (0) target = $region21
    $region20: #{_lambda_.12} parent=1 // pred_region
      %s59 = ssub.s32 128, 128
      %60 = vsyncadd [#allocation10], %s59
      %s62 = sshll.u32 [#allocation11], 4
      %s63 = int_to_ptr.vmem [resolvable:$true] %s62
      %65 = dma.hbm_to_vmem [thread:$0]  %s4, 128, %s63, [#allocation10]
    $region21: #{_lambda_.12} parent=1 // pred_fallthru
      _
    // Predicated region
    $region22: #{_lambda_.12} parent=1 // pred_check
      _
    $region23: #{_lambda_.12} parent=1 // pred_check_branch
      %67 = sbr.rel (0) target = $region25
    $region24: #{_lambda_.12} parent=1 // pred_region
      _
    $region25: #{_lambda_.12} parent=1 // pred_fallthru
      _
    // Predicated region
    $region26: #{_lambda_.12} parent=1 // pred_check
      _
    $region27: #{_lambda_.12} parent=1 // pred_check_branch
      %69 = sbr.rel (0) target = $region29
    $region28: #{_lambda_.12} parent=1 // pred_region
      %70 = dma.done [#allocation4], 64
    $region29: #{_lambda_.12} parent=1 // pred_fallthru
      _
    // Predicated region
    $region30: #{_lambda_.12} parent=1 // pred_check
      _
    $region31: #{_lambda_.12} parent=1 // pred_check_branch
      %72 = sbr.rel (0) target = $region33
    $region32: #{_lambda_.12} parent=1 // pred_region
      %73 = dma.done [#allocation7], 64
    $region33: #{_lambda_.12} parent=1 // pred_fallthru
      _
    // Predicated region
    $region34: #{_lambda_.12} parent=1 // pred_check
      _
    $region35: #{_lambda_.12} parent=1 // pred_check_branch
      %75 = sbr.rel (0) target = $region37
    $region36: #{_lambda_.12} parent=1 // pred_region
      %76 = dma.done [#allocation7], 64
    $region37: #{_lambda_.12} parent=1 // pred_fallthru
      _
    // Predicated region
    $region38: #{_lambda_.12} parent=1 // pred_check
      _
    $region39: #{_lambda_.12} parent=1 // pred_check_branch
      %78 = sbr.rel (0) target = $region41
    $region40: #{_lambda_.12} parent=1 // pred_region
      %79 = dma.done [#allocation10], 64
    $region41: #{_lambda_.12} parent=1 // pred_fallthru
      _
    // Predicated region
    $region42: #{_lambda_.12} parent=1 // pred_check
      _
    $region43: #{_lambda_.12} parent=1 // pred_check_branch
      %81 = sbr.rel (0) target = $region45
    $region44: #{_lambda_.12} parent=1 // pred_region
      %82 = dma.done [#allocation10], 128
    $region45: #{_lambda_.12} parent=1 // pred_fallthru
      _
    %v84 = vld [vmem:[#allocation3] sm:$0xf]
    %v85 = vld [vmem:[#allocation8] sm:$0xf]
    %v86 = vld [vmem:[#allocation6] sm:$0xf]
    %v87 = vld [vmem:[#allocation9] sm:$0xf]
    %vm88 = vcmask 64512
    %v90 = vsel %vm88, %v86, 0
    %vm92 = vcmask 1043456
    %v94 = vsel %vm92, %v87, 0
    %96 = vmatprep.subr.bf16.mxu0 0
    %97 = vmatpush1.bf16.msra.mxu0 %v94
    %98 = vmatprep.subr.bf16.mxu0 0
    %99 = vmatpush1.bf16.msra.mxu0 0
    %100 = vmatprep.subr.bf16.mxu0 0
    %101 = vmatpush1.bf16.msra.mxu0 0
    %102 = vmatprep.subr.bf16.mxu0 0
    %103 = vmatpush1.bf16.msra.mxu0 0
    %104 = vmatprep.subr.bf16.mxu0 0
    %105 = vmatpush1.bf16.msra.mxu0 0
    %106 = vmatprep.subr.bf16.mxu0 0
    %107 = vmatpush1.bf16.msra.mxu0 0
    %108 = vmatprep.subr.bf16.mxu0 0
    %109 = vmatpush1.bf16.msra.mxu0 0
    %110 = vmatprep.subr.bf16.mxu0 0
    %111 = vmatpush1.bf16.msra.mxu0 0
    %112 = vmatprep.subr.bf16.mxu0 0
    %113 = vmatpush1.bf16.msra.mxu0 0
    %114 = vmatprep.subr.bf16.mxu0 0
    %115 = vmatpush1.bf16.msra.mxu0 0
    %116 = vmatprep.subr.bf16.mxu0 0
    %117 = vmatpush1.bf16.msra.mxu0 0
    %118 = vmatprep.subr.bf16.mxu0 0
    %119 = vmatpush1.bf16.msra.mxu0 0
    %120 = vmatprep.subr.bf16.mxu0 0
    %121 = vmatpush1.bf16.msra.mxu0 0
    %122 = vmatprep.subr.bf16.mxu0 0
    %123 = vmatpush1.bf16.msra.mxu0 0
    %124 = vmatprep.subr.bf16.mxu0 0
    %125 = vmatpush1.bf16.msra.mxu0 0
    %126 = vmatprep.subr.bf16.mxu0 0
    %127 = vmatpush1.bf16.msra.mxu0 0
    %128 = vmatprep.mubr.bf16.mxu0 0
    %129 = vmatmul.mubr.bf16.gmra.mrb[0].mxu0 %v90
    %v130 = vpop.f32.mrb[0].mxu0
    %v131 = vadd.f32 0.0, %v130
    %v132 = vpop.f32.mrb[0].mxu0
    %v133 = vpop.f32.mrb[0].mxu0
    %v134 = vpop.f32.mrb[0].mxu0
    %135 = vdwg.mxu0
    %v137 = vsel %vm88, %v84, 0
    %v140 = vsel %vm92, %v85, 0
    %142 = vmatprep.subr.bf16.mxu0 0
    %143 = vmatpush1.bf16.msra.mxu0 %v140
    %144 = vmatprep.subr.bf16.mxu0 0
    %145 = vmatpush1.bf16.msra.mxu0 0
    %146 = vmatprep.subr.bf16.mxu0 0
    %147 = vmatpush1.bf16.msra.mxu0 0
    %148 = vmatprep.subr.bf16.mxu0 0
    %149 = vmatpush1.bf16.msra.mxu0 0
    %150 = vmatprep.subr.bf16.mxu0 0
    %151 = vmatpush1.bf16.msra.mxu0 0
    %152 = vmatprep.subr.bf16.mxu0 0
    %153 = vmatpush1.bf16.msra.mxu0 0
    %154 = vmatprep.subr.bf16.mxu0 0
    %155 = vmatpush1.bf16.msra.mxu0 0
    %156 = vmatprep.subr.bf16.mxu0 0
    %157 = vmatpush1.bf16.msra.mxu0 0
    %158 = vmatprep.subr.bf16.mxu0 0
    %159 = vmatpush1.bf16.msra.mxu0 0
    %160 = vmatprep.subr.bf16.mxu0 0
    %161 = vmatpush1.bf16.msra.mxu0 0
    %162 = vmatprep.subr.bf16.mxu0 0
    %163 = vmatpush1.bf16.msra.mxu0 0
    %164 = vmatprep.subr.bf16.mxu0 0
    %165 = vmatpush1.bf16.msra.mxu0 0
    %166 = vmatprep.subr.bf16.mxu0 0
    %167 = vmatpush1.bf16.msra.mxu0 0
    %168 = vmatprep.subr.bf16.mxu0 0
    %169 = vmatpush1.bf16.msra.mxu0 0
    %170 = vmatprep.subr.bf16.mxu0 0
    %171 = vmatpush1.bf16.msra.mxu0 0
    %172 = vmatprep.subr.bf16.mxu0 0
    %173 = vmatpush1.bf16.msra.mxu0 0
    %174 = vmatprep.mubr.bf16.mxu0 0
    %175 = vmatmul.mubr.bf16.gmra.mrb[0].mxu0 %v137
    %v176 = vpop.f32.mrb[0].mxu0
    %v177 = vadd.f32 %v131, %v176
    %v178 = vpop.f32.mrb[0].mxu0
    %v179 = vpop.f32.mrb[0].mxu0
    %v180 = vpop.f32.mrb[0].mxu0
    %181 = vdwg.mxu0
    %v182 = vld [vmem:[#allocation11] sm:$0xff]
    %184 = vset.pattern.permute.xlu0 0
    %185 = vperm.xlu0 %184, %v182
    %v186 = vpop.permute.xlu0 %185
    %v188 = vadd.f32 %v177, %v186
    %s189 = sld [smem:[#allocation2]]
    %vm190 = vcmp.ge.f32.partialorder %v188, 0.0
    %v191 = vstv %s189
    %v192 = vmul.f32 %v191, %v188
    %v193 = vsel %vm190, %v188, %v192
    %v194 = vpack.c.bf16 %v193, %v193
    %195 = vst [vmem:[#allocation12] sm:$0xf] %v194
    // Predicated region
    $region46: #{_lambda_.12} parent=1 // pred_check
      _
    $region47: #{_lambda_.12} parent=1 // pred_check_branch
      %197 = sbr.rel (0) target = $region49
    $region48: #{_lambda_.12} parent=1 // pred_region
      %s199 = ssub.s32 64, 64
      %200 = vsyncadd [#allocation5], %s199
      %s202 = sshll.u32 [#allocation12], 4
      %s203 = int_to_ptr.vmem [resolvable:$true] %s202
      %205 = dma.vmem_to_hbm [thread:$0]  %s203, 64, %s6, [#allocation5]
    $region49: #{_lambda_.12} parent=1 // pred_fallthru
      _
    // Predicated region
    $region50: #{_lambda_.12} parent=1 // pred_check
      _
    $region51: #{_lambda_.12} parent=1 // pred_check_branch
      %207 = sbr.rel (0) target = $region53
    $region52: #{_lambda_.12} parent=1 // pred_region
      %208 = dma.done [#allocation5], 64
    $region53: #{_lambda_.12} parent=1 // pred_fallthru
      _
    %209 = vsyncpa [#allocation4], 1
    %210 = vsyncpa [#allocation7], 1
    %211 = vsyncpa [#allocation10], 1
    %212 = vsyncpa [#allocation5], 1

// kernel: _lambda_.13
$region0: #{_lambda_.13}
  #allocation0 [shape = 'u32[]', space=smem, size = 0x4, offset = 0x4, fixed_abs, tag = 'smem constant byte address 0x4 - core index']
  #allocation1 [shape = 'u32[144,128]{1,0:T(1,128)}', space=vmem, size = 0x12000, scoped, tag = 'internal scratch']
  #allocation2 [shape = 'f32[1]{0:T(128)S(6)}', space=smem, size = 0x200, scoped, tag = 'scoped memory for _lambda_.13']
  %s0 = inlined_call_operand.hbm [shape: bf16[32,72], index: 0, kind: input, shape index: {}]
  %s1 = inlined_call_operand.hbm [shape: bf16[72,128], index: 1, kind: input, shape index: {}]
  %s2 = inlined_call_operand.hbm [shape: f32[32,1], index: 2, kind: input, shape index: {}]
  %s3 = inlined_call_operand.<no memory space> [shape: f32[1], index: 3, kind: input, shape index: {}]
  %s4 = inlined_call_operand.hbm [shape: bf16[32,128], index: 4, kind: output, shape index: {}]
  %s5 = sld [smem:[#allocation0]]
  $region38: #{_lambda_.13} parent=0
    _
  %s7 = ssub.s32 1, %s5
  %s8 = scalar_select 0, %s7, %s5
  %9 = sst [smem:[#allocation2]] %s3
  $region1: #{_lambda_.13} parent=0
    #allocation3 [shape = 'u8[8192]{0}', space=vmem, size = 0x2000, scoped, tag = 'input window, operand 0, single buffered']
    #allocation4 [shape = 's32[1]{0}', space=sflag, size = 0x4, scoped, tag = 'scoped memory for _lambda_.13']
    #allocation5 [shape = 's32[1]{0}', space=sflag, size = 0x4, scoped, tag = 'scoped memory for _lambda_.13']
    #allocation6 [shape = 'u8[18432]{0}', space=vmem, size = 0x4800, scoped, tag = 'input window, operand 1, single buffered']
    #allocation7 [shape = 's32[1]{0}', space=sflag, size = 0x4, scoped, tag = 'scoped memory for _lambda_.13']
    #allocation8 [shape = 'u8[16384]{0}', space=vmem, size = 0x4000, scoped, tag = 'input window, operand 2, single buffered']
    #allocation9 [shape = 'u8[8192]{0}', space=vmem, size = 0x2000, scoped, tag = 'output window, operand 0, single buffered']
    %10 = vsyncpa [#allocation4], 0
    %11 = vsyncpa [#allocation7], 0
    %12 = vsyncpa [#allocation5], 0
    // Predicated region
    $region2: #{_lambda_.13} parent=1 // pred_check
      _
    $region3: #{_lambda_.13} parent=1 // pred_check_branch
      %14 = sbr.rel (0) target = $region5
    $region4: #{_lambda_.13} parent=1 // pred_region
      %s16 = ssub.s32 256, 256
      %17 = vsyncadd [#allocation4], %s16
      %s18 = sshll.u32 [#allocation3], 4
      %s19 = int_to_ptr.vmem [resolvable:$true] %s18
      %24 = dma.hbm_to_vmem [thread:$0]  %s0, 256, %s19, [#allocation4], 64, 64, 4
    $region5: #{_lambda_.13} parent=1 // pred_fallthru
      _
    // Predicated region
    $region6: #{_lambda_.13} parent=1 // pred_check
      _
    $region7: #{_lambda_.13} parent=1 // pred_check_branch
      %26 = sbr.rel (0) target = $region9
    $region8: #{_lambda_.13} parent=1 // pred_region
      %s28 = ssub.s32 576, 576
      %29 = vsyncadd [#allocation7], %s28
      %s30 = sshll.u32 [#allocation6], 4
      %s31 = int_to_ptr.vmem [resolvable:$true] %s30
      %36 = dma.hbm_to_vmem [thread:$0]  %s1, 576, %s31, [#allocation7], 64, 64, 4
    $region9: #{_lambda_.13} parent=1 // pred_fallthru
      _
    // Predicated region
    $region10: #{_lambda_.13} parent=1 // pred_check
      _
    $region11: #{_lambda_.13} parent=1 // pred_check_branch
      %38 = sbr.rel (0) target = $region13
    $region12: #{_lambda_.13} parent=1 // pred_region
      %s40 = ssub.s32 512, 512
      %41 = vsyncadd [#allocation7], %s40
      %s42 = sshll.u32 [#allocation8], 4
      %s43 = int_to_ptr.vmem [resolvable:$true] %s42
      %48 = dma.hbm_to_vmem [thread:$0]  %s2, 512, %s43, [#allocation7], 128, 128, 8
    $region13: #{_lambda_.13} parent=1 // pred_fallthru
      _
    // Predicated region
    $region14: #{_lambda_.13} parent=1 // pred_check
      _
    $region15: #{_lambda_.13} parent=1 // pred_check_branch
      %50 = sbr.rel (0) target = $region17
    $region16: #{_lambda_.13} parent=1 // pred_region
      _
    $region17: #{_lambda_.13} parent=1 // pred_fallthru
      _
    // Predicated region
    $region18: #{_lambda_.13} parent=1 // pred_check
      _
    $region19: #{_lambda_.13} parent=1 // pred_check_branch
      %52 = sbr.rel (0) target = $region21
    $region20: #{_lambda_.13} parent=1 // pred_region
      %53 = dma.done [#allocation4], 256
    $region21: #{_lambda_.13} parent=1 // pred_fallthru
      _
    // Predicated region
    $region22: #{_lambda_.13} parent=1 // pred_check
      _
    $region23: #{_lambda_.13} parent=1 // pred_check_branch
      %55 = sbr.rel (0) target = $region25
    $region24: #{_lambda_.13} parent=1 // pred_region
      %56 = dma.done [#allocation7], 576
    $region25: #{_lambda_.13} parent=1 // pred_fallthru
      _
    // Predicated region
    $region26: #{_lambda_.13} parent=1 // pred_check
      _
    $region27: #{_lambda_.13} parent=1 // pred_check_branch
      %58 = sbr.rel (0) target = $region29
    $region28: #{_lambda_.13} parent=1 // pred_region
      %59 = dma.done [#allocation7], 512
    $region29: #{_lambda_.13} parent=1 // pred_fallthru
      _
    %v61 = vld [vmem:[#allocation3] sm:$0xf]
    %v62 = vld [vmem:[#allocation3 + $0x4] sm:$0xf]
    %v63 = vld [vmem:[#allocation3 + $0x8] sm:$0xf]
    %v64 = vld [vmem:[#allocation3 + $0xc] sm:$0xf]
    %v65 = vld [vmem:[#allocation6] sm:$0xf]
    %v66 = vld [vmem:[#allocation6 + $0x4] sm:$0xf]
    %v67 = vld [vmem:[#allocation6 + $0x8] sm:$0xf]
    %v68 = vld [vmem:[#allocation6 + $0xc] sm:$0xf]
    %v69 = vld [vmem:[#allocation6 + $0x10] sm:$0xf]
    %v70 = vld [vmem:[#allocation6 + $0x14] sm:$0xf]
    %v71 = vld [vmem:[#allocation6 + $0x18] sm:$0xf]
    %v72 = vld [vmem:[#allocation6 + $0x1c] sm:$0xf]
    %v73 = vld [vmem:[#allocation6 + $0x20] sm:$0xf]
    %v74 = vld [vmem:[#allocation8] sm:$0xff]
    %v75 = vld [vmem:[#allocation8 + $0x8] sm:$0xff]
    %v76 = vld [vmem:[#allocation8 + $0x10] sm:$0xff]
    %v77 = vld [vmem:[#allocation8 + $0x18] sm:$0xff]
    %79 = vset.pattern.permute.xlu0 0
    %80 = vperm.xlu0 %79, %v74
    %v81 = vpop.permute.xlu0 %80
    %84 = vset.pattern.permute.xlu0 0
    %85 = vperm.xlu0 %84, %v75
    %v86 = vpop.permute.xlu0 %85
    %89 = vset.pattern.permute.xlu0 0
    %90 = vperm.xlu0 %89, %v76
    %v91 = vpop.permute.xlu0 %90
    %94 = vset.pattern.permute.xlu0 0
    %95 = vperm.xlu0 %94, %v77
    %v96 = vpop.permute.xlu0 %95
    %v102 = vunpack.c.l.b16 %v61
    %v103 = vunpack.c.l.b16 %v62
    %v104 = vunpack.c.l.b16 %v63
    %v105 = vunpack.c.l.b16 %v64
    %v106 = vpack.c.b16 %v103, %v102
    %v107 = vpack.c.b16 %v105, %v104
    %v117 = vunpack.c.l.b16 %v65
    %v118 = vunpack.c.l.b16 %v66
    %v119 = vunpack.c.l.b16 %v67
    %v120 = vunpack.c.l.b16 %v68
    %v121 = vunpack.c.l.b16 %v69
    %v122 = vunpack.c.l.b16 %v70
    %v123 = vunpack.c.l.b16 %v71
    %v124 = vunpack.c.l.b16 %v72
    %v125 = vunpack.c.l.b16 %v73
    %v126 = vpack.c.b16 %v118, %v117
    %v127 = vpack.c.b16 %v120, %v119
    %v128 = vpack.c.b16 %v122, %v121
    %v129 = vpack.c.b16 %v124, %v123
    %v130 = vpack.c.b16 %v125, %v125
    %vm135 = vcmask 588800
    %v137 = vsel %vm135, %v106, 0
    %v140 = vsel %vm135, %v107, 0
    %vm142 = vcmask 1043456
    %v144 = vsel %vm142, %v130, 0
    %146 = vmatprep.subr.bf16.mxu0 0
    %147 = vmatpush1.bf16.msra.mxu0 %v126
    %148 = vmatprep.subr.bf16.mxu0 0
    %149 = vmatpush1.bf16.msra.mxu0 %v127
    %150 = vmatprep.subr.bf16.mxu0 0
    %151 = vmatpush1.bf16.msra.mxu0 %v128
    %152 = vmatprep.subr.bf16.mxu0 0
    %153 = vmatpush1.bf16.msra.mxu0 %v129
    %154 = vmatprep.subr.bf16.mxu0 0
    %155 = vmatpush1.bf16.msra.mxu0 %v144
    %156 = vmatprep.subr.bf16.mxu0 0
    %157 = vmatpush1.bf16.msra.mxu0 0
    %158 = vmatprep.subr.bf16.mxu0 0
    %159 = vmatpush1.bf16.msra.mxu0 0
    %160 = vmatprep.subr.bf16.mxu0 0
    %161 = vmatpush1.bf16.msra.mxu0 0
    %162 = vmatprep.subr.bf16.mxu0 0
    %163 = vmatpush1.bf16.msra.mxu0 0
    %164 = vmatprep.subr.bf16.mxu0 0
    %165 = vmatpush1.bf16.msra.mxu0 0
    %166 = vmatprep.subr.bf16.mxu0 0
    %167 = vmatpush1.bf16.msra.mxu0 0
    %168 = vmatprep.subr.bf16.mxu0 0
    %169 = vmatpush1.bf16.msra.mxu0 0
    %170 = vmatprep.subr.bf16.mxu0 0
    %171 = vmatpush1.bf16.msra.mxu0 0
    %172 = vmatprep.subr.bf16.mxu0 0
    %173 = vmatpush1.bf16.msra.mxu0 0
    %174 = vmatprep.subr.bf16.mxu0 0
    %175 = vmatpush1.bf16.msra.mxu0 0
    %176 = vmatprep.subr.bf16.mxu0 0
    %177 = vmatpush1.bf16.msra.mxu0 0
    %178 = vmatprep.mubr.bf16.mxu0 0
    %179 = vmatmul.mubr.bf16.gmra.mrb[0].mxu0 %v137
    %v180 = vpop.f32.mrb[0].mxu0
    %v181 = vadd.f32 %v81, %v180
    %v182 = vpop.f32.mrb[0].mxu0
    %v183 = vpop.f32.mrb[0].mxu0
    %v184 = vadd.f32 %v86, %v183
    %v185 = vpop.f32.mrb[0].mxu0
    %186 = vmatprep.mubr.bf16.mxu0 0
    %187 = vmatmul.mubr.bf16.gmra.mrb[0].mxu0 %v140
    %v188 = vpop.f32.mrb[0].mxu0
    %v189 = vadd.f32 %v91, %v188
    %v190 = vpop.f32.mrb[0].mxu0
    %v191 = vpop.f32.mrb[0].mxu0
    %v192 = vadd.f32 %v96, %v191
    %v193 = vpop.f32.mrb[0].mxu0
    %194 = vdwg.mxu0
    %s195 = sld [smem:[#allocation2]]
    %vm196 = vcmp.ge.f32.partialorder %v181, 0.0
    %vm197 = vcmp.ge.f32.partialorder %v184, 0.0
    %vm198 = vcmp.ge.f32.partialorder %v189, 0.0
    %vm199 = vcmp.ge.f32.partialorder %v192, 0.0
    %v200 = vstv %s195
    %v201 = vmul.f32 %v200, %v181
    %v202 = vmul.f32 %v200, %v184
    %v203 = vmul.f32 %v200, %v189
    %v204 = vmul.f32 %v200, %v192
    %v205 = vsel %vm196, %v181, %v201
    %v206 = vsel %vm197, %v184, %v202
    %v207 = vsel %vm198, %v189, %v203
    %v208 = vsel %vm199, %v192, %v204
    %v209 = vpack.c.bf16 %v206, %v205
    %v210 = vpack.c.bf16 %v208, %v207
    %v213 = vunpack.c.l.b16 %v209
    %v214 = vunpack.c.h.b16 %v209
    %v215 = vunpack.c.l.b16 %v210
    %v216 = vunpack.c.h.b16 %v210
    %v217 = vpack.c.b16 %v213, %v213
    %v218 = vpack.c.b16 %v214, %v214
    %v219 = vpack.c.b16 %v215, %v215
    %v220 = vpack.c.b16 %v216, %v216
    %225 = vst [vmem:[#allocation9] sm:$0xf] %v217
    %226 = vst [vmem:[#allocation9 + $0x4] sm:$0xf] %v218
    %227 = vst [vmem:[#allocation9 + $0x8] sm:$0xf] %v219
    %228 = vst [vmem:[#allocation9 + $0xc] sm:$0xf] %v220
    // Predicated region
    $region30: #{_lambda_.13} parent=1 // pred_check
      _
    $region31: #{_lambda_.13} parent=1 // pred_check_branch
      %230 = sbr.rel (0) target = $region33
    $region32: #{_lambda_.13} parent=1 // pred_region
      %s232 = ssub.s32 256, 256
      %233 = vsyncadd [#allocation5], %s232
      %s234 = sshll.u32 [#allocation9], 4
      %s235 = int_to_ptr.vmem [resolvable:$true] %s234
      %240 = dma.vmem_to_hbm [thread:$0]  %s235, 256, %s4, [#allocation5], 64, 64, 4
    $region33: #{_lambda_.13} parent=1 // pred_fallthru
      _
    // Predicated region
    $region34: #{_lambda_.13} parent=1 // pred_check
      _
    $region35: #{_lambda_.13} parent=1 // pred_check_branch
      %242 = sbr.rel (0) target = $region37
    $region36: #{_lambda_.13} parent=1 // pred_region
      %243 = dma.done [#allocation5], 256
    $region37: #{_lambda_.13} parent=1 // pred_fallthru
      _
    %244 = vsyncpa [#allocation4], 1
    %245 = vsyncpa [#allocation7], 1
    %246 = vsyncpa [#allocation5], 1

// kernel: _lambda_.14
$region0: #{_lambda_.14}
  #allocation0 [shape = 'u32[]', space=smem, size = 0x4, offset = 0x4, fixed_abs, tag = 'smem constant byte address 0x4 - core index']
  #allocation1 [shape = 'u32[144,128]{1,0:T(1,128)}', space=vmem, size = 0x12000, scoped, tag = 'internal scratch']
  #allocation2 [shape = 'f32[1]{0:T(128)S(6)}', space=smem, size = 0x200, scoped, tag = 'scoped memory for _lambda_.14']
  %s0 = inlined_call_operand.hbm [shape: bf16[8,288], index: 0, kind: input, shape index: {}]
  %s1 = inlined_call_operand.hbm [shape: bf16[288,128], index: 1, kind: input, shape index: {}]
  %s2 = inlined_call_operand.hbm [shape: f32[8,1], index: 2, kind: input, shape index: {}]
  %s3 = inlined_call_operand.<no memory space> [shape: f32[1], index: 3, kind: input, shape index: {}]
  %s4 = inlined_call_operand.hbm [shape: bf16[8,128], index: 4, kind: output, shape index: {}]
  %s5 = sld [smem:[#allocation0]]
  $region38: #{_lambda_.14} parent=0
    _
  %s7 = ssub.s32 1, %s5
  %s8 = scalar_select 0, %s7, %s5
  %9 = sst [smem:[#allocation2]] %s3
  $region1: #{_lambda_.14} parent=0
    #allocation3 [shape = 'u8[6144]{0}', space=vmem, size = 0x1800, scoped, tag = 'input window, operand 0, single buffered']
    #allocation4 [shape = 's32[1]{0}', space=sflag, size = 0x4, scoped, tag = 'scoped memory for _lambda_.14']
    #allocation5 [shape = 's32[1]{0}', space=sflag, size = 0x4, scoped, tag = 'scoped memory for _lambda_.14']
    #allocation6 [shape = 'u8[73728]{0}', space=vmem, size = 0x12000, scoped, tag = 'input window, operand 1, single buffered']
    #allocation7 [shape = 's32[1]{0}', space=sflag, size = 0x4, scoped, tag = 'scoped memory for _lambda_.14']
    #allocation8 [shape = 'u8[4096]{0}', space=vmem, size = 0x1000, scoped, tag = 'input window, operand 2, single buffered']
    #allocation9 [shape = 'u8[2048]{0}', space=vmem, size = 0x800, scoped, tag = 'output window, operand 0, single buffered']
    %10 = vsyncpa [#allocation4], 0
    %11 = vsyncpa [#allocation7], 0
    %12 = vsyncpa [#allocation5], 0
    // Predicated region
    $region2: #{_lambda_.14} parent=1 // pred_check
      _
    $region3: #{_lambda_.14} parent=1 // pred_check_branch
      %14 = sbr.rel (0) target = $region5
    $region4: #{_lambda_.14} parent=1 // pred_region
      %s16 = ssub.s32 192, 192
      %17 = vsyncadd [#allocation4], %s16
      %s19 = sshll.u32 [#allocation3], 4
      %s20 = int_to_ptr.vmem [resolvable:$true] %s19
      %22 = dma.hbm_to_vmem [thread:$0]  %s0, 192, %s20, [#allocation4]
    $region5: #{_lambda_.14} parent=1 // pred_fallthru
      _
    // Predicated region
    $region6: #{_lambda_.14} parent=1 // pred_check
      _
    $region7: #{_lambda_.14} parent=1 // pred_check_branch
      %24 = sbr.rel (0) target = $region9
    $region8: #{_lambda_.14} parent=1 // pred_region
      %s26 = ssub.s32 2304, 2304
      %27 = vsyncadd [#allocation7], %s26
      %s28 = sshll.u32 [#allocation6], 4
      %s29 = int_to_ptr.vmem [resolvable:$true] %s28
      %34 = dma.hbm_to_vmem [thread:$0]  %s1, 2304, %s29, [#allocation7], 64, 64, 4
    $region9: #{_lambda_.14} parent=1 // pred_fallthru
      _
    // Predicated region
    $region10: #{_lambda_.14} parent=1 // pred_check
      _
    $region11: #{_lambda_.14} parent=1 // pred_check_branch
      %36 = sbr.rel (0) target = $region13
    $region12: #{_lambda_.14} parent=1 // pred_region
      %s38 = ssub.s32 128, 128
      %39 = vsyncadd [#allocation7], %s38
      %s41 = sshll.u32 [#allocation8], 4
      %s42 = int_to_ptr.vmem [resolvable:$true] %s41
      %44 = dma.hbm_to_vmem [thread:$0]  %s2, 128, %s42, [#allocation7]
    $region13: #{_lambda_.14} parent=1 // pred_fallthru
      _
    // Predicated region
    $region14: #{_lambda_.14} parent=1 // pred_check
      _
    $region15: #{_lambda_.14} parent=1 // pred_check_branch
      %46 = sbr.rel (0) target = $region17
    $region16: #{_lambda_.14} parent=1 // pred_region
      _
    $region17: #{_lambda_.14} parent=1 // pred_fallthru
      _
    // Predicated region
    $region18: #{_lambda_.14} parent=1 // pred_check
      _
    $region19: #{_lambda_.14} parent=1 // pred_check_branch
      %48 = sbr.rel (0) target = $region21
    $region20: #{_lambda_.14} parent=1 // pred_region
      %49 = dma.done [#allocation4], 192
    $region21: #{_lambda_.14} parent=1 // pred_fallthru
      _
    // Predicated region
    $region22: #{_lambda_.14} parent=1 // pred_check
      _
    $region23: #{_lambda_.14} parent=1 // pred_check_branch
      %51 = sbr.rel (0) target = $region25
    $region24: #{_lambda_.14} parent=1 // pred_region
      %52 = dma.done [#allocation7], 2304
    $region25: #{_lambda_.14} parent=1 // pred_fallthru
      _
    // Predicated region
    $region26: #{_lambda_.14} parent=1 // pred_check
      _
    $region27: #{_lambda_.14} parent=1 // pred_check_branch
      %54 = sbr.rel (0) target = $region29
    $region28: #{_lambda_.14} parent=1 // pred_region
      %55 = dma.done [#allocation7], 128
    $region29: #{_lambda_.14} parent=1 // pred_fallthru
      _
    %v57 = vld [vmem:[#allocation3] sm:$0xff]
    %v58 = vld [vmem:[#allocation3 + $0x8] sm:$0xf]
    %v59 = vld [vmem:[#allocation6] sm:$0xf]
    %v60 = vld [vmem:[#allocation6 + $0x4] sm:$0xf]
    %v61 = vld [vmem:[#allocation6 + $0x8] sm:$0xf]
    %v62 = vld [vmem:[#allocation6 + $0xc] sm:$0xf]
    %v63 = vld [vmem:[#allocation6 + $0x10] sm:$0xf]
    %v64 = vld [vmem:[#allocation6 + $0x14] sm:$0xf]
    %v65 = vld [vmem:[#allocation6 + $0x18] sm:$0xf]
    %v66 = vld [vmem:[#allocation6 + $0x1c] sm:$0xf]
    %v67 = vld [vmem:[#allocation6 + $0x20] sm:$0xf]
    %v68 = vld [vmem:[#allocation6 + $0x24] sm:$0xf]
    %v69 = vld [vmem:[#allocation6 + $0x28] sm:$0xf]
    %v70 = vld [vmem:[#allocation6 + $0x2c] sm:$0xf]
    %v71 = vld [vmem:[#allocation6 + $0x30] sm:$0xf]
    %v72 = vld [vmem:[#allocation6 + $0x34] sm:$0xf]
    %v73 = vld [vmem:[#allocation6 + $0x38] sm:$0xf]
    %v74 = vld [vmem:[#allocation6 + $0x3c] sm:$0xf]
    %v75 = vld [vmem:[#allocation6 + $0x40] sm:$0xf]
    %v76 = vld [vmem:[#allocation6 + $0x44] sm:$0xf]
    %v77 = vld [vmem:[#allocation6 + $0x48] sm:$0xf]
    %v78 = vld [vmem:[#allocation6 + $0x4c] sm:$0xf]
    %v79 = vld [vmem:[#allocation6 + $0x50] sm:$0xf]
    %v80 = vld [vmem:[#allocation6 + $0x54] sm:$0xf]
    %v81 = vld [vmem:[#allocation6 + $0x58] sm:$0xf]
    %v82 = vld [vmem:[#allocation6 + $0x5c] sm:$0xf]
    %v83 = vld [vmem:[#allocation6 + $0x60] sm:$0xf]
    %v84 = vld [vmem:[#allocation6 + $0x64] sm:$0xf]
    %v85 = vld [vmem:[#allocation6 + $0x68] sm:$0xf]
    %v86 = vld [vmem:[#allocation6 + $0x6c] sm:$0xf]
    %v87 = vld [vmem:[#allocation6 + $0x70] sm:$0xf]
    %v88 = vld [vmem:[#allocation6 + $0x74] sm:$0xf]
    %v89 = vld [vmem:[#allocation6 + $0x78] sm:$0xf]
    %v90 = vld [vmem:[#allocation6 + $0x7c] sm:$0xf]
    %v91 = vld [vmem:[#allocation6 + $0x80] sm:$0xf]
    %v92 = vld [vmem:[#allocation6 + $0x84] sm:$0xf]
    %v93 = vld [vmem:[#allocation6 + $0x88] sm:$0xf]
    %v94 = vld [vmem:[#allocation6 + $0x8c] sm:$0xf]
    %v95 = vld [vmem:[#allocation8] sm:$0xff]
    %97 = vset.pattern.permute.xlu0 0
    %98 = vperm.xlu0 %97, %v95
    %v99 = vpop.permute.xlu0 %98
    %v103 = vunpack.c.l.b16 %v57
    %v104 = vunpack.c.h.b16 %v57
    %v105 = vunpack.c.l.b16 %v58
    %v106 = vpack.c.b16 %v103, %v103
    %v107 = vpack.c.b16 %v104, %v104
    %v108 = vpack.c.b16 %v105, %v105
    %v147 = vunpack.c.l.b16 %v59
    %v148 = vunpack.c.l.b16 %v60
    %v149 = vunpack.c.l.b16 %v61
    %v150 = vunpack.c.l.b16 %v62
    %v151 = vunpack.c.l.b16 %v63
    %v152 = vunpack.c.l.b16 %v64
    %v153 = vunpack.c.l.b16 %v65
    %v154 = vunpack.c.l.b16 %v66
    %v155 = vunpack.c.l.b16 %v67
    %v156 = vunpack.c.l.b16 %v68
    %v157 = vunpack.c.l.b16 %v69
    %v158 = vunpack.c.l.b16 %v70
    %v159 = vunpack.c.l.b16 %v71
    %v160 = vunpack.c.l.b16 %v72
    %v161 = vunpack.c.l.b16 %v73
    %v162 = vunpack.c.l.b16 %v74
    %v163 = vunpack.c.l.b16 %v75
    %v164 = vunpack.c.l.b16 %v76
    %v165 = vunpack.c.l.b16 %v77
    %v166 = vunpack.c.l.b16 %v78
    %v167 = vunpack.c.l.b16 %v79
    %v168 = vunpack.c.l.b16 %v80
    %v169 = vunpack.c.l.b16 %v81
    %v170 = vunpack.c.l.b16 %v82
    %v171 = vunpack.c.l.b16 %v83
    %v172 = vunpack.c.l.b16 %v84
    %v173 = vunpack.c.l.b16 %v85
    %v174 = vunpack.c.l.b16 %v86
    %v175 = vunpack.c.l.b16 %v87
    %v176 = vunpack.c.l.b16 %v88
    %v177 = vunpack.c.l.b16 %v89
    %v178 = vunpack.c.l.b16 %v90
    %v179 = vunpack.c.l.b16 %v91
    %v180 = vunpack.c.l.b16 %v92
    %v181 = vunpack.c.l.b16 %v93
    %v182 = vunpack.c.l.b16 %v94
    %v183 = vpack.c.b16 %v148, %v147
    %v184 = vpack.c.b16 %v150, %v149
    %v185 = vpack.c.b16 %v152, %v151
    %v186 = vpack.c.b16 %v154, %v153
    %v187 = vpack.c.b16 %v156, %v155
    %v188 = vpack.c.b16 %v158, %v157
    %v189 = vpack.c.b16 %v160, %v159
    %v190 = vpack.c.b16 %v162, %v161
    %v191 = vpack.c.b16 %v164, %v163
    %v192 = vpack.c.b16 %v166, %v165
    %v193 = vpack.c.b16 %v168, %v167
    %v194 = vpack.c.b16 %v170, %v169
    %v195 = vpack.c.b16 %v172, %v171
    %v196 = vpack.c.b16 %v174, %v173
    %v197 = vpack.c.b16 %v176, %v175
    %v198 = vpack.c.b16 %v178, %v177
    %v199 = vpack.c.b16 %v180, %v179
    %v200 = vpack.c.b16 %v182, %v181
    %vm219 = vcmask 261120
    %v221 = vsel %vm219, %v108, 0
    %223 = vmatprep.subr.bf16.mxu0 0
    %224 = vmatpush1.bf16.msra.mxu0 %v183
    %225 = vmatprep.subr.bf16.mxu0 0
    %226 = vmatpush1.bf16.msra.mxu0 %v184
    %227 = vmatprep.subr.bf16.mxu0 0
    %228 = vmatpush1.bf16.msra.mxu0 %v185
    %229 = vmatprep.subr.bf16.mxu0 0
    %230 = vmatpush1.bf16.msra.mxu0 %v186
    %231 = vmatprep.subr.bf16.mxu0 0
    %232 = vmatpush1.bf16.msra.mxu0 %v187
    %233 = vmatprep.subr.bf16.mxu0 0
    %234 = vmatpush1.bf16.msra.mxu0 %v188
    %235 = vmatprep.subr.bf16.mxu0 0
    %236 = vmatpush1.bf16.msra.mxu0 %v189
    %237 = vmatprep.subr.bf16.mxu0 0
    %238 = vmatpush1.bf16.msra.mxu0 %v190
    %239 = vmatprep.subr.bf16.mxu0 0
    %240 = vmatpush1.bf16.msra.mxu0 %v191
    %241 = vmatprep.subr.bf16.mxu0 0
    %242 = vmatpush1.bf16.msra.mxu0 %v192
    %243 = vmatprep.subr.bf16.mxu0 0
    %244 = vmatpush1.bf16.msra.mxu0 %v193
    %245 = vmatprep.subr.bf16.mxu0 0
    %246 = vmatpush1.bf16.msra.mxu0 %v194
    %247 = vmatprep.subr.bf16.mxu0 0
    %248 = vmatpush1.bf16.msra.mxu0 %v195
    %249 = vmatprep.subr.bf16.mxu0 0
    %250 = vmatpush1.bf16.msra.mxu0 %v196
    %251 = vmatprep.subr.bf16.mxu0 0
    %252 = vmatpush1.bf16.msra.mxu0 %v197
    %253 = vmatprep.subr.bf16.mxu0 0
    %254 = vmatpush1.bf16.msra.mxu0 %v198
    %255 = vmatprep.mubr.bf16.mxu0 %v107
    %256 = vmatmul.mubr.bf16.gmra.mrb[0].mxu0 %v106
    %v257 = vpop.f32.mrb[0].mxu0
    %v258 = vadd.f32 %v99, %v257
    %v259 = vpop.f32.mrb[0].mxu0
    %v260 = vpop.f32.mrb[0].mxu0
    %v261 = vpop.f32.mrb[0].mxu0
    %262 = vdwg.mxu0
    %263 = vmatprep.subr.bf16.mxu0 0
    %264 = vmatpush1.bf16.msra.mxu0 %v199
    %265 = vmatprep.subr.bf16.mxu0 0
    %266 = vmatpush1.bf16.msra.mxu0 %v200
    %267 = vmatprep.subr.bf16.mxu0 0
    %268 = vmatpush1.bf16.msra.mxu0 0
    %269 = vmatprep.subr.bf16.mxu0 0
    %270 = vmatpush1.bf16.msra.mxu0 0
    %271 = vmatprep.subr.bf16.mxu0 0
    %272 = vmatpush1.bf16.msra.mxu0 0
    %273 = vmatprep.subr.bf16.mxu0 0
    %274 = vmatpush1.bf16.msra.mxu0 0
    %275 = vmatprep.subr.bf16.mxu0 0
    %276 = vmatpush1.bf16.msra.mxu0 0
    %277 = vmatprep.subr.bf16.mxu0 0
    %278 = vmatpush1.bf16.msra.mxu0 0
    %279 = vmatprep.subr.bf16.mxu0 0
    %280 = vmatpush1.bf16.msra.mxu0 0
    %281 = vmatprep.subr.bf16.mxu0 0
    %282 = vmatpush1.bf16.msra.mxu0 0
    %283 = vmatprep.subr.bf16.mxu0 0
    %284 = vmatpush1.bf16.msra.mxu0 0
    %285 = vmatprep.subr.bf16.mxu0 0
    %286 = vmatpush1.bf16.msra.mxu0 0
    %287 = vmatprep.subr.bf16.mxu0 0
    %288 = vmatpush1.bf16.msra.mxu0 0
    %289 = vmatprep.subr.bf16.mxu0 0
    %290 = vmatpush1.bf16.msra.mxu0 0
    %291 = vmatprep.subr.bf16.mxu0 0
    %292 = vmatpush1.bf16.msra.mxu0 0
    %293 = vmatprep.subr.bf16.mxu0 0
    %294 = vmatpush1.bf16.msra.mxu0 0
    %295 = vmatprep.mubr.bf16.mxu0 0
    %296 = vmatmul.mubr.bf16.gmra.mrb[0].mxu0 %v221
    %v297 = vpop.f32.mrb[0].mxu0
    %v298 = vadd.f32 %v258, %v297
    %v299 = vpop.f32.mrb[0].mxu0
    %v300 = vpop.f32.mrb[0].mxu0
    %v301 = vpop.f32.mrb[0].mxu0
    %302 = vdwg.mxu0
    %s303 = sld [smem:[#allocation2]]
    %vm304 = vcmp.ge.f32.partialorder %v298, 0.0
    %v305 = vstv %s303
    %v306 = vmul.f32 %v305, %v298
    %v307 = vsel %vm304, %v298, %v306
    %v308 = vpack.c.bf16 %v307, %v307
    %309 = vst [vmem:[#allocation9] sm:$0xf] %v308
    // Predicated region
    $region30: #{_lambda_.14} parent=1 // pred_check
      _
    $region31: #{_lambda_.14} parent=1 // pred_check_branch
      %311 = sbr.rel (0) target = $region33
    $region32: #{_lambda_.14} parent=1 // pred_region
      %s313 = ssub.s32 64, 64
      %314 = vsyncadd [#allocation5], %s313
      %s316 = sshll.u32 [#allocation9], 4
      %s317 = int_to_ptr.vmem [resolvable:$true] %s316
      %319 = dma.vmem_to_hbm [thread:$0]  %s317, 64, %s4, [#allocation5]
    $region33: #{_lambda_.14} parent=1 // pred_fallthru
      _
    // Predicated region
    $region34: #{_lambda_.14} parent=1 // pred_check
      _
    $region35: #{_lambda_.14} parent=1 // pred_check_branch
      %321 = sbr.rel (0) target = $region37
    $region36: #{_lambda_.14} parent=1 // pred_region
      %322 = dma.done [#allocation5], 64
    $region37: #{_lambda_.14} parent=1 // pred_fallthru
      _
    %323 = vsyncpa [#allocation4], 1
    %324 = vsyncpa [#allocation7], 1
    %325 = vsyncpa [#allocation5], 1

// kernel: _lambda_.17
$region0: #{_lambda_.17}
  #allocation0 [shape = 'u32[]', space=smem, size = 0x4, offset = 0x4, fixed_abs, tag = 'smem constant byte address 0x4 - core index']
  #allocation1 [shape = 'u32[144,128]{1,0:T(1,128)}', space=vmem, size = 0x12000, scoped, tag = 'internal scratch']
  #allocation2 [shape = 'f32[1]{0:T(128)S(6)}', space=smem, size = 0x200, scoped, tag = 'scoped memory for _lambda_.17']
  %s0 = inlined_call_operand.hbm [shape: bf16[8,8], index: 0, kind: input, shape index: {}]
  %s1 = inlined_call_operand.hbm [shape: bf16[8,8], index: 1, kind: input, shape index: {}]
  %s2 = inlined_call_operand.hbm [shape: bf16[8,512], index: 2, kind: input, shape index: {}]
  %s3 = inlined_call_operand.hbm [shape: bf16[8,512], index: 3, kind: input, shape index: {}]
  %s4 = inlined_call_operand.hbm [shape: f32[8,1], index: 4, kind: input, shape index: {}]
  %s5 = inlined_call_operand.<no memory space> [shape: f32[1], index: 5, kind: input, shape index: {}]
  %s6 = inlined_call_operand.hbm [shape: bf16[8,512], index: 6, kind: output, shape index: {}]
  %s7 = sld [smem:[#allocation0]]
  $region77: #{_lambda_.17} parent=0
    _
  %s9 = ssub.s32 1, %s7
  %s10 = scalar_select 0, %s9, %s7
  %11 = sst [smem:[#allocation2]] %s5
  $region1: #{_lambda_.17} parent=0
    #allocation3 [shape = 'u8[2048]{0}', space=vmem, size = 0x800, scoped, tag = 'input window, operand 0, single buffered']
    #allocation4 [shape = 's32[2]{0}', space=sflag, size = 0x8, scoped, tag = 'scoped memory for _lambda_.17']
    #allocation5 [shape = 's32[2]{0}', space=sflag, size = 0x8, scoped, tag = 'scoped memory for _lambda_.17']
    #allocation6 [shape = 'u8[2048]{0}', space=vmem, size = 0x800, scoped, tag = 'input window, operand 1, single buffered']
    #allocation7 [shape = 's32[1]{0}', space=sflag, size = 0x4, scoped, tag = 'scoped memory for _lambda_.17']
    #allocation8 [shape = 'u8[8192]{0}', space=vmem, size = 0x2000, scoped, tag = 'input window, operand 2']
    #allocation9 [shape = 'u8[8192]{0}', space=vmem, size = 0x2000, scoped, tag = 'input window, operand 3']
    #allocation10 [shape = 'u8[4096]{0}', space=vmem, size = 0x1000, scoped, tag = 'input window, operand 4, single buffered']
    #allocation11 [shape = 'u8[8192]{0}', space=vmem, size = 0x2000, scoped, tag = 'output window, operand 0']
    %12 = vsyncpa [#allocation4], 0
    %13 = vsyncpa [#allocation7], 0
    %14 = vsyncpa [#allocation5], 0
    %s15 = scalar_lea.sflag [#allocation5], 1
    %16 = vsyncpa %s15, 0
    loop: start=0, step=1, limit=4
    $region2: #{_lambda_.17} parent=1 // loop_pre_header
      _
    $region3: #{_lambda_.17} parent=1 // loop_header
      %s18 = sphi 0, %s22
      %p19 = scmp.ge.s32.totalorder %s18, 4
      %s26 = sphi 0, %s26
      %s28 = sphi 0, %s26
      %s29 = sphi 0, %s28
      %s43 = sphi 0, %s29
      %s47 = sphi 0, %s47
      %s49 = sphi 0, %s47
      %s50 = sphi 0, %s49
      %s64 = sphi 0, %s50
      %s70 = sphi 0, %s72
      %s73 = sphi 0, %s70
      %s74 = sphi 0, %s73
      %s90 = sphi 0, %s74
      %s96 = sphi 0, %s98
      %s99 = sphi 0, %s96
      %s100 = sphi 0, %s99
      %s116 = sphi 0, %s100
      %s120 = sphi 0, %s120
      %s122 = sphi 0, %s120
      %s123 = sphi 0, %s122
      %s137 = sphi 0, %s123
      %s141 = sphi 0, %s141
      %s143 = sphi 0, %s141
      %s144 = sphi 0, %s143
      %s158 = sphi 0, %s144
      %s164 = sphi 0, %s166
      %s167 = sphi 0, %s164
      %s168 = sphi 0, %s167
      %s184 = sphi 0, %s168
    $region4: #{_lambda_.17} parent=1 // loop_header_branch
      %21 = sbr.rel (%p19) target = $region8
    $region5: #{_lambda_.17} parent=1 // loop_body
      %s23 = ssub.s32 %s18, 1
      %s24 = ssub.s32 %s18, 2
      %s25 = sadd.s32 %s18, 1
      %s27 = sadd.s32 %s26, 1
      %p30 = scmp.eq.s32.totalorder %s18, 1
      %p31 = scmp.ne.s32.totalorder %s26, %s28
      %p32 = scmp.eq.s32.totalorder %s18, 0
      %p33 = por %p31, %p32
      %p34 = scmp.ne.s32.totalorder %s26, %s28
      %p35 = scmp.eq.s32.totalorder %s23, 1
      %p36 = por %p34, %p35
      %p37 = scmp.ne.s32.totalorder %s28, %s29
      %p38 = scmp.eq.s32.totalorder %s23, 0
      %p39 = por %p37, %p38
      %p40 = scmp.ne.s32.totalorder %s28, %s29
      %p41 = scmp.eq.s32.totalorder %s24, 1
      %p42 = por %p40, %p41
      %p44 = scmp.ne.s32.totalorder %s29, %s43
      %p45 = scmp.eq.s32.totalorder %s24, 0
      %p46 = por %p44, %p45
      %s48 = sadd.s32 %s47, 1
      %p51 = scmp.eq.s32.totalorder %s18, 1
      %p52 = scmp.ne.s32.totalorder %s47, %s49
      %p53 = scmp.eq.s32.totalorder %s18, 0
      %p54 = por %p52, %p53
      %p55 = scmp.ne.s32.totalorder %s47, %s49
      %p56 = scmp.eq.s32.totalorder %s23, 1
      %p57 = por %p55, %p56
      %p58 = scmp.ne.s32.totalorder %s49, %s50
      %p59 = scmp.eq.s32.totalorder %s23, 0
      %p60 = por %p58, %p59
      %p61 = scmp.ne.s32.totalorder %s49, %s50
      %p62 = scmp.eq.s32.totalorder %s24, 1
      %p63 = por %p61, %p62
      %p65 = scmp.ne.s32.totalorder %s50, %s64
      %p66 = scmp.eq.s32.totalorder %s24, 0
      %p67 = por %p65, %p66
      %s68 = ssub.s32 %s18, %s25
      %p69 = scmp.eq.s32.totalorder %s68, 0
      %s71 = sadd.s32 %s70, 1
      %s72 = scalar_select %p69, %s70, %s71
      %p75 = pneg %p69
      %p76 = scmp.eq.s32.totalorder %s18, 1
      %p77 = por %p75, %p76
      %p78 = scmp.ne.s32.totalorder %s70, %s73
      %p79 = scmp.eq.s32.totalorder %s18, 0
      %p80 = por %p78, %p79
      %p81 = scmp.ne.s32.totalorder %s70, %s73
      %p82 = scmp.eq.s32.totalorder %s23, 1
      %p83 = por %p81, %p82
      %p84 = scmp.ne.s32.totalorder %s73, %s74
      %p85 = scmp.eq.s32.totalorder %s23, 0
      %p86 = por %p84, %p85
      %p87 = scmp.ne.s32.totalorder %s73, %s74
      %p88 = scmp.eq.s32.totalorder %s24, 1
      %p89 = por %p87, %p88
      %p91 = scmp.ne.s32.totalorder %s74, %s90
      %p92 = scmp.eq.s32.totalorder %s24, 0
      %p93 = por %p91, %p92
      %s94 = ssub.s32 %s18, %s25
      %p95 = scmp.eq.s32.totalorder %s94, 0
      %s97 = sadd.s32 %s96, 1
      %s98 = scalar_select %p95, %s96, %s97
      %p101 = pneg %p95
      %p102 = scmp.eq.s32.totalorder %s18, 1
      %p103 = por %p101, %p102
      %p104 = scmp.ne.s32.totalorder %s96, %s99
      %p105 = scmp.eq.s32.totalorder %s18, 0
      %p106 = por %p104, %p105
      %p107 = scmp.ne.s32.totalorder %s96, %s99
      %p108 = scmp.eq.s32.totalorder %s23, 1
      %p109 = por %p107, %p108
      %p110 = scmp.ne.s32.totalorder %s99, %s100
      %p111 = scmp.eq.s32.totalorder %s23, 0
      %p112 = por %p110, %p111
      %p113 = scmp.ne.s32.totalorder %s99, %s100
      %p114 = scmp.eq.s32.totalorder %s24, 1
      %p115 = por %p113, %p114
      %p117 = scmp.ne.s32.totalorder %s100, %s116
      %p118 = scmp.eq.s32.totalorder %s24, 0
      %p119 = por %p117, %p118
      %s121 = sadd.s32 %s120, 1
      %p124 = scmp.eq.s32.totalorder %s18, 1
      %p125 = scmp.ne.s32.totalorder %s120, %s122
      %p126 = scmp.eq.s32.totalorder %s18, 0
      %p127 = por %p125, %p126
      %p128 = scmp.ne.s32.totalorder %s120, %s122
      %p129 = scmp.eq.s32.totalorder %s23, 1
      %p130 = por %p128, %p129
      %p131 = scmp.ne.s32.totalorder %s122, %s123
      %p132 = scmp.eq.s32.totalorder %s23, 0
      %p133 = por %p131, %p132
      %p134 = scmp.ne.s32.totalorder %s122, %s123
      %p135 = scmp.eq.s32.totalorder %s24, 1
      %p136 = por %p134, %p135
      %p138 = scmp.ne.s32.totalorder %s123, %s137
      %p139 = scmp.eq.s32.totalorder %s24, 0
      %p140 = por %p138, %p139
      %s142 = sadd.s32 %s141, 1
      %p145 = scmp.eq.s32.totalorder %s18, 1
      %p146 = scmp.ne.s32.totalorder %s141, %s143
      %p147 = scmp.eq.s32.totalorder %s18, 0
      %p148 = por %p146, %p147
      %p149 = scmp.ne.s32.totalorder %s141, %s143
      %p150 = scmp.eq.s32.totalorder %s23, 1
      %p151 = por %p149, %p150
      %p152 = scmp.ne.s32.totalorder %s143, %s144
      %p153 = scmp.eq.s32.totalorder %s23, 0
      %p154 = por %p152, %p153
      %p155 = scmp.ne.s32.totalorder %s143, %s144
      %p156 = scmp.eq.s32.totalorder %s24, 1
      %p157 = por %p155, %p156
      %p159 = scmp.ne.s32.totalorder %s144, %s158
      %p160 = scmp.eq.s32.totalorder %s24, 0
      %p161 = por %p159, %p160
      %s162 = ssub.s32 %s18, %s25
      %p163 = scmp.eq.s32.totalorder %s162, 0
      %s165 = sadd.s32 %s164, 1
      %s166 = scalar_select %p163, %s164, %s165
      %p169 = pneg %p163
      %p170 = scmp.eq.s32.totalorder %s18, 1
      %p171 = por %p169, %p170
      %p172 = scmp.ne.s32.totalorder %s164, %s167
      %p173 = scmp.eq.s32.totalorder %s18, 0
      %p174 = por %p172, %p173
      %p175 = scmp.ne.s32.totalorder %s164, %s167
      %p176 = scmp.eq.s32.totalorder %s23, 1
      %p177 = por %p175, %p176
      %p178 = scmp.ne.s32.totalorder %s167, %s168
      %p179 = scmp.eq.s32.totalorder %s23, 0
      %p180 = por %p178, %p179
      %p181 = scmp.ne.s32.totalorder %s167, %s168
      %p182 = scmp.eq.s32.totalorder %s24, 1
      %p183 = por %p181, %p182
      %p185 = scmp.ne.s32.totalorder %s168, %s184
      %p186 = scmp.eq.s32.totalorder %s24, 0
      %p187 = por %p185, %p186
      %p188 = scmp.le.s32.totalorder 1, %s18
      %p189 = scmp.lt.s32.totalorder %s18, 3
      %p190 = pnand %p188, %p189
      %p191 = pneg %p190
      // Predicated region
      $region9: #{_lambda_.17} parent=5 // pred_check
        _
      $region10: #{_lambda_.17} parent=5 // pred_check_branch
        %193 = sbr.rel (%p190) target = $region12
      $region11: #{_lambda_.17} parent=5 // pred_region
        %s194 = ssub.s32 %s18, 1
        // Predicated region
        $region13: #{_lambda_.17} parent=11 // pred_check
          %p195 = pneg %p39
        $region14: #{_lambda_.17} parent=11 // pred_check_branch
          %197 = sbr.rel (%p195) target = $region16
        $region15: #{_lambda_.17} parent=11 // pred_region
          %s199 = ssub.s32 64, 64
          %200 = vsyncadd [#allocation4], %s199
          %s202 = sshll.u32 [#allocation3], 4
          %s203 = int_to_ptr.vmem [resolvable:$true] %s202
          %205 = dma.hbm_to_vmem [thread:$0]  %s0, 64, %s203, [#allocation4]
        $region16: #{_lambda_.17} parent=11 // pred_fallthru
          _
        // Predicated region
        $region17: #{_lambda_.17} parent=11 // pred_check
          %p206 = pneg %p60
        $region18: #{_lambda_.17} parent=11 // pred_check_branch
          %208 = sbr.rel (%p206) target = $region20
        $region19: #{_lambda_.17} parent=11 // pred_region
          %s210 = ssub.s32 64, 64
          %211 = vsyncadd [#allocation7], %s210
          %s213 = sshll.u32 [#allocation6], 4
          %s214 = int_to_ptr.vmem [resolvable:$true] %s213
          %216 = dma.hbm_to_vmem [thread:$0]  %s1, 64, %s214, [#allocation7]
        $region20: #{_lambda_.17} parent=11 // pred_fallthru
          _
        // Predicated region
        $region21: #{_lambda_.17} parent=11 // pred_check
          %p217 = pneg %p133
        $region22: #{_lambda_.17} parent=11 // pred_check_branch
          %219 = sbr.rel (%p217) target = $region24
        $region23: #{_lambda_.17} parent=11 // pred_region
          %s221 = ssub.s32 128, 128
          %222 = vsyncadd [#allocation7], %s221
          %s224 = sshll.u32 [#allocation10], 4
          %s225 = int_to_ptr.vmem [resolvable:$true] %s224
          %227 = dma.hbm_to_vmem [thread:$0]  %s4, 128, %s225, [#allocation7]
        $region24: #{_lambda_.17} parent=11 // pred_fallthru
          _
        // Predicated region
        $region25: #{_lambda_.17} parent=11 // pred_check
          %p228 = pneg %p154
        $region26: #{_lambda_.17} parent=11 // pred_check_branch
          %230 = sbr.rel (%p228) target = $region28
        $region27: #{_lambda_.17} parent=11 // pred_region
          _
        $region28: #{_lambda_.17} parent=11 // pred_fallthru
          _
      $region12: #{_lambda_.17} parent=5 // pred_fallthru
        _
      %p231 = scmp.lt.s32.totalorder %s18, 2
      // Predicated region
      $region29: #{_lambda_.17} parent=5 // pred_check
        %p232 = pneg %p231
      $region30: #{_lambda_.17} parent=5 // pred_check_branch
        %234 = sbr.rel (%p232) target = $region32
      $region31: #{_lambda_.17} parent=5 // pred_region
        // Predicated region
        $region33: #{_lambda_.17} parent=31 // pred_check
          %p235 = pneg %p80
        $region34: #{_lambda_.17} parent=31 // pred_check_branch
          %237 = sbr.rel (%p235) target = $region36
        $region35: #{_lambda_.17} parent=31 // pred_region
          %s238 = sand.u32 %s18, 1
          %s239 = scalar_lea.sflag [#allocation4], %s238
          %s240 = sand.u32 %s70, 1
          %s241 = smul.addr %s240, 8
          %s242 = scalar_lea.vmem [#allocation8], %s241
          %s243 = smul.u32 2, %s18
          %s245 = ssub.s32 128, 128
          %246 = vsyncadd %s239, %s245
          %s247 = smul.addr %s243, 64
          %s248 = scalar_lea.hbm %s2, %s247
          %s250 = sshll.u32 %s242, 4
          %s251 = int_to_ptr.vmem [resolvable:$true] %s250
          %253 = dma.hbm_to_vmem [thread:$0]  %s248, 128, %s251, %s239
        $region36: #{_lambda_.17} parent=31 // pred_fallthru
          _
        // Predicated region
        $region37: #{_lambda_.17} parent=31 // pred_check
          %p254 = pneg %p106
        $region38: #{_lambda_.17} parent=31 // pred_check_branch
          %256 = sbr.rel (%p254) target = $region40
        $region39: #{_lambda_.17} parent=31 // pred_region
          %s257 = sand.u32 %s18, 1
          %s258 = scalar_lea.sflag [#allocation4], %s257
          %s259 = sand.u32 %s96, 1
          %s260 = smul.addr %s259, 8
          %s261 = scalar_lea.vmem [#allocation9], %s260
          %s262 = smul.u32 2, %s18
          %s264 = ssub.s32 128, 128
          %265 = vsyncadd %s258, %s264
          %s266 = smul.addr %s262, 64
          %s267 = scalar_lea.hbm %s3, %s266
          %s269 = sshll.u32 %s261, 4
          %s270 = int_to_ptr.vmem [resolvable:$true] %s269
          %272 = dma.hbm_to_vmem [thread:$0]  %s267, 128, %s270, %s258
        $region40: #{_lambda_.17} parent=31 // pred_fallthru
          _
      $region32: #{_lambda_.17} parent=5 // pred_fallthru
        _
      %p273 = scmp.le.s32.totalorder 1, %s18
      %p274 = scmp.lt.s32.totalorder %s18, 3
      %p275 = pnand %p273, %p274
      %p276 = pneg %p275
      // Predicated region
      $region41: #{_lambda_.17} parent=5 // pred_check
        _
      $region42: #{_lambda_.17} parent=5 // pred_check_branch
        %278 = sbr.rel (%p275) target = $region44
      $region43: #{_lambda_.17} parent=5 // pred_region
        %s279 = ssub.s32 %s18, 1
        // Predicated region
        $region45: #{_lambda_.17} parent=43 // pred_check
          %p280 = pneg %p39
        $region46: #{_lambda_.17} parent=43 // pred_check_branch
          %282 = sbr.rel (%p280) target = $region48
        $region47: #{_lambda_.17} parent=43 // pred_region
          %283 = dma.done [#allocation4], 64
        $region48: #{_lambda_.17} parent=43 // pred_fallthru
          _
        // Predicated region
        $region49: #{_lambda_.17} parent=43 // pred_check
          %p284 = pneg %p60
        $region50: #{_lambda_.17} parent=43 // pred_check_branch
          %286 = sbr.rel (%p284) target = $region52
        $region51: #{_lambda_.17} parent=43 // pred_region
          %287 = dma.done [#allocation7], 64
        $region52: #{_lambda_.17} parent=43 // pred_fallthru
          _
        %s288 = sand.u32 %s23, 1
        %s289 = scalar_lea.sflag [#allocation4], %s288
        %s290 = sand.u32 %s73, 1
        %s291 = smul.addr %s290, 8
        %s292 = scalar_lea.vmem [#allocation8], %s291
        // Predicated region
        $region53: #{_lambda_.17} parent=43 // pred_check
          %p293 = pneg %p86
        $region54: #{_lambda_.17} parent=43 // pred_check_branch
          %295 = sbr.rel (%p293) target = $region56
        $region55: #{_lambda_.17} parent=43 // pred_region
          %296 = dma.done %s289, 128
        $region56: #{_lambda_.17} parent=43 // pred_fallthru
          _
        %s297 = sand.u32 %s23, 1
        %s298 = scalar_lea.sflag [#allocation4], %s297
        %s299 = sand.u32 %s99, 1
        %s300 = smul.addr %s299, 8
        %s301 = scalar_lea.vmem [#allocation9], %s300
        // Predicated region
        $region57: #{_lambda_.17} parent=43 // pred_check
          %p302 = pneg %p112
        $region58: #{_lambda_.17} parent=43 // pred_check_branch
          %304 = sbr.rel (%p302) target = $region60
        $region59: #{_lambda_.17} parent=43 // pred_region
          %305 = dma.done %s298, 128
        $region60: #{_lambda_.17} parent=43 // pred_fallthru
          _
        // Predicated region
        $region61: #{_lambda_.17} parent=43 // pred_check
          %p306 = pneg %p133
        $region62: #{_lambda_.17} parent=43 // pred_check_branch
          %308 = sbr.rel (%p306) target = $region64
        $region63: #{_lambda_.17} parent=43 // pred_region
          %309 = dma.done [#allocation7], 128
        $region64: #{_lambda_.17} parent=43 // pred_fallthru
          _
        %p310 = pneg %p39
        %p311 = pneg %p36
        %p312 = pneg %p60
        %p313 = pneg %p57
        %s314 = sand.u32 %s23, 1
        %s315 = scalar_lea.sflag [#allocation4], %s314
        %s316 = sand.u32 %s73, 1
        %s317 = smul.addr %s316, 8
        %s318 = scalar_lea.vmem [#allocation8], %s317
        %p319 = pneg %p86
        %p320 = pneg %p83
        %s321 = sand.u32 %s23, 1
        %s322 = scalar_lea.sflag [#allocation4], %s321
        %s323 = sand.u32 %s99, 1
        %s324 = smul.addr %s323, 8
        %s325 = scalar_lea.vmem [#allocation9], %s324
        %p326 = pneg %p112
        %p327 = pneg %p109
        %p328 = pneg %p133
        %p329 = pneg %p130
        %p330 = pneg %p154
        %p331 = pneg %p151
        %p332 = pneg %p180
        %p333 = pneg %p177
        %s334 = sand.u32 %s167, 1
        %s335 = scalar_lea.sflag [#allocation5], %s334
        %s336 = sand.u32 %s167, 1
        %s337 = smul.addr %s336, 8
        %s338 = scalar_lea.vmem [#allocation11], %s337
        %s339 = smul.u32 2, %s23
        %s340 = smul.u32 2, %s23
        %s341 = smul.u32 2, %s23
        %v343 = vld [vmem:[#allocation3] sm:$0xf]
        %v344 = vld [vmem:[%s292] sm:$0xff]
        %v345 = vld [vmem:[#allocation6] sm:$0xf]
        %v346 = vld [vmem:[%s301] sm:$0xff]
        %v348 = vunpack.c.l.b16 %v346
        %v349 = vunpack.c.h.b16 %v346
        %v350 = vpack.c.b16 %v348, %v348
        %v351 = vpack.c.b16 %v349, %v349
        %vm352 = vcmask 64512
        %v354 = vsel %vm352, %v345, 0
        %vm356 = vcmask 1043456
        %v358 = vsel %vm356, %v350, 0
        %v361 = vsel %vm356, %v351, 0
        %363 = vmatprep.subr.bf16.mxu0 %v361
        %364 = vmatpush1.bf16.msra.mxu0 %v358
        %365 = vmatprep.subr.bf16.mxu0 0
        %366 = vmatpush1.bf16.msra.mxu0 0
        %367 = vmatprep.subr.bf16.mxu0 0
        %368 = vmatpush1.bf16.msra.mxu0 0
        %369 = vmatprep.subr.bf16.mxu0 0
        %370 = vmatpush1.bf16.msra.mxu0 0
        %371 = vmatprep.subr.bf16.mxu0 0
        %372 = vmatpush1.bf16.msra.mxu0 0
        %373 = vmatprep.subr.bf16.mxu0 0
        %374 = vmatpush1.bf16.msra.mxu0 0
        %375 = vmatprep.subr.bf16.mxu0 0
        %376 = vmatpush1.bf16.msra.mxu0 0
        %377 = vmatprep.subr.bf16.mxu0 0
        %378 = vmatpush1.bf16.msra.mxu0 0
        %379 = vmatprep.subr.bf16.mxu0 0
        %380 = vmatpush1.bf16.msra.mxu0 0
        %381 = vmatprep.subr.bf16.mxu0 0
        %382 = vmatpush1.bf16.msra.mxu0 0
        %383 = vmatprep.subr.bf16.mxu0 0
        %384 = vmatpush1.bf16.msra.mxu0 0
        %385 = vmatprep.subr.bf16.mxu0 0
        %386 = vmatpush1.bf16.msra.mxu0 0
        %387 = vmatprep.subr.bf16.mxu0 0
        %388 = vmatpush1.bf16.msra.mxu0 0
        %389 = vmatprep.subr.bf16.mxu0 0
        %390 = vmatpush1.bf16.msra.mxu0 0
        %391 = vmatprep.subr.bf16.mxu0 0
        %392 = vmatpush1.bf16.msra.mxu0 0
        %393 = vmatprep.subr.bf16.mxu0 0
        %394 = vmatpush1.bf16.msra.mxu0 0
        %395 = vmatprep.mubr.bf16.mxu0 0
        %396 = vmatmul.mubr.bf16.gmra.mrb[0].mxu0 %v354
        %v397 = vpop.f32.mrb[0].mxu0
        %v398 = vadd.f32 0.0, %v397
        %v399 = vpop.f32.mrb[0].mxu0
        %v400 = vadd.f32 0.0, %v399
        %v401 = vpop.f32.mrb[0].mxu0
        %v402 = vpop.f32.mrb[0].mxu0
        %403 = vdwg.mxu0
        %v405 = vunpack.c.l.b16 %v344
        %v406 = vunpack.c.h.b16 %v344
        %v407 = vpack.c.b16 %v405, %v405
        %v408 = vpack.c.b16 %v406, %v406
        %v410 = vsel %vm352, %v343, 0
        %v413 = vsel %vm356, %v407, 0
        %v416 = vsel %vm356, %v408, 0
        %418 = vmatprep.subr.bf16.mxu0 %v416
        %419 = vmatpush1.bf16.msra.mxu0 %v413
        %420 = vmatprep.subr.bf16.mxu0 0
        %421 = vmatpush1.bf16.msra.mxu0 0
        %422 = vmatprep.subr.bf16.mxu0 0
        %423 = vmatpush1.bf16.msra.mxu0 0
        %424 = vmatprep.subr.bf16.mxu0 0
        %425 = vmatpush1.bf16.msra.mxu0 0
        %426 = vmatprep.subr.bf16.mxu0 0
        %427 = vmatpush1.bf16.msra.mxu0 0
        %428 = vmatprep.subr.bf16.mxu0 0
        %429 = vmatpush1.bf16.msra.mxu0 0
        %430 = vmatprep.subr.bf16.mxu0 0
        %431 = vmatpush1.bf16.msra.mxu0 0
        %432 = vmatprep.subr.bf16.mxu0 0
        %433 = vmatpush1.bf16.msra.mxu0 0
        %434 = vmatprep.subr.bf16.mxu0 0
        %435 = vmatpush1.bf16.msra.mxu0 0
        %436 = vmatprep.subr.bf16.mxu0 0
        %437 = vmatpush1.bf16.msra.mxu0 0
        %438 = vmatprep.subr.bf16.mxu0 0
        %439 = vmatpush1.bf16.msra.mxu0 0
        %440 = vmatprep.subr.bf16.mxu0 0
        %441 = vmatpush1.bf16.msra.mxu0 0
        %442 = vmatprep.subr.bf16.mxu0 0
        %443 = vmatpush1.bf16.msra.mxu0 0
        %444 = vmatprep.subr.bf16.mxu0 0
        %445 = vmatpush1.bf16.msra.mxu0 0
        %446 = vmatprep.subr.bf16.mxu0 0
        %447 = vmatpush1.bf16.msra.mxu0 0
        %448 = vmatprep.subr.bf16.mxu0 0
        %449 = vmatpush1.bf16.msra.mxu0 0
        %450 = vmatprep.mubr.bf16.mxu0 0
        %451 = vmatmul.mubr.bf16.gmra.mrb[0].mxu0 %v410
        %v452 = vpop.f32.mrb[0].mxu0
        %v453 = vadd.f32 %v398, %v452
        %v454 = vpop.f32.mrb[0].mxu0
        %v455 = vadd.f32 %v400, %v454
        %v456 = vpop.f32.mrb[0].mxu0
        %v457 = vpop.f32.mrb[0].mxu0
        %458 = vdwg.mxu0
        %v459 = vld [vmem:[#allocation10] sm:$0xff]
        %461 = vset.pattern.permute.xlu0 0
        %462 = vperm.xlu0 %461, %v459
        %v463 = vpop.permute.xlu0 %462
        %v465 = vadd.f32 %v453, %v463
        %v466 = vadd.f32 %v455, %v463
        %s467 = sld [smem:[#allocation2]]
        %vm468 = vcmp.ge.f32.partialorder %v465, 0.0
        %vm469 = vcmp.ge.f32.partialorder %v466, 0.0
        %v470 = vstv %s467
        %v471 = vmul.f32 %v470, %v465
        %v472 = vmul.f32 %v470, %v466
        %v473 = vsel %vm468, %v465, %v471
        %v474 = vsel %vm469, %v466, %v472
        %v475 = vpack.c.bf16 %v473, %v473
        %v476 = vpack.c.bf16 %v474, %v474
        %v479 = vunpack.c.l.b16 %v475
        %v480 = vunpack.c.l.b16 %v476
        %v481 = vpack.c.b16 %v480, %v479
        %483 = vst [vmem:[%s338] sm:$0xff] %v481
        %s484 = sand.u32 %s167, 1
        %s485 = scalar_lea.sflag [#allocation5], %s484
        %s486 = sand.u32 %s167, 1
        %s487 = smul.addr %s486, 8
        %s488 = scalar_lea.vmem [#allocation11], %s487
        // Predicated region
        $region65: #{_lambda_.17} parent=43 // pred_check
          %p489 = pneg %p177
        $region66: #{_lambda_.17} parent=43 // pred_check_branch
          %491 = sbr.rel (%p489) target = $region68
        $region67: #{_lambda_.17} parent=43 // pred_region
          %s492 = smul.u32 2, %s23
          %s494 = ssub.s32 128, 128
          %495 = vsyncadd %s485, %s494
          %s496 = smul.addr %s492, 64
          %s497 = scalar_lea.hbm %s6, %s496
          %s499 = sshll.u32 %s488, 4
          %s500 = int_to_ptr.vmem [resolvable:$true] %s499
          %502 = dma.vmem_to_hbm [thread:$0]  %s500, 128, %s497, %s485
        $region68: #{_lambda_.17} parent=43 // pred_fallthru
          _
      $region44: #{_lambda_.17} parent=5 // pred_fallthru
        _
      %p503 = scmp.le.s32.totalorder 2, %s18
      // Predicated region
      $region69: #{_lambda_.17} parent=5 // pred_check
        %p504 = pneg %p503
      $region70: #{_lambda_.17} parent=5 // pred_check_branch
        %506 = sbr.rel (%p504) target = $region72
      $region71: #{_lambda_.17} parent=5 // pred_region
        %s507 = ssub.s32 %s18, 2
        // Predicated region
        $region73: #{_lambda_.17} parent=71 // pred_check
          %p508 = pneg %p183
        $region74: #{_lambda_.17} parent=71 // pred_check_branch
          %510 = sbr.rel (%p508) target = $region76
        $region75: #{_lambda_.17} parent=71 // pred_region
          %s511 = sand.u32 %s168, 1
          %s512 = scalar_lea.sflag [#allocation5], %s511
          %s513 = sand.u32 %s168, 1
          %s514 = smul.addr %s513, 8
          %s515 = scalar_lea.vmem [#allocation11], %s514
          %516 = dma.done %s512, 128
        $region76: #{_lambda_.17} parent=71 // pred_fallthru
          _
      $region72: #{_lambda_.17} parent=5 // pred_fallthru
        _
    $region6: #{_lambda_.17} parent=1 // loop_footer
      %s22 = sadd.s32 1, %s18
    $region7: #{_lambda_.17} parent=1 // loop_footer_branch
      %17 = sbr.rel target = $region3
    $region8: #{_lambda_.17} parent=1 // loop_exit
      _
    %517 = vsyncpa [#allocation4], 1
    %s518 = scalar_lea.sflag [#allocation4], 1
    %519 = vsyncpa %s518, 1
    %520 = vsyncpa [#allocation7], 1
    %521 = vsyncpa [#allocation5], 1
    %s522 = scalar_lea.sflag [#allocation5], 1
    %523 = vsyncpa %s522, 1

// kernel: _lambda_.21
$region0: #{_lambda_.21}
  #allocation0 [shape = 'u32[]', space=smem, size = 0x4, offset = 0x4, fixed_abs, tag = 'smem constant byte address 0x4 - core index']
  #allocation1 [shape = 'u32[144,128]{1,0:T(1,128)}', space=vmem, size = 0x12000, scoped, tag = 'internal scratch']
  #allocation2 [shape = 'f32[1]{0:T(128)S(6)}', space=smem, size = 0x200, scoped, tag = 'scoped memory for _lambda_.21']
  %s0 = inlined_call_operand.hbm [shape: bf16[8,8], index: 0, kind: input, shape index: {}]
  %s1 = inlined_call_operand.hbm [shape: bf16[8,8], index: 1, kind: input, shape index: {}]
  %s2 = inlined_call_operand.hbm [shape: bf16[8,8], index: 2, kind: input, shape index: {}]
  %s3 = inlined_call_operand.hbm [shape: bf16[8,512], index: 3, kind: input, shape index: {}]
  %s4 = inlined_call_operand.hbm [shape: bf16[8,512], index: 4, kind: input, shape index: {}]
  %s5 = inlined_call_operand.hbm [shape: bf16[8,512], index: 5, kind: input, shape index: {}]
  %s6 = inlined_call_operand.hbm [shape: f32[8,1], index: 6, kind: input, shape index: {}]
  %s7 = inlined_call_operand.<no memory space> [shape: f32[1], index: 7, kind: input, shape index: {}]
  %s8 = inlined_call_operand.hbm [shape: bf16[8,512], index: 8, kind: output, shape index: {}]
  %s9 = sld [smem:[#allocation0]]
  $region93: #{_lambda_.21} parent=0
    _
  %s11 = ssub.s32 1, %s9
  %s12 = scalar_select 0, %s11, %s9
  %13 = sst [smem:[#allocation2]] %s7
  $region1: #{_lambda_.21} parent=0
    #allocation3 [shape = 'u8[2048]{0}', space=vmem, size = 0x800, scoped, tag = 'input window, operand 0, single buffered']
    #allocation4 [shape = 's32[2]{0}', space=sflag, size = 0x8, scoped, tag = 'scoped memory for _lambda_.21']
    #allocation5 [shape = 's32[2]{0}', space=sflag, size = 0x8, scoped, tag = 'scoped memory for _lambda_.21']
    #allocation6 [shape = 'u8[2048]{0}', space=vmem, size = 0x800, scoped, tag = 'input window, operand 1, single buffered']
    #allocation7 [shape = 's32[1]{0}', space=sflag, size = 0x4, scoped, tag = 'scoped memory for _lambda_.21']
    #allocation8 [shape = 'u8[2048]{0}', space=vmem, size = 0x800, scoped, tag = 'input window, operand 2, single buffered']
    #allocation9 [shape = 'u8[8192]{0}', space=vmem, size = 0x2000, scoped, tag = 'input window, operand 3']
    #allocation10 [shape = 's32[2]{0}', space=sflag, size = 0x8, scoped, tag = 'scoped memory for _lambda_.21']
    #allocation11 [shape = 'u8[8192]{0}', space=vmem, size = 0x2000, scoped, tag = 'input window, operand 4']
    #allocation12 [shape = 'u8[8192]{0}', space=vmem, size = 0x2000, scoped, tag = 'input window, operand 5']
    #allocation13 [shape = 's32[2]{0}', space=sflag, size = 0x8, scoped, tag = 'scoped memory for _lambda_.21']
    #allocation14 [shape = 'u8[4096]{0}', space=vmem, size = 0x1000, scoped, tag = 'input window, operand 6, single buffered']
    #allocation15 [shape = 'u8[8192]{0}', space=vmem, size = 0x2000, scoped, tag = 'output window, operand 0']
    %14 = vsyncpa [#allocation4], 0
    %15 = vsyncpa [#allocation7], 0
    %16 = vsyncpa [#allocation10], 0
    %s17 = scalar_lea.sflag [#allocation10], 1
    %18 = vsyncpa %s17, 0
    %19 = vsyncpa [#allocation13], 0
    %s20 = scalar_lea.sflag [#allocation13], 1
    %21 = vsyncpa %s20, 0
    %22 = vsyncpa [#allocation5], 0
    %s23 = scalar_lea.sflag [#allocation5], 1
    %24 = vsyncpa %s23, 0
    loop: start=0, step=1, limit=4
    $region2: #{_lambda_.21} parent=1 // loop_pre_header
      _
    $region3: #{_lambda_.21} parent=1 // loop_header
      %s26 = sphi 0, %s30
      %p27 = scmp.ge.s32.totalorder %s26, 4
      %s34 = sphi 0, %s34
      %s36 = sphi 0, %s34
      %s37 = sphi 0, %s36
      %s51 = sphi 0, %s37
      %s55 = sphi 0, %s55
      %s57 = sphi 0, %s55
      %s58 = sphi 0, %s57
      %s72 = sphi 0, %s58
      %s76 = sphi 0, %s76
      %s78 = sphi 0, %s76
      %s79 = sphi 0, %s78
      %s93 = sphi 0, %s79
      %s99 = sphi 0, %s101
      %s102 = sphi 0, %s99
      %s103 = sphi 0, %s102
      %s119 = sphi 0, %s103
      %s125 = sphi 0, %s127
      %s128 = sphi 0, %s125
      %s129 = sphi 0, %s128
      %s145 = sphi 0, %s129
      %s151 = sphi 0, %s153
      %s154 = sphi 0, %s151
      %s155 = sphi 0, %s154
      %s171 = sphi 0, %s155
      %s175 = sphi 0, %s175
      %s177 = sphi 0, %s175
      %s178 = sphi 0, %s177
      %s192 = sphi 0, %s178
      %s196 = sphi 0, %s196
      %s198 = sphi 0, %s196
      %s199 = sphi 0, %s198
      %s213 = sphi 0, %s199
      %s219 = sphi 0, %s221
      %s222 = sphi 0, %s219
      %s223 = sphi 0, %s222
      %s239 = sphi 0, %s223
    $region4: #{_lambda_.21} parent=1 // loop_header_branch
      %29 = sbr.rel (%p27) target = $region8
    $region5: #{_lambda_.21} parent=1 // loop_body
      %s31 = ssub.s32 %s26, 1
      %s32 = ssub.s32 %s26, 2
      %s33 = sadd.s32 %s26, 1
      %s35 = sadd.s32 %s34, 1
      %p38 = scmp.eq.s32.totalorder %s26, 1
      %p39 = scmp.ne.s32.totalorder %s34, %s36
      %p40 = scmp.eq.s32.totalorder %s26, 0
      %p41 = por %p39, %p40
      %p42 = scmp.ne.s32.totalorder %s34, %s36
      %p43 = scmp.eq.s32.totalorder %s31, 1
      %p44 = por %p42, %p43
      %p45 = scmp.ne.s32.totalorder %s36, %s37
      %p46 = scmp.eq.s32.totalorder %s31, 0
      %p47 = por %p45, %p46
      %p48 = scmp.ne.s32.totalorder %s36, %s37
      %p49 = scmp.eq.s32.totalorder %s32, 1
      %p50 = por %p48, %p49
      %p52 = scmp.ne.s32.totalorder %s37, %s51
      %p53 = scmp.eq.s32.totalorder %s32, 0
      %p54 = por %p52, %p53
      %s56 = sadd.s32 %s55, 1
      %p59 = scmp.eq.s32.totalorder %s26, 1
      %p60 = scmp.ne.s32.totalorder %s55, %s57
      %p61 = scmp.eq.s32.totalorder %s26, 0
      %p62 = por %p60, %p61
      %p63 = scmp.ne.s32.totalorder %s55, %s57
      %p64 = scmp.eq.s32.totalorder %s31, 1
      %p65 = por %p63, %p64
      %p66 = scmp.ne.s32.totalorder %s57, %s58
      %p67 = scmp.eq.s32.totalorder %s31, 0
      %p68 = por %p66, %p67
      %p69 = scmp.ne.s32.totalorder %s57, %s58
      %p70 = scmp.eq.s32.totalorder %s32, 1
      %p71 = por %p69, %p70
      %p73 = scmp.ne.s32.totalorder %s58, %s72
      %p74 = scmp.eq.s32.totalorder %s32, 0
      %p75 = por %p73, %p74
      %s77 = sadd.s32 %s76, 1
      %p80 = scmp.eq.s32.totalorder %s26, 1
      %p81 = scmp.ne.s32.totalorder %s76, %s78
      %p82 = scmp.eq.s32.totalorder %s26, 0
      %p83 = por %p81, %p82
      %p84 = scmp.ne.s32.totalorder %s76, %s78
      %p85 = scmp.eq.s32.totalorder %s31, 1
      %p86 = por %p84, %p85
      %p87 = scmp.ne.s32.totalorder %s78, %s79
      %p88 = scmp.eq.s32.totalorder %s31, 0
      %p89 = por %p87, %p88
      %p90 = scmp.ne.s32.totalorder %s78, %s79
      %p91 = scmp.eq.s32.totalorder %s32, 1
      %p92 = por %p90, %p91
      %p94 = scmp.ne.s32.totalorder %s79, %s93
      %p95 = scmp.eq.s32.totalorder %s32, 0
      %p96 = por %p94, %p95
      %s97 = ssub.s32 %s26, %s33
      %p98 = scmp.eq.s32.totalorder %s97, 0
      %s100 = sadd.s32 %s99, 1
      %s101 = scalar_select %p98, %s99, %s100
      %p104 = pneg %p98
      %p105 = scmp.eq.s32.totalorder %s26, 1
      %p106 = por %p104, %p105
      %p107 = scmp.ne.s32.totalorder %s99, %s102
      %p108 = scmp.eq.s32.totalorder %s26, 0
      %p109 = por %p107, %p108
      %p110 = scmp.ne.s32.totalorder %s99, %s102
      %p111 = scmp.eq.s32.totalorder %s31, 1
      %p112 = por %p110, %p111
      %p113 = scmp.ne.s32.totalorder %s102, %s103
      %p114 = scmp.eq.s32.totalorder %s31, 0
      %p115 = por %p113, %p114
      %p116 = scmp.ne.s32.totalorder %s102, %s103
      %p117 = scmp.eq.s32.totalorder %s32, 1
      %p118 = por %p116, %p117
      %p120 = scmp.ne.s32.totalorder %s103, %s119
      %p121 = scmp.eq.s32.totalorder %s32, 0
      %p122 = por %p120, %p121
      %s123 = ssub.s32 %s26, %s33
      %p124 = scmp.eq.s32.totalorder %s123, 0
      %s126 = sadd.s32 %s125, 1
      %s127 = scalar_select %p124, %s125, %s126
      %p130 = pneg %p124
      %p131 = scmp.eq.s32.totalorder %s26, 1
      %p132 = por %p130, %p131
      %p133 = scmp.ne.s32.totalorder %s125, %s128
      %p134 = scmp.eq.s32.totalorder %s26, 0
      %p135 = por %p133, %p134
      %p136 = scmp.ne.s32.totalorder %s125, %s128
      %p137 = scmp.eq.s32.totalorder %s31, 1
      %p138 = por %p136, %p137
      %p139 = scmp.ne.s32.totalorder %s128, %s129
      %p140 = scmp.eq.s32.totalorder %s31, 0
      %p141 = por %p139, %p140
      %p142 = scmp.ne.s32.totalorder %s128, %s129
      %p143 = scmp.eq.s32.totalorder %s32, 1
      %p144 = por %p142, %p143
      %p146 = scmp.ne.s32.totalorder %s129, %s145
      %p147 = scmp.eq.s32.totalorder %s32, 0
      %p148 = por %p146, %p147
      %s149 = ssub.s32 %s26, %s33
      %p150 = scmp.eq.s32.totalorder %s149, 0
      %s152 = sadd.s32 %s151, 1
      %s153 = scalar_select %p150, %s151, %s152
      %p156 = pneg %p150
      %p157 = scmp.eq.s32.totalorder %s26, 1
      %p158 = por %p156, %p157
      %p159 = scmp.ne.s32.totalorder %s151, %s154
      %p160 = scmp.eq.s32.totalorder %s26, 0
      %p161 = por %p159, %p160
      %p162 = scmp.ne.s32.totalorder %s151, %s154
      %p163 = scmp.eq.s32.totalorder %s31, 1
      %p164 = por %p162, %p163
      %p165 = scmp.ne.s32.totalorder %s154, %s155
      %p166 = scmp.eq.s32.totalorder %s31, 0
      %p167 = por %p165, %p166
      %p168 = scmp.ne.s32.totalorder %s154, %s155
      %p169 = scmp.eq.s32.totalorder %s32, 1
      %p170 = por %p168, %p169
      %p172 = scmp.ne.s32.totalorder %s155, %s171
      %p173 = scmp.eq.s32.totalorder %s32, 0
      %p174 = por %p172, %p173
      %s176 = sadd.s32 %s175, 1
      %p179 = scmp.eq.s32.totalorder %s26, 1
      %p180 = scmp.ne.s32.totalorder %s175, %s177
      %p181 = scmp.eq.s32.totalorder %s26, 0
      %p182 = por %p180, %p181
      %p183 = scmp.ne.s32.totalorder %s175, %s177
      %p184 = scmp.eq.s32.totalorder %s31, 1
      %p185 = por %p183, %p184
      %p186 = scmp.ne.s32.totalorder %s177, %s178
      %p187 = scmp.eq.s32.totalorder %s31, 0
      %p188 = por %p186, %p187
      %p189 = scmp.ne.s32.totalorder %s177, %s178
      %p190 = scmp.eq.s32.totalorder %s32, 1
      %p191 = por %p189, %p190
      %p193 = scmp.ne.s32.totalorder %s178, %s192
      %p194 = scmp.eq.s32.totalorder %s32, 0
      %p195 = por %p193, %p194
      %s197 = sadd.s32 %s196, 1
      %p200 = scmp.eq.s32.totalorder %s26, 1
      %p201 = scmp.ne.s32.totalorder %s196, %s198
      %p202 = scmp.eq.s32.totalorder %s26, 0
      %p203 = por %p201, %p202
      %p204 = scmp.ne.s32.totalorder %s196, %s198
      %p205 = scmp.eq.s32.totalorder %s31, 1
      %p206 = por %p204, %p205
      %p207 = scmp.ne.s32.totalorder %s198, %s199
      %p208 = scmp.eq.s32.totalorder %s31, 0
      %p209 = por %p207, %p208
      %p210 = scmp.ne.s32.totalorder %s198, %s199
      %p211 = scmp.eq.s32.totalorder %s32, 1
      %p212 = por %p210, %p211
      %p214 = scmp.ne.s32.totalorder %s199, %s213
      %p215 = scmp.eq.s32.totalorder %s32, 0
      %p216 = por %p214, %p215
      %s217 = ssub.s32 %s26, %s33
      %p218 = scmp.eq.s32.totalorder %s217, 0
      %s220 = sadd.s32 %s219, 1
      %s221 = scalar_select %p218, %s219, %s220
      %p224 = pneg %p218
      %p225 = scmp.eq.s32.totalorder %s26, 1
      %p226 = por %p224, %p225
      %p227 = scmp.ne.s32.totalorder %s219, %s222
      %p228 = scmp.eq.s32.totalorder %s26, 0
      %p229 = por %p227, %p228
      %p230 = scmp.ne.s32.totalorder %s219, %s222
      %p231 = scmp.eq.s32.totalorder %s31, 1
      %p232 = por %p230, %p231
      %p233 = scmp.ne.s32.totalorder %s222, %s223
      %p234 = scmp.eq.s32.totalorder %s31, 0
      %p235 = por %p233, %p234
      %p236 = scmp.ne.s32.totalorder %s222, %s223
      %p237 = scmp.eq.s32.totalorder %s32, 1
      %p238 = por %p236, %p237
      %p240 = scmp.ne.s32.totalorder %s223, %s239
      %p241 = scmp.eq.s32.totalorder %s32, 0
      %p242 = por %p240, %p241
      %p243 = scmp.le.s32.totalorder 1, %s26
      %p244 = scmp.lt.s32.totalorder %s26, 3
      %p245 = pnand %p243, %p244
      %p246 = pneg %p245
      // Predicated region
      $region9: #{_lambda_.21} parent=5 // pred_check
        _
      $region10: #{_lambda_.21} parent=5 // pred_check_branch
        %248 = sbr.rel (%p245) target = $region12
      $region11: #{_lambda_.21} parent=5 // pred_region
        %s249 = ssub.s32 %s26, 1
        // Predicated region
        $region13: #{_lambda_.21} parent=11 // pred_check
          %p250 = pneg %p47
        $region14: #{_lambda_.21} parent=11 // pred_check_branch
          %252 = sbr.rel (%p250) target = $region16
        $region15: #{_lambda_.21} parent=11 // pred_region
          %s254 = ssub.s32 64, 64
          %255 = vsyncadd [#allocation4], %s254
          %s257 = sshll.u32 [#allocation3], 4
          %s258 = int_to_ptr.vmem [resolvable:$true] %s257
          %260 = dma.hbm_to_vmem [thread:$0]  %s0, 64, %s258, [#allocation4]
        $region16: #{_lambda_.21} parent=11 // pred_fallthru
          _
        // Predicated region
        $region17: #{_lambda_.21} parent=11 // pred_check
          %p261 = pneg %p68
        $region18: #{_lambda_.21} parent=11 // pred_check_branch
          %263 = sbr.rel (%p261) target = $region20
        $region19: #{_lambda_.21} parent=11 // pred_region
          %s265 = ssub.s32 64, 64
          %266 = vsyncadd [#allocation7], %s265
          %s268 = sshll.u32 [#allocation6], 4
          %s269 = int_to_ptr.vmem [resolvable:$true] %s268
          %271 = dma.hbm_to_vmem [thread:$0]  %s1, 64, %s269, [#allocation7]
        $region20: #{_lambda_.21} parent=11 // pred_fallthru
          _
        // Predicated region
        $region21: #{_lambda_.21} parent=11 // pred_check
          %p272 = pneg %p89
        $region22: #{_lambda_.21} parent=11 // pred_check_branch
          %274 = sbr.rel (%p272) target = $region24
        $region23: #{_lambda_.21} parent=11 // pred_region
          %s276 = ssub.s32 64, 64
          %277 = vsyncadd [#allocation7], %s276
          %s279 = sshll.u32 [#allocation8], 4
          %s280 = int_to_ptr.vmem [resolvable:$true] %s279
          %282 = dma.hbm_to_vmem [thread:$0]  %s2, 64, %s280, [#allocation7]
        $region24: #{_lambda_.21} parent=11 // pred_fallthru
          _
        // Predicated region
        $region25: #{_lambda_.21} parent=11 // pred_check
          %p283 = pneg %p188
        $region26: #{_lambda_.21} parent=11 // pred_check_branch
          %285 = sbr.rel (%p283) target = $region28
        $region27: #{_lambda_.21} parent=11 // pred_region
          %s287 = ssub.s32 128, 128
          %288 = vsyncadd [#allocation13], %s287
          %s290 = sshll.u32 [#allocation14], 4
          %s291 = int_to_ptr.vmem [resolvable:$true] %s290
          %293 = dma.hbm_to_vmem [thread:$0]  %s6, 128, %s291, [#allocation13]
        $region28: #{_lambda_.21} parent=11 // pred_fallthru
          _
        // Predicated region
        $region29: #{_lambda_.21} parent=11 // pred_check
          %p294 = pneg %p209
        $region30: #{_lambda_.21} parent=11 // pred_check_branch
          %296 = sbr.rel (%p294) target = $region32
        $region31: #{_lambda_.21} parent=11 // pred_region
          _
        $region32: #{_lambda_.21} parent=11 // pred_fallthru
          _
      $region12: #{_lambda_.21} parent=5 // pred_fallthru
        _
      %p297 = scmp.lt.s32.totalorder %s26, 2
      // Predicated region
      $region33: #{_lambda_.21} parent=5 // pred_check
        %p298 = pneg %p297
      $region34: #{_lambda_.21} parent=5 // pred_check_branch
        %300 = sbr.rel (%p298) target = $region36
      $region35: #{_lambda_.21} parent=5 // pred_region
        // Predicated region
        $region37: #{_lambda_.21} parent=35 // pred_check
          %p301 = pneg %p109
        $region38: #{_lambda_.21} parent=35 // pred_check_branch
          %303 = sbr.rel (%p301) target = $region40
        $region39: #{_lambda_.21} parent=35 // pred_region
          %s304 = sand.u32 %s26, 1
          %s305 = scalar_lea.sflag [#allocation10], %s304
          %s306 = sand.u32 %s99, 1
          %s307 = smul.addr %s306, 8
          %s308 = scalar_lea.vmem [#allocation9], %s307
          %s309 = smul.u32 2, %s26
          %s311 = ssub.s32 128, 128
          %312 = vsyncadd %s305, %s311
          %s313 = smul.addr %s309, 64
          %s314 = scalar_lea.hbm %s3, %s313
          %s316 = sshll.u32 %s308, 4
          %s317 = int_to_ptr.vmem [resolvable:$true] %s316
          %319 = dma.hbm_to_vmem [thread:$0]  %s314, 128, %s317, %s305
        $region40: #{_lambda_.21} parent=35 // pred_fallthru
          _
        // Predicated region
        $region41: #{_lambda_.21} parent=35 // pred_check
          %p320 = pneg %p135
        $region42: #{_lambda_.21} parent=35 // pred_check_branch
          %322 = sbr.rel (%p320) target = $region44
        $region43: #{_lambda_.21} parent=35 // pred_region
          %s323 = sand.u32 %s26, 1
          %s324 = scalar_lea.sflag [#allocation10], %s323
          %s325 = sand.u32 %s125, 1
          %s326 = smul.addr %s325, 8
          %s327 = scalar_lea.vmem [#allocation11], %s326
          %s328 = smul.u32 2, %s26
          %s330 = ssub.s32 128, 128
          %331 = vsyncadd %s324, %s330
          %s332 = smul.addr %s328, 64
          %s333 = scalar_lea.hbm %s4, %s332
          %s335 = sshll.u32 %s327, 4
          %s336 = int_to_ptr.vmem [resolvable:$true] %s335
          %338 = dma.hbm_to_vmem [thread:$0]  %s333, 128, %s336, %s324
        $region44: #{_lambda_.21} parent=35 // pred_fallthru
          _
        // Predicated region
        $region45: #{_lambda_.21} parent=35 // pred_check
          %p339 = pneg %p161
        $region46: #{_lambda_.21} parent=35 // pred_check_branch
          %341 = sbr.rel (%p339) target = $region48
        $region47: #{_lambda_.21} parent=35 // pred_region
          %s342 = sand.u32 %s26, 1
          %s343 = scalar_lea.sflag [#allocation13], %s342
          %s344 = sand.u32 %s151, 1
          %s345 = smul.addr %s344, 8
          %s346 = scalar_lea.vmem [#allocation12], %s345
          %s347 = smul.u32 2, %s26
          %s349 = ssub.s32 128, 128
          %350 = vsyncadd %s343, %s349
          %s351 = smul.addr %s347, 64
          %s352 = scalar_lea.hbm %s5, %s351
          %s354 = sshll.u32 %s346, 4
          %s355 = int_to_ptr.vmem [resolvable:$true] %s354
          %357 = dma.hbm_to_vmem [thread:$0]  %s352, 128, %s355, %s343
        $region48: #{_lambda_.21} parent=35 // pred_fallthru
          _
      $region36: #{_lambda_.21} parent=5 // pred_fallthru
        _
      %p358 = scmp.le.s32.totalorder 1, %s26
      %p359 = scmp.lt.s32.totalorder %s26, 3
      %p360 = pnand %p358, %p359
      %p361 = pneg %p360
      // Predicated region
      $region49: #{_lambda_.21} parent=5 // pred_check
        _
      $region50: #{_lambda_.21} parent=5 // pred_check_branch
        %363 = sbr.rel (%p360) target = $region52
      $region51: #{_lambda_.21} parent=5 // pred_region
        %s364 = ssub.s32 %s26, 1
        // Predicated region
        $region53: #{_lambda_.21} parent=51 // pred_check
          %p365 = pneg %p47
        $region54: #{_lambda_.21} parent=51 // pred_check_branch
          %367 = sbr.rel (%p365) target = $region56
        $region55: #{_lambda_.21} parent=51 // pred_region
          %368 = dma.done [#allocation4], 64
        $region56: #{_lambda_.21} parent=51 // pred_fallthru
          _
        // Predicated region
        $region57: #{_lambda_.21} parent=51 // pred_check
          %p369 = pneg %p68
        $region58: #{_lambda_.21} parent=51 // pred_check_branch
          %371 = sbr.rel (%p369) target = $region60
        $region59: #{_lambda_.21} parent=51 // pred_region
          %372 = dma.done [#allocation7], 64
        $region60: #{_lambda_.21} parent=51 // pred_fallthru
          _
        // Predicated region
        $region61: #{_lambda_.21} parent=51 // pred_check
          %p373 = pneg %p89
        $region62: #{_lambda_.21} parent=51 // pred_check_branch
          %375 = sbr.rel (%p373) target = $region64
        $region63: #{_lambda_.21} parent=51 // pred_region
          %376 = dma.done [#allocation7], 64
        $region64: #{_lambda_.21} parent=51 // pred_fallthru
          _
        %s377 = sand.u32 %s31, 1
        %s378 = scalar_lea.sflag [#allocation10], %s377
        %s379 = sand.u32 %s102, 1
        %s380 = smul.addr %s379, 8
        %s381 = scalar_lea.vmem [#allocation9], %s380
        // Predicated region
        $region65: #{_lambda_.21} parent=51 // pred_check
          %p382 = pneg %p115
        $region66: #{_lambda_.21} parent=51 // pred_check_branch
          %384 = sbr.rel (%p382) target = $region68
        $region67: #{_lambda_.21} parent=51 // pred_region
          %385 = dma.done %s378, 128
        $region68: #{_lambda_.21} parent=51 // pred_fallthru
          _
        %s386 = sand.u32 %s31, 1
        %s387 = scalar_lea.sflag [#allocation10], %s386
        %s388 = sand.u32 %s128, 1
        %s389 = smul.addr %s388, 8
        %s390 = scalar_lea.vmem [#allocation11], %s389
        // Predicated region
        $region69: #{_lambda_.21} parent=51 // pred_check
          %p391 = pneg %p141
        $region70: #{_lambda_.21} parent=51 // pred_check_branch
          %393 = sbr.rel (%p391) target = $region72
        $region71: #{_lambda_.21} parent=51 // pred_region
          %394 = dma.done %s387, 128
        $region72: #{_lambda_.21} parent=51 // pred_fallthru
          _
        %s395 = sand.u32 %s31, 1
        %s396 = scalar_lea.sflag [#allocation13], %s395
        %s397 = sand.u32 %s154, 1
        %s398 = smul.addr %s397, 8
        %s399 = scalar_lea.vmem [#allocation12], %s398
        // Predicated region
        $region73: #{_lambda_.21} parent=51 // pred_check
          %p400 = pneg %p167
        $region74: #{_lambda_.21} parent=51 // pred_check_branch
          %402 = sbr.rel (%p400) target = $region76
        $region75: #{_lambda_.21} parent=51 // pred_region
          %403 = dma.done %s396, 128
        $region76: #{_lambda_.21} parent=51 // pred_fallthru
          _
        // Predicated region
        $region77: #{_lambda_.21} parent=51 // pred_check
          %p404 = pneg %p188
        $region78: #{_lambda_.21} parent=51 // pred_check_branch
          %406 = sbr.rel (%p404) target = $region80
        $region79: #{_lambda_.21} parent=51 // pred_region
          %407 = dma.done [#allocation13], 128
        $region80: #{_lambda_.21} parent=51 // pred_fallthru
          _
        %p408 = pneg %p47
        %p409 = pneg %p44
        %p410 = pneg %p68
        %p411 = pneg %p65
        %p412 = pneg %p89
        %p413 = pneg %p86
        %s414 = sand.u32 %s31, 1
        %s415 = scalar_lea.sflag [#allocation10], %s414
        %s416 = sand.u32 %s102, 1
        %s417 = smul.addr %s416, 8
        %s418 = scalar_lea.vmem [#allocation9], %s417
        %p419 = pneg %p115
        %p420 = pneg %p112
        %s421 = sand.u32 %s31, 1
        %s422 = scalar_lea.sflag [#allocation10], %s421
        %s423 = sand.u32 %s128, 1
        %s424 = smul.addr %s423, 8
        %s425 = scalar_lea.vmem [#allocation11], %s424
        %p426 = pneg %p141
        %p427 = pneg %p138
        %s428 = sand.u32 %s31, 1
        %s429 = scalar_lea.sflag [#allocation13], %s428
        %s430 = sand.u32 %s154, 1
        %s431 = smul.addr %s430, 8
        %s432 = scalar_lea.vmem [#allocation12], %s431
        %p433 = pneg %p167
        %p434 = pneg %p164
        %p435 = pneg %p188
        %p436 = pneg %p185
        %p437 = pneg %p209
        %p438 = pneg %p206
        %p439 = pneg %p235
        %p440 = pneg %p232
        %s441 = sand.u32 %s222, 1
        %s442 = scalar_lea.sflag [#allocation5], %s441
        %s443 = sand.u32 %s222, 1
        %s444 = smul.addr %s443, 8
        %s445 = scalar_lea.vmem [#allocation15], %s444
        %s446 = smul.u32 2, %s31
        %s447 = smul.u32 2, %s31
        %s448 = smul.u32 2, %s31
        %s449 = smul.u32 2, %s31
        %v451 = vld [vmem:[#allocation3] sm:$0xf]
        %v452 = vld [vmem:[%s381] sm:$0xff]
        %v453 = vld [vmem:[#allocation6] sm:$0xf]
        %v454 = vld [vmem:[%s390] sm:$0xff]
        %v456 = vunpack.c.l.b16 %v454
        %v457 = vunpack.c.h.b16 %v454
        %v458 = vpack.c.b16 %v456, %v456
        %v459 = vpack.c.b16 %v457, %v457
        %vm460 = vcmask 64512
        %v462 = vsel %vm460, %v453, 0
        %vm464 = vcmask 1043456
        %v466 = vsel %vm464, %v458, 0
        %v469 = vsel %vm464, %v459, 0
        %471 = vmatprep.subr.bf16.mxu0 %v469
        %472 = vmatpush1.bf16.msra.mxu0 %v466
        %473 = vmatprep.subr.bf16.mxu0 0
        %474 = vmatpush1.bf16.msra.mxu0 0
        %475 = vmatprep.subr.bf16.mxu0 0
        %476 = vmatpush1.bf16.msra.mxu0 0
        %477 = vmatprep.subr.bf16.mxu0 0
        %478 = vmatpush1.bf16.msra.mxu0 0
        %479 = vmatprep.subr.bf16.mxu0 0
        %480 = vmatpush1.bf16.msra.mxu0 0
        %481 = vmatprep.subr.bf16.mxu0 0
        %482 = vmatpush1.bf16.msra.mxu0 0
        %483 = vmatprep.subr.bf16.mxu0 0
        %484 = vmatpush1.bf16.msra.mxu0 0
        %485 = vmatprep.subr.bf16.mxu0 0
        %486 = vmatpush1.bf16.msra.mxu0 0
        %487 = vmatprep.subr.bf16.mxu0 0
        %488 = vmatpush1.bf16.msra.mxu0 0
        %489 = vmatprep.subr.bf16.mxu0 0
        %490 = vmatpush1.bf16.msra.mxu0 0
        %491 = vmatprep.subr.bf16.mxu0 0
        %492 = vmatpush1.bf16.msra.mxu0 0
        %493 = vmatprep.subr.bf16.mxu0 0
        %494 = vmatpush1.bf16.msra.mxu0 0
        %495 = vmatprep.subr.bf16.mxu0 0
        %496 = vmatpush1.bf16.msra.mxu0 0
        %497 = vmatprep.subr.bf16.mxu0 0
        %498 = vmatpush1.bf16.msra.mxu0 0
        %499 = vmatprep.subr.bf16.mxu0 0
        %500 = vmatpush1.bf16.msra.mxu0 0
        %501 = vmatprep.subr.bf16.mxu0 0
        %502 = vmatpush1.bf16.msra.mxu0 0
        %503 = vmatprep.mubr.bf16.mxu0 0
        %504 = vmatmul.mubr.bf16.gmra.mrb[0].mxu0 %v462
        %v505 = vpop.f32.mrb[0].mxu0
        %v506 = vadd.f32 0.0, %v505
        %v507 = vpop.f32.mrb[0].mxu0
        %v508 = vadd.f32 0.0, %v507
        %v509 = vpop.f32.mrb[0].mxu0
        %v510 = vpop.f32.mrb[0].mxu0
        %511 = vdwg.mxu0
        %v513 = vunpack.c.l.b16 %v452
        %v514 = vunpack.c.h.b16 %v452
        %v515 = vpack.c.b16 %v513, %v513
        %v516 = vpack.c.b16 %v514, %v514
        %v518 = vsel %vm460, %v451, 0
        %v521 = vsel %vm464, %v515, 0
        %v524 = vsel %vm464, %v516, 0
        %526 = vmatprep.subr.bf16.mxu0 %v524
        %527 = vmatpush1.bf16.msra.mxu0 %v521
        %528 = vmatprep.subr.bf16.mxu0 0
        %529 = vmatpush1.bf16.msra.mxu0 0
        %530 = vmatprep.subr.bf16.mxu0 0
        %531 = vmatpush1.bf16.msra.mxu0 0
        %532 = vmatprep.subr.bf16.mxu0 0
        %533 = vmatpush1.bf16.msra.mxu0 0
        %534 = vmatprep.subr.bf16.mxu0 0
        %535 = vmatpush1.bf16.msra.mxu0 0
        %536 = vmatprep.subr.bf16.mxu0 0
        %537 = vmatpush1.bf16.msra.mxu0 0
        %538 = vmatprep.subr.bf16.mxu0 0
        %539 = vmatpush1.bf16.msra.mxu0 0
        %540 = vmatprep.subr.bf16.mxu0 0
        %541 = vmatpush1.bf16.msra.mxu0 0
        %542 = vmatprep.subr.bf16.mxu0 0
        %543 = vmatpush1.bf16.msra.mxu0 0
        %544 = vmatprep.subr.bf16.mxu0 0
        %545 = vmatpush1.bf16.msra.mxu0 0
        %546 = vmatprep.subr.bf16.mxu0 0
        %547 = vmatpush1.bf16.msra.mxu0 0
        %548 = vmatprep.subr.bf16.mxu0 0
        %549 = vmatpush1.bf16.msra.mxu0 0
        %550 = vmatprep.subr.bf16.mxu0 0
        %551 = vmatpush1.bf16.msra.mxu0 0
        %552 = vmatprep.subr.bf16.mxu0 0
        %553 = vmatpush1.bf16.msra.mxu0 0
        %554 = vmatprep.subr.bf16.mxu0 0
        %555 = vmatpush1.bf16.msra.mxu0 0
        %556 = vmatprep.subr.bf16.mxu0 0
        %557 = vmatpush1.bf16.msra.mxu0 0
        %558 = vmatprep.mubr.bf16.mxu0 0
        %559 = vmatmul.mubr.bf16.gmra.mrb[0].mxu0 %v518
        %v560 = vpop.f32.mrb[0].mxu0
        %v561 = vadd.f32 %v506, %v560
        %v562 = vpop.f32.mrb[0].mxu0
        %v563 = vadd.f32 %v508, %v562
        %v564 = vpop.f32.mrb[0].mxu0
        %v565 = vpop.f32.mrb[0].mxu0
        %566 = vdwg.mxu0
        %v567 = vld [vmem:[#allocation8] sm:$0xf]
        %v568 = vld [vmem:[%s399] sm:$0xff]
        %v570 = vunpack.c.l.b16 %v568
        %v571 = vunpack.c.h.b16 %v568
        %v572 = vpack.c.b16 %v570, %v570
        %v573 = vpack.c.b16 %v571, %v571
        %v575 = vsel %vm460, %v567, 0
        %v578 = vsel %vm464, %v572, 0
        %v581 = vsel %vm464, %v573, 0
        %583 = vmatprep.subr.bf16.mxu0 %v581
        %584 = vmatpush1.bf16.msra.mxu0 %v578
        %585 = vmatprep.subr.bf16.mxu0 0
        %586 = vmatpush1.bf16.msra.mxu0 0
        %587 = vmatprep.subr.bf16.mxu0 0
        %588 = vmatpush1.bf16.msra.mxu0 0
        %589 = vmatprep.subr.bf16.mxu0 0
        %590 = vmatpush1.bf16.msra.mxu0 0
        %591 = vmatprep.subr.bf16.mxu0 0
        %592 = vmatpush1.bf16.msra.mxu0 0
        %593 = vmatprep.subr.bf16.mxu0 0
        %594 = vmatpush1.bf16.msra.mxu0 0
        %595 = vmatprep.subr.bf16.mxu0 0
        %596 = vmatpush1.bf16.msra.mxu0 0
        %597 = vmatprep.subr.bf16.mxu0 0
        %598 = vmatpush1.bf16.msra.mxu0 0
        %599 = vmatprep.subr.bf16.mxu0 0
        %600 = vmatpush1.bf16.msra.mxu0 0
        %601 = vmatprep.subr.bf16.mxu0 0
        %602 = vmatpush1.bf16.msra.mxu0 0
        %603 = vmatprep.subr.bf16.mxu0 0
        %604 = vmatpush1.bf16.msra.mxu0 0
        %605 = vmatprep.subr.bf16.mxu0 0
        %606 = vmatpush1.bf16.msra.mxu0 0
        %607 = vmatprep.subr.bf16.mxu0 0
        %608 = vmatpush1.bf16.msra.mxu0 0
        %609 = vmatprep.subr.bf16.mxu0 0
        %610 = vmatpush1.bf16.msra.mxu0 0
        %611 = vmatprep.subr.bf16.mxu0 0
        %612 = vmatpush1.bf16.msra.mxu0 0
        %613 = vmatprep.subr.bf16.mxu0 0
        %614 = vmatpush1.bf16.msra.mxu0 0
        %615 = vmatprep.mubr.bf16.mxu0 0
        %616 = vmatmul.mubr.bf16.gmra.mrb[0].mxu0 %v575
        %v617 = vpop.f32.mrb[0].mxu0
        %v618 = vadd.f32 0.0, %v617
        %v619 = vpop.f32.mrb[0].mxu0
        %v620 = vadd.f32 0.0, %v619
        %v621 = vpop.f32.mrb[0].mxu0
        %v622 = vpop.f32.mrb[0].mxu0
        %623 = vdwg.mxu0
        %v624 = vadd.f32 %v561, %v618
        %v625 = vadd.f32 %v563, %v620
        %v626 = vld [vmem:[#allocation14] sm:$0xff]
        %628 = vset.pattern.permute.xlu0 0
        %629 = vperm.xlu0 %628, %v626
        %v630 = vpop.permute.xlu0 %629
        %v632 = vadd.f32 %v624, %v630
        %v633 = vadd.f32 %v625, %v630
        %s634 = sld [smem:[#allocation2]]
        %vm635 = vcmp.ge.f32.partialorder %v632, 0.0
        %vm636 = vcmp.ge.f32.partialorder %v633, 0.0
        %v637 = vstv %s634
        %v638 = vmul.f32 %v637, %v632
        %v639 = vmul.f32 %v637, %v633
        %v640 = vsel %vm635, %v632, %v638
        %v641 = vsel %vm636, %v633, %v639
        %v642 = vpack.c.bf16 %v640, %v640
        %v643 = vpack.c.bf16 %v641, %v641
        %v646 = vunpack.c.l.b16 %v642
        %v647 = vunpack.c.l.b16 %v643
        %v648 = vpack.c.b16 %v647, %v646
        %650 = vst [vmem:[%s445] sm:$0xff] %v648
        %s651 = sand.u32 %s222, 1
        %s652 = scalar_lea.sflag [#allocation5], %s651
        %s653 = sand.u32 %s222, 1
        %s654 = smul.addr %s653, 8
        %s655 = scalar_lea.vmem [#allocation15], %s654
        // Predicated region
        $region81: #{_lambda_.21} parent=51 // pred_check
          %p656 = pneg %p232
        $region82: #{_lambda_.21} parent=51 // pred_check_branch
          %658 = sbr.rel (%p656) target = $region84
        $region83: #{_lambda_.21} parent=51 // pred_region
          %s659 = smul.u32 2, %s31
          %s661 = ssub.s32 128, 128
          %662 = vsyncadd %s652, %s661
          %s663 = smul.addr %s659, 64
          %s664 = scalar_lea.hbm %s8, %s663
          %s666 = sshll.u32 %s655, 4
          %s667 = int_to_ptr.vmem [resolvable:$true] %s666
          %669 = dma.vmem_to_hbm [thread:$0]  %s667, 128, %s664, %s652
        $region84: #{_lambda_.21} parent=51 // pred_fallthru
          _
      $region52: #{_lambda_.21} parent=5 // pred_fallthru
        _
      %p670 = scmp.le.s32.totalorder 2, %s26
      // Predicated region
      $region85: #{_lambda_.21} parent=5 // pred_check
        %p671 = pneg %p670
      $region86: #{_lambda_.21} parent=5 // pred_check_branch
        %673 = sbr.rel (%p671) target = $region88
      $region87: #{_lambda_.21} parent=5 // pred_region
        %s674 = ssub.s32 %s26, 2
        // Predicated region
        $region89: #{_lambda_.21} parent=87 // pred_check
          %p675 = pneg %p238
        $region90: #{_lambda_.21} parent=87 // pred_check_branch
          %677 = sbr.rel (%p675) target = $region92
        $region91: #{_lambda_.21} parent=87 // pred_region
          %s678 = sand.u32 %s223, 1
          %s679 = scalar_lea.sflag [#allocation5], %s678
          %s680 = sand.u32 %s223, 1
          %s681 = smul.addr %s680, 8
          %s682 = scalar_lea.vmem [#allocation15], %s681
          %683 = dma.done %s679, 128
        $region92: #{_lambda_.21} parent=87 // pred_fallthru
          _
      $region88: #{_lambda_.21} parent=5 // pred_fallthru
        _
    $region6: #{_lambda_.21} parent=1 // loop_footer
      %s30 = sadd.s32 1, %s26
    $region7: #{_lambda_.21} parent=1 // loop_footer_branch
      %25 = sbr.rel target = $region3
    $region8: #{_lambda_.21} parent=1 // loop_exit
      _
    %684 = vsyncpa [#allocation4], 1
    %s685 = scalar_lea.sflag [#allocation4], 1
    %686 = vsyncpa %s685, 1
    %687 = vsyncpa [#allocation7], 1
    %688 = vsyncpa [#allocation10], 1
    %s689 = scalar_lea.sflag [#allocation10], 1
    %690 = vsyncpa %s689, 1
    %691 = vsyncpa [#allocation13], 1
    %s692 = scalar_lea.sflag [#allocation13], 1
    %693 = vsyncpa %s692, 1
    %694 = vsyncpa [#allocation5], 1
    %s695 = scalar_lea.sflag [#allocation5], 1
    %696 = vsyncpa %s695, 1

// kernel: _lambda_.19
$region0: #{_lambda_.19}
  #allocation0 [shape = 'u32[]', space=smem, size = 0x4, offset = 0x4, fixed_abs, tag = 'smem constant byte address 0x4 - core index']
  #allocation1 [shape = 'u32[144,128]{1,0:T(1,128)}', space=vmem, size = 0x12000, scoped, tag = 'internal scratch']
  #allocation2 [shape = 'f32[1]{0:T(128)S(6)}', space=smem, size = 0x200, scoped, tag = 'scoped memory for _lambda_.19']
  %s0 = inlined_call_operand.hbm [shape: bf16[8,8], index: 0, kind: input, shape index: {}]
  %s1 = inlined_call_operand.hbm [shape: bf16[8,8], index: 1, kind: input, shape index: {}]
  %s2 = inlined_call_operand.hbm [shape: bf16[8,8], index: 2, kind: input, shape index: {}]
  %s3 = inlined_call_operand.hbm [shape: bf16[8,128], index: 3, kind: input, shape index: {}]
  %s4 = inlined_call_operand.hbm [shape: bf16[8,128], index: 4, kind: input, shape index: {}]
  %s5 = inlined_call_operand.hbm [shape: bf16[8,128], index: 5, kind: input, shape index: {}]
  %s6 = inlined_call_operand.hbm [shape: f32[8,1], index: 6, kind: input, shape index: {}]
  %s7 = inlined_call_operand.<no memory space> [shape: f32[1], index: 7, kind: input, shape index: {}]
  %s8 = inlined_call_operand.hbm [shape: bf16[8,128], index: 8, kind: output, shape index: {}]
  %s9 = sld [smem:[#allocation0]]
  $region70: #{_lambda_.19} parent=0
    _
  %s11 = ssub.s32 1, %s9
  %s12 = scalar_select 0, %s11, %s9
  %13 = sst [smem:[#allocation2]] %s7
  $region1: #{_lambda_.19} parent=0
    #allocation3 [shape = 'u8[2048]{0}', space=vmem, size = 0x800, scoped, tag = 'input window, operand 0, single buffered']
    #allocation4 [shape = 's32[1]{0}', space=sflag, size = 0x4, scoped, tag = 'scoped memory for _lambda_.19']
    #allocation5 [shape = 's32[1]{0}', space=sflag, size = 0x4, scoped, tag = 'scoped memory for _lambda_.19']
    #allocation6 [shape = 'u8[2048]{0}', space=vmem, size = 0x800, scoped, tag = 'input window, operand 1, single buffered']
    #allocation7 [shape = 's32[1]{0}', space=sflag, size = 0x4, scoped, tag = 'scoped memory for _lambda_.19']
    #allocation8 [shape = 'u8[2048]{0}', space=vmem, size = 0x800, scoped, tag = 'input window, operand 2, single buffered']
    #allocation9 [shape = 'u8[2048]{0}', space=vmem, size = 0x800, scoped, tag = 'input window, operand 3, single buffered']
    #allocation10 [shape = 's32[1]{0}', space=sflag, size = 0x4, scoped, tag = 'scoped memory for _lambda_.19']
    #allocation11 [shape = 'u8[2048]{0}', space=vmem, size = 0x800, scoped, tag = 'input window, operand 4, single buffered']
    #allocation12 [shape = 'u8[2048]{0}', space=vmem, size = 0x800, scoped, tag = 'input window, operand 5, single buffered']
    #allocation13 [shape = 's32[1]{0}', space=sflag, size = 0x4, scoped, tag = 'scoped memory for _lambda_.19']
    #allocation14 [shape = 'u8[4096]{0}', space=vmem, size = 0x1000, scoped, tag = 'input window, operand 6, single buffered']
    #allocation15 [shape = 'u8[2048]{0}', space=vmem, size = 0x800, scoped, tag = 'output window, operand 0, single buffered']
    %14 = vsyncpa [#allocation4], 0
    %15 = vsyncpa [#allocation7], 0
    %16 = vsyncpa [#allocation10], 0
    %17 = vsyncpa [#allocation13], 0
    %18 = vsyncpa [#allocation5], 0
    // Predicated region
    $region2: #{_lambda_.19} parent=1 // pred_check
      _
    $region3: #{_lambda_.19} parent=1 // pred_check_branch
      %20 = sbr.rel (0) target = $region5
    $region4: #{_lambda_.19} parent=1 // pred_region
      %s22 = ssub.s32 64, 64
      %23 = vsyncadd [#allocation4], %s22
      %s25 = sshll.u32 [#allocation3], 4
      %s26 = int_to_ptr.vmem [resolvable:$true] %s25
      %28 = dma.hbm_to_vmem [thread:$0]  %s0, 64, %s26, [#allocation4]
    $region5: #{_lambda_.19} parent=1 // pred_fallthru
      _
    // Predicated region
    $region6: #{_lambda_.19} parent=1 // pred_check
      _
    $region7: #{_lambda_.19} parent=1 // pred_check_branch
      %30 = sbr.rel (0) target = $region9
    $region8: #{_lambda_.19} parent=1 // pred_region
      %s32 = ssub.s32 64, 64
      %33 = vsyncadd [#allocation7], %s32
      %s35 = sshll.u32 [#allocation6], 4
      %s36 = int_to_ptr.vmem [resolvable:$true] %s35
      %38 = dma.hbm_to_vmem [thread:$0]  %s1, 64, %s36, [#allocation7]
    $region9: #{_lambda_.19} parent=1 // pred_fallthru
      _
    // Predicated region
    $region10: #{_lambda_.19} parent=1 // pred_check
      _
    $region11: #{_lambda_.19} parent=1 // pred_check_branch
      %40 = sbr.rel (0) target = $region13
    $region12: #{_lambda_.19} parent=1 // pred_region
      %s42 = ssub.s32 64, 64
      %43 = vsyncadd [#allocation7], %s42
      %s45 = sshll.u32 [#allocation8], 4
      %s46 = int_to_ptr.vmem [resolvable:$true] %s45
      %48 = dma.hbm_to_vmem [thread:$0]  %s2, 64, %s46, [#allocation7]
    $region13: #{_lambda_.19} parent=1 // pred_fallthru
      _
    // Predicated region
    $region14: #{_lambda_.19} parent=1 // pred_check
      _
    $region15: #{_lambda_.19} parent=1 // pred_check_branch
      %50 = sbr.rel (0) target = $region17
    $region16: #{_lambda_.19} parent=1 // pred_region
      %s52 = ssub.s32 64, 64
      %53 = vsyncadd [#allocation10], %s52
      %s55 = sshll.u32 [#allocation9], 4
      %s56 = int_to_ptr.vmem [resolvable:$true] %s55
      %58 = dma.hbm_to_vmem [thread:$0]  %s3, 64, %s56, [#allocation10]
    $region17: #{_lambda_.19} parent=1 // pred_fallthru
      _
    // Predicated region
    $region18: #{_lambda_.19} parent=1 // pred_check
      _
    $region19: #{_lambda_.19} parent=1 // pred_check_branch
      %60 = sbr.rel (0) target = $region21
    $region20: #{_lambda_.19} parent=1 // pred_region
      %s62 = ssub.s32 64, 64
      %63 = vsyncadd [#allocation10], %s62
      %s65 = sshll.u32 [#allocation11], 4
      %s66 = int_to_ptr.vmem [resolvable:$true] %s65
      %68 = dma.hbm_to_vmem [thread:$0]  %s4, 64, %s66, [#allocation10]
    $region21: #{_lambda_.19} parent=1 // pred_fallthru
      _
    // Predicated region
    $region22: #{_lambda_.19} parent=1 // pred_check
      _
    $region23: #{_lambda_.19} parent=1 // pred_check_branch
      %70 = sbr.rel (0) target = $region25
    $region24: #{_lambda_.19} parent=1 // pred_region
      %s72 = ssub.s32 64, 64
      %73 = vsyncadd [#allocation13], %s72
      %s75 = sshll.u32 [#allocation12], 4
      %s76 = int_to_ptr.vmem [resolvable:$true] %s75
      %78 = dma.hbm_to_vmem [thread:$0]  %s5, 64, %s76, [#allocation13]
    $region25: #{_lambda_.19} parent=1 // pred_fallthru
      _
    // Predicated region
    $region26: #{_lambda_.19} parent=1 // pred_check
      _
    $region27: #{_lambda_.19} parent=1 // pred_check_branch
      %80 = sbr.rel (0) target = $region29
    $region28: #{_lambda_.19} parent=1 // pred_region
      %s82 = ssub.s32 128, 128
      %83 = vsyncadd [#allocation13], %s82
      %s85 = sshll.u32 [#allocation14], 4
      %s86 = int_to_ptr.vmem [resolvable:$true] %s85
      %88 = dma.hbm_to_vmem [thread:$0]  %s6, 128, %s86, [#allocation13]
    $region29: #{_lambda_.19} parent=1 // pred_fallthru
      _
    // Predicated region
    $region30: #{_lambda_.19} parent=1 // pred_check
      _
    $region31: #{_lambda_.19} parent=1 // pred_check_branch
      %90 = sbr.rel (0) target = $region33
    $region32: #{_lambda_.19} parent=1 // pred_region
      _
    $region33: #{_lambda_.19} parent=1 // pred_fallthru
      _
    // Predicated region
    $region34: #{_lambda_.19} parent=1 // pred_check
      _
    $region35: #{_lambda_.19} parent=1 // pred_check_branch
      %92 = sbr.rel (0) target = $region37
    $region36: #{_lambda_.19} parent=1 // pred_region
      %93 = dma.done [#allocation4], 64
    $region37: #{_lambda_.19} parent=1 // pred_fallthru
      _
    // Predicated region
    $region38: #{_lambda_.19} parent=1 // pred_check
      _
    $region39: #{_lambda_.19} parent=1 // pred_check_branch
      %95 = sbr.rel (0) target = $region41
    $region40: #{_lambda_.19} parent=1 // pred_region
      %96 = dma.done [#allocation7], 64
    $region41: #{_lambda_.19} parent=1 // pred_fallthru
      _
    // Predicated region
    $region42: #{_lambda_.19} parent=1 // pred_check
      _
    $region43: #{_lambda_.19} parent=1 // pred_check_branch
      %98 = sbr.rel (0) target = $region45
    $region44: #{_lambda_.19} parent=1 // pred_region
      %99 = dma.done [#allocation7], 64
    $region45: #{_lambda_.19} parent=1 // pred_fallthru
      _
    // Predicated region
    $region46: #{_lambda_.19} parent=1 // pred_check
      _
    $region47: #{_lambda_.19} parent=1 // pred_check_branch
      %101 = sbr.rel (0) target = $region49
    $region48: #{_lambda_.19} parent=1 // pred_region
      %102 = dma.done [#allocation10], 64
    $region49: #{_lambda_.19} parent=1 // pred_fallthru
      _
    // Predicated region
    $region50: #{_lambda_.19} parent=1 // pred_check
      _
    $region51: #{_lambda_.19} parent=1 // pred_check_branch
      %104 = sbr.rel (0) target = $region53
    $region52: #{_lambda_.19} parent=1 // pred_region
      %105 = dma.done [#allocation10], 64
    $region53: #{_lambda_.19} parent=1 // pred_fallthru
      _
    // Predicated region
    $region54: #{_lambda_.19} parent=1 // pred_check
      _
    $region55: #{_lambda_.19} parent=1 // pred_check_branch
      %107 = sbr.rel (0) target = $region57
    $region56: #{_lambda_.19} parent=1 // pred_region
      %108 = dma.done [#allocation13], 64
    $region57: #{_lambda_.19} parent=1 // pred_fallthru
      _
    // Predicated region
    $region58: #{_lambda_.19} parent=1 // pred_check
      _
    $region59: #{_lambda_.19} parent=1 // pred_check_branch
      %110 = sbr.rel (0) target = $region61
    $region60: #{_lambda_.19} parent=1 // pred_region
      %111 = dma.done [#allocation13], 128
    $region61: #{_lambda_.19} parent=1 // pred_fallthru
      _
    %v113 = vld [vmem:[#allocation3] sm:$0xf]
    %v114 = vld [vmem:[#allocation9] sm:$0xf]
    %v115 = vld [vmem:[#allocation6] sm:$0xf]
    %v116 = vld [vmem:[#allocation11] sm:$0xf]
    %vm117 = vcmask 64512
    %v119 = vsel %vm117, %v115, 0
    %vm121 = vcmask 1043456
    %v123 = vsel %vm121, %v116, 0
    %125 = vmatprep.subr.bf16.mxu0 0
    %126 = vmatpush1.bf16.msra.mxu0 %v123
    %127 = vmatprep.subr.bf16.mxu0 0
    %128 = vmatpush1.bf16.msra.mxu0 0
    %129 = vmatprep.subr.bf16.mxu0 0
    %130 = vmatpush1.bf16.msra.mxu0 0
    %131 = vmatprep.subr.bf16.mxu0 0
    %132 = vmatpush1.bf16.msra.mxu0 0
    %133 = vmatprep.subr.bf16.mxu0 0
    %134 = vmatpush1.bf16.msra.mxu0 0
    %135 = vmatprep.subr.bf16.mxu0 0
    %136 = vmatpush1.bf16.msra.mxu0 0
    %137 = vmatprep.subr.bf16.mxu0 0
    %138 = vmatpush1.bf16.msra.mxu0 0
    %139 = vmatprep.subr.bf16.mxu0 0
    %140 = vmatpush1.bf16.msra.mxu0 0
    %141 = vmatprep.subr.bf16.mxu0 0
    %142 = vmatpush1.bf16.msra.mxu0 0
    %143 = vmatprep.subr.bf16.mxu0 0
    %144 = vmatpush1.bf16.msra.mxu0 0
    %145 = vmatprep.subr.bf16.mxu0 0
    %146 = vmatpush1.bf16.msra.mxu0 0
    %147 = vmatprep.subr.bf16.mxu0 0
    %148 = vmatpush1.bf16.msra.mxu0 0
    %149 = vmatprep.subr.bf16.mxu0 0
    %150 = vmatpush1.bf16.msra.mxu0 0
    %151 = vmatprep.subr.bf16.mxu0 0
    %152 = vmatpush1.bf16.msra.mxu0 0
    %153 = vmatprep.subr.bf16.mxu0 0
    %154 = vmatpush1.bf16.msra.mxu0 0
    %155 = vmatprep.subr.bf16.mxu0 0
    %156 = vmatpush1.bf16.msra.mxu0 0
    %157 = vmatprep.mubr.bf16.mxu0 0
    %158 = vmatmul.mubr.bf16.gmra.mrb[0].mxu0 %v119
    %v159 = vpop.f32.mrb[0].mxu0
    %v160 = vadd.f32 0.0, %v159
    %v161 = vpop.f32.mrb[0].mxu0
    %v162 = vpop.f32.mrb[0].mxu0
    %v163 = vpop.f32.mrb[0].mxu0
    %164 = vdwg.mxu0
    %v166 = vsel %vm117, %v113, 0
    %v169 = vsel %vm121, %v114, 0
    %171 = vmatprep.subr.bf16.mxu0 0
    %172 = vmatpush1.bf16.msra.mxu0 %v169
    %173 = vmatprep.subr.bf16.mxu0 0
    %174 = vmatpush1.bf16.msra.mxu0 0
    %175 = vmatprep.subr.bf16.mxu0 0
    %176 = vmatpush1.bf16.msra.mxu0 0
    %177 = vmatprep.subr.bf16.mxu0 0
    %178 = vmatpush1.bf16.msra.mxu0 0
    %179 = vmatprep.subr.bf16.mxu0 0
    %180 = vmatpush1.bf16.msra.mxu0 0
    %181 = vmatprep.subr.bf16.mxu0 0
    %182 = vmatpush1.bf16.msra.mxu0 0
    %183 = vmatprep.subr.bf16.mxu0 0
    %184 = vmatpush1.bf16.msra.mxu0 0
    %185 = vmatprep.subr.bf16.mxu0 0
    %186 = vmatpush1.bf16.msra.mxu0 0
    %187 = vmatprep.subr.bf16.mxu0 0
    %188 = vmatpush1.bf16.msra.mxu0 0
    %189 = vmatprep.subr.bf16.mxu0 0
    %190 = vmatpush1.bf16.msra.mxu0 0
    %191 = vmatprep.subr.bf16.mxu0 0
    %192 = vmatpush1.bf16.msra.mxu0 0
    %193 = vmatprep.subr.bf16.mxu0 0
    %194 = vmatpush1.bf16.msra.mxu0 0
    %195 = vmatprep.subr.bf16.mxu0 0
    %196 = vmatpush1.bf16.msra.mxu0 0
    %197 = vmatprep.subr.bf16.mxu0 0
    %198 = vmatpush1.bf16.msra.mxu0 0
    %199 = vmatprep.subr.bf16.mxu0 0
    %200 = vmatpush1.bf16.msra.mxu0 0
    %201 = vmatprep.subr.bf16.mxu0 0
    %202 = vmatpush1.bf16.msra.mxu0 0
    %203 = vmatprep.mubr.bf16.mxu0 0
    %204 = vmatmul.mubr.bf16.gmra.mrb[0].mxu0 %v166
    %v205 = vpop.f32.mrb[0].mxu0
    %v206 = vadd.f32 %v160, %v205
    %v207 = vpop.f32.mrb[0].mxu0
    %v208 = vpop.f32.mrb[0].mxu0
    %v209 = vpop.f32.mrb[0].mxu0
    %210 = vdwg.mxu0
    %v211 = vld [vmem:[#allocation8] sm:$0xf]
    %v212 = vld [vmem:[#allocation12] sm:$0xf]
    %v214 = vsel %vm117, %v211, 0
    %v217 = vsel %vm121, %v212, 0
    %219 = vmatprep.subr.bf16.mxu0 0
    %220 = vmatpush1.bf16.msra.mxu0 %v217
    %221 = vmatprep.subr.bf16.mxu0 0
    %222 = vmatpush1.bf16.msra.mxu0 0
    %223 = vmatprep.subr.bf16.mxu0 0
    %224 = vmatpush1.bf16.msra.mxu0 0
    %225 = vmatprep.subr.bf16.mxu0 0
    %226 = vmatpush1.bf16.msra.mxu0 0
    %227 = vmatprep.subr.bf16.mxu0 0
    %228 = vmatpush1.bf16.msra.mxu0 0
    %229 = vmatprep.subr.bf16.mxu0 0
    %230 = vmatpush1.bf16.msra.mxu0 0
    %231 = vmatprep.subr.bf16.mxu0 0
    %232 = vmatpush1.bf16.msra.mxu0 0
    %233 = vmatprep.subr.bf16.mxu0 0
    %234 = vmatpush1.bf16.msra.mxu0 0
    %235 = vmatprep.subr.bf16.mxu0 0
    %236 = vmatpush1.bf16.msra.mxu0 0
    %237 = vmatprep.subr.bf16.mxu0 0
    %238 = vmatpush1.bf16.msra.mxu0 0
    %239 = vmatprep.subr.bf16.mxu0 0
    %240 = vmatpush1.bf16.msra.mxu0 0
    %241 = vmatprep.subr.bf16.mxu0 0
    %242 = vmatpush1.bf16.msra.mxu0 0
    %243 = vmatprep.subr.bf16.mxu0 0
    %244 = vmatpush1.bf16.msra.mxu0 0
    %245 = vmatprep.subr.bf16.mxu0 0
    %246 = vmatpush1.bf16.msra.mxu0 0
    %247 = vmatprep.subr.bf16.mxu0 0
    %248 = vmatpush1.bf16.msra.mxu0 0
    %249 = vmatprep.subr.bf16.mxu0 0
    %250 = vmatpush1.bf16.msra.mxu0 0
    %251 = vmatprep.mubr.bf16.mxu0 0
    %252 = vmatmul.mubr.bf16.gmra.mrb[0].mxu0 %v214
    %v253 = vpop.f32.mrb[0].mxu0
    %v254 = vadd.f32 0.0, %v253
    %v255 = vpop.f32.mrb[0].mxu0
    %v256 = vpop.f32.mrb[0].mxu0
    %v257 = vpop.f32.mrb[0].mxu0
    %258 = vdwg.mxu0
    %v259 = vadd.f32 %v206, %v254
    %v260 = vld [vmem:[#allocation14] sm:$0xff]
    %262 = vset.pattern.permute.xlu0 0
    %263 = vperm.xlu0 %262, %v260
    %v264 = vpop.permute.xlu0 %263
    %v266 = vadd.f32 %v259, %v264
    %s267 = sld [smem:[#allocation2]]
    %vm268 = vcmp.ge.f32.partialorder %v266, 0.0
    %v269 = vstv %s267
    %v270 = vmul.f32 %v269, %v266
    %v271 = vsel %vm268, %v266, %v270
    %v272 = vpack.c.bf16 %v271, %v271
    %273 = vst [vmem:[#allocation15] sm:$0xf] %v272
    // Predicated region
    $region62: #{_lambda_.19} parent=1 // pred_check
      _
    $region63: #{_lambda_.19} parent=1 // pred_check_branch
      %275 = sbr.rel (0) target = $region65
    $region64: #{_lambda_.19} parent=1 // pred_region
      %s277 = ssub.s32 64, 64
      %278 = vsyncadd [#allocation5], %s277
      %s280 = sshll.u32 [#allocation15], 4
      %s281 = int_to_ptr.vmem [resolvable:$true] %s280
      %283 = dma.vmem_to_hbm [thread:$0]  %s281, 64, %s8, [#allocation5]
    $region65: #{_lambda_.19} parent=1 // pred_fallthru
      _
    // Predicated region
    $region66: #{_lambda_.19} parent=1 // pred_check
      _
    $region67: #{_lambda_.19} parent=1 // pred_check_branch
      %285 = sbr.rel (0) target = $region69
    $region68: #{_lambda_.19} parent=1 // pred_region
      %286 = dma.done [#allocation5], 64
    $region69: #{_lambda_.19} parent=1 // pred_fallthru
      _
    %287 = vsyncpa [#allocation4], 1
    %288 = vsyncpa [#allocation7], 1
    %289 = vsyncpa [#allocation10], 1
    %290 = vsyncpa [#allocation13], 1
    %291 = vsyncpa [#allocation5], 1

</llo_original>
